<compile_context>
chip_gen: v7x
topology: tpu7x:2x2x1
jax: 0.10.0
libtpu: 0.0.40
codegen_flags: <defaults>
</compile_context>

<pallas_src>
import functools

import numpy as np
import jax
import jax.numpy as jnp
from jax.experimental import pallas as pl
from jax.experimental.pallas import tpu as pltpu


def _round_up(v, m):
    return ((v + m - 1) // m) * m


def spectral_atomwise_kernel(x_ref, w1_ref, b1_ref, e_ref, w2_ref, b2_ref, o_ref,
                             *, nv, nh):
    """One tile of TN atoms, flattened spherical layout (lane-dense).

    x_ref : [TN, M*Cs]          bf16 flattened spherical-harmonic features
    w1_ref: [M*Cs, NV+NH+NG]    bf16 fused [SO3_Lin1 vec blocks | SO3_Lin1 scalar | scalar_mlp]
    b1_ref: [1, NV+NH+NG]       f32 bias row (zeros over the vector columns)
    e_ref : [NG, NV]            bf16 0/1 gate-expansion matrix (per-degree replication)
    w2_ref: [NV+NH, M*Cs]       bf16 fused [SO3_Lin2 vec blocks ; SO3_Lin2 scalar]
    b2_ref: [1, M*Cs]           f32 bias (l=0 columns only)
    o_ref : [TN, M*Cs]          bf16
    """
    x = x_ref[...]                                                      # bf16 [TN, 144]

    # Stage 1: single wide MXU matmul; hv / hs / gp come out lane-adjacent.
    h = jnp.dot(x, w1_ref[...], preferred_element_type=jnp.float32) + b1_ref[...]
    hv = h[:, :nv]              # vector (l>=1) features, lanes 0:NV (vreg-aligned)
    hs = h[:, nv:nv + nh]       # scalar (l=0) features
    gp = h[:, nv + nh:]         # gating pre-activation, lmax*Ch UNIQUE columns only

    # GateActivation. Transcendentals on the unique gate columns only (EUP / 4),
    # then expand per spherical component with a tiny 0/1 MXU matmul.
    gate = jax.nn.sigmoid(jax.nn.silu(gp))                              # f32 [TN, NG]
    gate_exp = jnp.dot(gate.astype(jnp.bfloat16), e_ref[...],
                       preferred_element_type=jnp.float32)              # f32 [TN, NV]
    xv = hv * gate_exp                                                  # f32 [TN, NV]
    xs = jax.nn.silu(hs)                                                # f32 [TN, NH]

    # Stage 2: single K = NV+NH matmul. NV is a multiple of 128 so the concat is a
    # pure lane placement (no cross-lane relayout).
    x2 = jnp.concatenate([xv, xs], axis=-1).astype(jnp.bfloat16)        # [TN, NV+NH]
    y = jnp.dot(x2, w2_ref[...], preferred_element_type=jnp.float32) + b2_ref[...]
    o_ref[...] = y.astype(o_ref.dtype)


def prepare_spectral_atomwise_params(wg, bg, w1, b1, w2, b2, *, lmax):
    """Fuse the per-degree SO3_Linear weights, the scalar_mlp weight and the gate
    expansion matrix into lane-dense bf16 slabs.

    Host-side numpy; call ONCE at model init and reuse across forward calls.
    """
    wg, bg, w1, b1, w2, b2 = (np.asarray(a, np.float32) for a in (wg, bg, w1, b1, w2, b2))
    Ch, Cs = w1.shape[1], w1.shape[2]
    M = (lmax + 1) ** 2
    degrees = [l for l in range(1, lmax + 1) for _ in range(2 * l + 1)]
    V = len(degrees)                           # = M - 1 vector components
    NV, NH, NG = V * Ch, Ch, lmax * Ch

    w1_all = np.zeros((M * Cs, NV + NH + NG), np.float32)
    b1_all = np.zeros((1, NV + NH + NG), np.float32)
    e_mat = np.zeros((NG, NV), np.float32)
    w2_all = np.zeros((NV + NH, M * Cs), np.float32)
    b2_row = np.zeros((1, M * Cs), np.float32)

    for b, l in enumerate(degrees):
        m = b + 1                               # spherical component index
        w1_all[m * Cs:(m + 1) * Cs, b * Ch:(b + 1) * Ch] = w1[l].T
        w2_all[b * Ch:(b + 1) * Ch, m * Cs:(m + 1) * Cs] = w2[l].T
        e_mat[(l - 1) * Ch:l * Ch, b * Ch:(b + 1) * Ch] = np.eye(Ch, dtype=np.float32)

    # SO3_Linear1 / scalar_mlp read only the l=0 scalars (rows 0:Cs).
    w1_all[:Cs, NV:NV + NH] = w1[0].T
    b1_all[0, NV:NV + NH] = b1
    w1_all[:Cs, NV + NH:] = wg.T
    b1_all[0, NV + NH:] = bg
    # SO3_Linear2 scalar (l=0) block.
    w2_all[NV:NV + NH, :Cs] = w2[0].T
    b2_row[0, :Cs] = b2

    return dict(
        w1_all=jnp.asarray(w1_all, jnp.bfloat16),
        b1_all=jnp.asarray(b1_all, jnp.float32),
        e_mat=jnp.asarray(e_mat, jnp.bfloat16),
        w2_all=jnp.asarray(w2_all, jnp.bfloat16),
        b2_row=jnp.asarray(b2_row, jnp.float32),
        dims=(M, Cs, Ch, NV, NH, NG),
    )


def spectral_atomwise(x, params, *, tile_n=1024):
    """x: [N, (lmax+1)^2, sphere_channels]. Returns bf16 [N, (lmax+1)^2, Cs].

    Kernel I/O is bf16 (the kernel is HBM-bound at scale); accumulation and all
    element-wise math stay f32. tile_n: atoms per grid step (multiple of 8);
    sweep {512, 1024, 2048}. On v7x cap at ~2048 (intermediates must fit the
    32 MiB scoped-VMEM default) and keep >= 2 grid steps for the ("parallel",)
    axis to shard across both TensorCores.
    """
    M, Cs, Ch, NV, NH, NG = params["dims"]
    N, Mx, Csx = x.shape
    assert (Mx, Csx) == (M, Cs)
    assert tile_n % 8 == 0
    MCs = M * Cs

    # Flatten spherical components into the lane axis; bf16 at the HBM boundary.
    # (In a full model x would already live in bf16, making this cast free.)
    x2d = x.reshape(N, MCs).astype(jnp.bfloat16)

    tile = min(tile_n, _round_up(N, 8))
    Np = _round_up(N, tile)
    if Np != N:
        x2d = jnp.pad(x2d, ((0, Np - N), (0, 0)))   # padded rows sliced off below

    kernel = functools.partial(spectral_atomwise_kernel, nv=NV, nh=NH)

    def _full(arr):
        return pl.BlockSpec(arr.shape, lambda i: (0, 0))

    out = pl.pallas_call(
        kernel,
        out_shape=jax.ShapeDtypeStruct((Np, MCs), jnp.bfloat16),
        grid_spec=pltpu.PrefetchScalarGridSpec(
            num_scalar_prefetch=0,
            grid=(Np // tile,),
            in_specs=[
                pl.BlockSpec((tile, MCs), lambda i: (i, 0)),
                _full(params["w1_all"]), _full(params["b1_all"]),
                _full(params["e_mat"]),
                _full(params["w2_all"]), _full(params["b2_row"]),
            ],
            out_specs=pl.BlockSpec((tile, MCs), lambda i: (i, 0)),
        ),
        compiler_params=pltpu.CompilerParams(dimension_semantics=("parallel",)),
    )(x2d, params["w1_all"], params["b1_all"], params["e_mat"],
      params["w2_all"], params["b2_row"])

    return out[:N].reshape(N, M, Cs)


def reference(x, wg, bg, w1, b1, w2, b2, *, lmax):
    """Plain-JAX f32 mirror of the PyTorch SpectralAtomwise forward."""
    N, M, Cs = x.shape
    Ch = w1.shape[1]
    lidx = jnp.array([l for l in range(lmax + 1) for _ in range(2 * l + 1)])
    # scalar_mlp
    g = jax.nn.silu(x[:, 0, :] @ wg.T + bg)                 # [N, lmax*Ch]
    # so3_linear_1
    x1 = jnp.einsum('nmi,moi->nmo', x, w1[lidx])
    x1 = x1.at[:, 0, :].add(b1)
    # gate activation
    gate = jax.nn.sigmoid(g).reshape(N, lmax, Ch)
    lidx_v = jnp.array([l - 1 for l in range(1, lmax + 1) for _ in range(2 * l + 1)])
    x2 = jnp.concatenate([jax.nn.silu(x1[:, 0:1, :]),
                          x1[:, 1:, :] * gate[:, lidx_v, :]], axis=1)
    # so3_linear_2
    y = jnp.einsum('nmo,mio->nmi', x2, w2[lidx])
    return y.at[:, 0, :].add(b2)


if __name__ == "__main__":
    # TODO(synk): only SpectralAtomwise is implemented here; the surrounding
    # eSEN_Block pieces (norms, Edgewise gather / index_add message passing,
    # GridAtomwise) remain plain JAX / XLA ops.
    lmax = 2
    sphere_channels = 16
    hidden_channels = 32
    N = 1000                   # exercises padding and (with tile_n=512) a 2-step grid
    M = (lmax + 1) ** 2        # 9 spherical components

    key = jax.random.PRNGKey(0)
    kx, k1, k2, k3, k4, k5, k6 = jax.random.split(key, 7)

    x = jax.random.normal(kx, (N, M, sphere_channels), dtype=jnp.float32)

    bs = 1.0 / jnp.sqrt(sphere_channels)
    bh = 1.0 / jnp.sqrt(hidden_channels)
    wg = jax.random.uniform(k1, (lmax * hidden_channels, sphere_channels), jnp.float32, -bs, bs)
    bg = jax.random.uniform(k2, (lmax * hidden_channels,), jnp.float32, -bs, bs)
    w1 = jax.random.uniform(k3, (lmax + 1, hidden_channels, sphere_channels), jnp.float32, -bs, bs)
    b1 = jax.random.uniform(k4, (hidden_channels,), jnp.float32, -bs, bs)
    w2 = jax.random.uniform(k5, (lmax + 1, sphere_channels, hidden_channels), jnp.float32, -bh, bh)
    b2 = jax.random.uniform(k6, (sphere_channels,), jnp.float32, -bh, bh)

    # Fused weights built once (hoisted out of the forward path).
    params = prepare_spectral_atomwise_params(wg, bg, w1, b1, w2, b2, lmax=lmax)

    # tile_n=512 here just to exercise a multi-step grid at this small N;
    # production default is 1024 (sweep up to 2048).
    out = spectral_atomwise(x, params, tile_n=512)
    out = jax.block_until_ready(out)

    ref = jax.block_until_ready(reference(x, wg, bg, w1, b1, w2, b2, lmax=lmax))
    assert out.shape == (N, M, sphere_channels) and out.dtype == jnp.bfloat16
    err = jnp.max(jnp.abs(out.astype(jnp.float32) - ref))
    # bf16 storage / matmul inputs with f32 accumulation: expect max abs err ~1e-2.
    assert err < 5e-2, f"max abs err {err}"

    print("KERNEL_OK")
</pallas_src>

<mosaic_0001>
module attributes {stable_mosaic.version = 11 : i64} {
  func.func @spectral_atomwise_kernel(%arg0: i32, %arg1: memref<512x144xbf16, #tpu.memory_space<vmem>>, %arg2: memref<144x352xbf16, #tpu.memory_space<vmem>>, %arg3: memref<1x352xf32, #tpu.memory_space<vmem>>, %arg4: memref<64x256xbf16, #tpu.memory_space<vmem>>, %arg5: memref<288x144xbf16, #tpu.memory_space<vmem>>, %arg6: memref<1x144xf32, #tpu.memory_space<vmem>>, %arg7: memref<512x144xbf16, #tpu.memory_space<vmem>>) attributes {dimension_semantics = [#tpu.dimension_semantics<parallel>], iteration_bounds = array<i64: 2>, scalar_prefetch = 0 : i64, scratch_operands = 0 : i64, tpu.core_type = #tpu.core_type<tc>, window_params = [{transform_indices = @transform_0, window_bounds = array<i64: 512, 144>}, {pipeline_mode = #tpu.pipeline_mode<synchronous>, transform_indices = @transform_1, window_bounds = array<i64: 144, 352>}, {pipeline_mode = #tpu.pipeline_mode<synchronous>, transform_indices = @transform_2, window_bounds = array<i64: 1, 352>}, {pipeline_mode = #tpu.pipeline_mode<synchronous>, transform_indices = @transform_3, window_bounds = array<i64: 64, 256>}, {pipeline_mode = #tpu.pipeline_mode<synchronous>, transform_indices = @transform_4, window_bounds = array<i64: 288, 144>}, {pipeline_mode = #tpu.pipeline_mode<synchronous>, transform_indices = @transform_5, window_bounds = array<i64: 1, 144>}, {transform_indices = @transform_6, window_bounds = array<i64: 512, 144>}]} {
    %c0 = arith.constant 0 : index
    %c0_0 = arith.constant 0 : index
    %0 = vector.load %arg1[%c0, %c0_0] : memref<512x144xbf16, #tpu.memory_space<vmem>>, vector<512x144xbf16>
    %c0_1 = arith.constant 0 : index
    %c0_2 = arith.constant 0 : index
    %1 = vector.load %arg2[%c0_1, %c0_2] : memref<144x352xbf16, #tpu.memory_space<vmem>>, vector<144x352xbf16>
    %cst = arith.constant dense<0.000000e+00> : vector<512x352xf32>
    %2 = tpu.matmul %0, %1, %cst {dimension_numbers = #tpu.dot_dimension_numbers<[1], [0], [0], [1], [0, 0, 1, 1], [], []>} : vector<512x144xbf16>, vector<144x352xbf16>, vector<512x352xf32> -> vector<512x352xf32>
    %c0_3 = arith.constant 0 : index
    %c0_4 = arith.constant 0 : index
    %3 = vector.load %arg3[%c0_3, %c0_4] : memref<1x352xf32, #tpu.memory_space<vmem>>, vector<1x352xf32>
    %4 = vector.broadcast %3 : vector<1x352xf32> to vector<512x352xf32>
    %5 = arith.addf %2, %4 : vector<512x352xf32>
    %6 = vector.extract_strided_slice %5 {offsets = [0, 0], sizes = [512, 256], strides = [1, 1]} : vector<512x352xf32> to vector<512x256xf32>
    %7 = vector.extract_strided_slice %5 {offsets = [0, 256], sizes = [512, 32], strides = [1, 1]} : vector<512x352xf32> to vector<512x32xf32>
    %8 = vector.extract_strided_slice %5 {offsets = [0, 288], sizes = [512, 64], strides = [1, 1]} : vector<512x352xf32> to vector<512x64xf32>
    %9 = arith.negf %8 : vector<512x64xf32>
    %10 = math.exp %9 : vector<512x64xf32>
    %cst_5 = arith.constant 1.000000e+00 : f32
    %11 = vector.broadcast %cst_5 : f32 to vector<512x64xf32>
    %12 = arith.addf %11, %10 : vector<512x64xf32>
    %13 = arith.divf %11, %12 : vector<512x64xf32>
    %14 = arith.mulf %8, %13 : vector<512x64xf32>
    %15 = arith.negf %14 : vector<512x64xf32>
    %16 = math.exp %15 : vector<512x64xf32>
    %cst_6 = arith.constant 1.000000e+00 : f32
    %17 = vector.broadcast %cst_6 : f32 to vector<512x64xf32>
    %18 = arith.addf %17, %16 : vector<512x64xf32>
    %19 = arith.divf %17, %18 : vector<512x64xf32>
    %20 = arith.truncf %19 : vector<512x64xf32> to vector<512x64xbf16>
    %c0_7 = arith.constant 0 : index
    %c0_8 = arith.constant 0 : index
    %21 = vector.load %arg4[%c0_7, %c0_8] : memref<64x256xbf16, #tpu.memory_space<vmem>>, vector<64x256xbf16>
    %cst_9 = arith.constant dense<0.000000e+00> : vector<512x256xf32>
    %22 = tpu.matmul %20, %21, %cst_9 {dimension_numbers = #tpu.dot_dimension_numbers<[1], [0], [0], [1], [0, 0, 1, 1], [], []>} : vector<512x64xbf16>, vector<64x256xbf16>, vector<512x256xf32> -> vector<512x256xf32>
    %23 = arith.mulf %6, %22 : vector<512x256xf32>
    %24 = arith.negf %7 : vector<512x32xf32>
    %25 = math.exp %24 : vector<512x32xf32>
    %cst_10 = arith.constant 1.000000e+00 : f32
    %26 = vector.broadcast %cst_10 : f32 to vector<512x32xf32>
    %27 = arith.addf %26, %25 : vector<512x32xf32>
    %28 = arith.divf %26, %27 : vector<512x32xf32>
    %29 = arith.mulf %7, %28 : vector<512x32xf32>
    %30 = tpu.concatenate %23, %29 in 1 : vector<512x256xf32>, vector<512x32xf32> -> vector<512x288xf32>
    %31 = arith.truncf %30 : vector<512x288xf32> to vector<512x288xbf16>
    %c0_11 = arith.constant 0 : index
    %c0_12 = arith.constant 0 : index
    %32 = vector.load %arg5[%c0_11, %c0_12] : memref<288x144xbf16, #tpu.memory_space<vmem>>, vector<288x144xbf16>
    %cst_13 = arith.constant dense<0.000000e+00> : vector<512x144xf32>
    %33 = tpu.matmul %31, %32, %cst_13 {dimension_numbers = #tpu.dot_dimension_numbers<[1], [0], [0], [1], [0, 0, 1, 1], [], []>} : vector<512x288xbf16>, vector<288x144xbf16>, vector<512x144xf32> -> vector<512x144xf32>
    %c0_14 = arith.constant 0 : index
    %c0_15 = arith.constant 0 : index
    %34 = vector.load %arg6[%c0_14, %c0_15] : memref<1x144xf32, #tpu.memory_space<vmem>>, vector<1x144xf32>
    %35 = vector.broadcast %34 : vector<1x144xf32> to vector<512x144xf32>
    %36 = arith.addf %33, %35 : vector<512x144xf32>
    %37 = arith.truncf %36 : vector<512x144xf32> to vector<512x144xbf16>
    %c0_16 = arith.constant 0 : index
    %c0_17 = arith.constant 0 : index
    %38 = vector.load %arg7[%c0_16, %c0_17] : memref<512x144xbf16, #tpu.memory_space<vmem>>, vector<512x144xbf16>
    tpu.vector_store %arg7[%c0_16, %c0_17], %37 {strides = array<i32>} : memref<512x144xbf16, #tpu.memory_space<vmem>>, vector<512x144xbf16>,
    return
  }
  func.func @transform_0(%arg0: i32) -> (i32, i32) {
    %c0_i32 = arith.constant 0 : i32
    %c0_i32_0 = arith.constant 0 : i32
    return %arg0, %c0_i32 : i32, i32
  }
  func.func @transform_1(%arg0: i32) -> (i32, i32) {
    %c0_i32 = arith.constant 0 : i32
    %c0_i32_0 = arith.constant 0 : i32
    %c0_i32_1 = arith.constant 0 : i32
    return %c0_i32, %c0_i32_0 : i32, i32
  }
  func.func @transform_2(%arg0: i32) -> (i32, i32) {
    %c0_i32 = arith.constant 0 : i32
    %c0_i32_0 = arith.constant 0 : i32
    %c0_i32_1 = arith.constant 0 : i32
    return %c0_i32, %c0_i32_0 : i32, i32
  }
  func.func @transform_3(%arg0: i32) -> (i32, i32) {
    %c0_i32 = arith.constant 0 : i32
    %c0_i32_0 = arith.constant 0 : i32
    %c0_i32_1 = arith.constant 0 : i32
    return %c0_i32, %c0_i32_0 : i32, i32
  }
  func.func @transform_4(%arg0: i32) -> (i32, i32) {
    %c0_i32 = arith.constant 0 : i32
    %c0_i32_0 = arith.constant 0 : i32
    %c0_i32_1 = arith.constant 0 : i32
    return %c0_i32, %c0_i32_0 : i32, i32
  }
  func.func @transform_5(%arg0: i32) -> (i32, i32) {
    %c0_i32 = arith.constant 0 : i32
    %c0_i32_0 = arith.constant 0 : i32
    %c0_i32_1 = arith.constant 0 : i32
    return %c0_i32, %c0_i32_0 : i32, i32
  }
  func.func @transform_6(%arg0: i32) -> (i32, i32) {
    %c0_i32 = arith.constant 0 : i32
    %c0_i32_0 = arith.constant 0 : i32
    return %arg0, %c0_i32 : i32, i32
  }
}

</mosaic_0001>

<llo_original>
// kernel: tpu_custom_call.1
$region0: #{tpu_custom_call.1}
  #allocation0 [shape = 'u32[]', space=smem, size = 0x4, offset = 0x4, fixed_abs, tag = 'smem constant byte address 0x4 - core index']
  #allocation1 [shape = 'u32[144,128]{1,0:T(1,128)}', space=vmem, size = 0x12000, scoped, tag = 'internal scratch']
  %s0 = inlined_call_operand.vmem [shape: bf16[1024,144], index: 0, kind: input, shape index: {}]
  %s1 = inlined_call_operand.vmem [shape: bf16[144,352], index: 1, kind: input, shape index: {}]
  %s2 = inlined_call_operand.vmem [shape: f32[1,352], index: 2, kind: input, shape index: {}]
  %s3 = inlined_call_operand.vmem [shape: bf16[64,256], index: 3, kind: input, shape index: {}]
  %s4 = inlined_call_operand.vmem [shape: bf16[288,144], index: 4, kind: input, shape index: {}]
  %s5 = inlined_call_operand.vmem [shape: f32[1,144], index: 5, kind: input, shape index: {}]
  %s6 = inlined_call_operand.vmem [shape: bf16[1024,144], index: 6, kind: output, shape index: {}]
  %s7 = sld [smem:[#allocation0]]
  $region57: #{tpu_custom_call.1} parent=0
    _
  %s9 = ssub.s32 1, %s7
  %s10 = scalar_select 0, %s9, %s7
  loop: start=0, step=1, limit=4
  $region2: #{tpu_custom_call.1} parent=0 // loop_pre_header
    _
  $region3: #{tpu_custom_call.1} parent=0 // loop_header
    %s12 = sphi 0, %s16
    %p13 = scmp.ge.s32.totalorder %s12, 4
    %s22 = sphi 0, %s24
    %s25 = sphi 0, %s22
    %s26 = sphi 0, %s25
    %s42 = sphi 0, %s26
    %s46 = sphi 0, %s46
    %s48 = sphi 0, %s46
    %s49 = sphi 0, %s48
    %s63 = sphi 0, %s49
    %s67 = sphi 0, %s67
    %s69 = sphi 0, %s67
    %s70 = sphi 0, %s69
    %s84 = sphi 0, %s70
    %s88 = sphi 0, %s88
    %s90 = sphi 0, %s88
    %s91 = sphi 0, %s90
    %s105 = sphi 0, %s91
    %s109 = sphi 0, %s109
    %s111 = sphi 0, %s109
    %s112 = sphi 0, %s111
    %s126 = sphi 0, %s112
    %s130 = sphi 0, %s130
    %s132 = sphi 0, %s130
    %s133 = sphi 0, %s132
    %s147 = sphi 0, %s133
    %s153 = sphi 0, %s155
    %s156 = sphi 0, %s153
    %s157 = sphi 0, %s156
    %s173 = sphi 0, %s157
  $region4: #{tpu_custom_call.1} parent=0 // loop_header_branch
    %15 = sbr.rel (%p13) target = $region8
  $region5: #{tpu_custom_call.1} parent=0 // loop_body
    %s17 = ssub.s32 %s12, 1
    %s18 = ssub.s32 %s12, 2
    %s19 = sadd.s32 %s12, 1
    %s20 = ssub.s32 %s12, %s19
    %p21 = scmp.eq.s32.totalorder %s20, 0
    %s23 = sadd.s32 %s22, 1
    %s24 = scalar_select %p21, %s22, %s23
    %p27 = pneg %p21
    %p28 = scmp.eq.s32.totalorder %s12, 1
    %p29 = por %p27, %p28
    %p30 = scmp.ne.s32.totalorder %s22, %s25
    %p31 = scmp.eq.s32.totalorder %s12, 0
    %p32 = por %p30, %p31
    %p33 = scmp.ne.s32.totalorder %s22, %s25
    %p34 = scmp.eq.s32.totalorder %s17, 1
    %p35 = por %p33, %p34
    %p36 = scmp.ne.s32.totalorder %s25, %s26
    %p37 = scmp.eq.s32.totalorder %s17, 0
    %p38 = por %p36, %p37
    %p39 = scmp.ne.s32.totalorder %s25, %s26
    %p40 = scmp.eq.s32.totalorder %s18, 1
    %p41 = por %p39, %p40
    %p43 = scmp.ne.s32.totalorder %s26, %s42
    %p44 = scmp.eq.s32.totalorder %s18, 0
    %p45 = por %p43, %p44
    %s47 = sadd.s32 %s46, 1
    %p50 = scmp.eq.s32.totalorder %s12, 1
    %p51 = scmp.ne.s32.totalorder %s46, %s48
    %p52 = scmp.eq.s32.totalorder %s12, 0
    %p53 = por %p51, %p52
    %p54 = scmp.ne.s32.totalorder %s46, %s48
    %p55 = scmp.eq.s32.totalorder %s17, 1
    %p56 = por %p54, %p55
    %p57 = scmp.ne.s32.totalorder %s48, %s49
    %p58 = scmp.eq.s32.totalorder %s17, 0
    %p59 = por %p57, %p58
    %p60 = scmp.ne.s32.totalorder %s48, %s49
    %p61 = scmp.eq.s32.totalorder %s18, 1
    %p62 = por %p60, %p61
    %p64 = scmp.ne.s32.totalorder %s49, %s63
    %p65 = scmp.eq.s32.totalorder %s18, 0
    %p66 = por %p64, %p65
    %s68 = sadd.s32 %s67, 1
    %p71 = scmp.eq.s32.totalorder %s12, 1
    %p72 = scmp.ne.s32.totalorder %s67, %s69
    %p73 = scmp.eq.s32.totalorder %s12, 0
    %p74 = por %p72, %p73
    %p75 = scmp.ne.s32.totalorder %s67, %s69
    %p76 = scmp.eq.s32.totalorder %s17, 1
    %p77 = por %p75, %p76
    %p78 = scmp.ne.s32.totalorder %s69, %s70
    %p79 = scmp.eq.s32.totalorder %s17, 0
    %p80 = por %p78, %p79
    %p81 = scmp.ne.s32.totalorder %s69, %s70
    %p82 = scmp.eq.s32.totalorder %s18, 1
    %p83 = por %p81, %p82
    %p85 = scmp.ne.s32.totalorder %s70, %s84
    %p86 = scmp.eq.s32.totalorder %s18, 0
    %p87 = por %p85, %p86
    %s89 = sadd.s32 %s88, 1
    %p92 = scmp.eq.s32.totalorder %s12, 1
    %p93 = scmp.ne.s32.totalorder %s88, %s90
    %p94 = scmp.eq.s32.totalorder %s12, 0
    %p95 = por %p93, %p94
    %p96 = scmp.ne.s32.totalorder %s88, %s90
    %p97 = scmp.eq.s32.totalorder %s17, 1
    %p98 = por %p96, %p97
    %p99 = scmp.ne.s32.totalorder %s90, %s91
    %p100 = scmp.eq.s32.totalorder %s17, 0
    %p101 = por %p99, %p100
    %p102 = scmp.ne.s32.totalorder %s90, %s91
    %p103 = scmp.eq.s32.totalorder %s18, 1
    %p104 = por %p102, %p103
    %p106 = scmp.ne.s32.totalorder %s91, %s105
    %p107 = scmp.eq.s32.totalorder %s18, 0
    %p108 = por %p106, %p107
    %s110 = sadd.s32 %s109, 1
    %p113 = scmp.eq.s32.totalorder %s12, 1
    %p114 = scmp.ne.s32.totalorder %s109, %s111
    %p115 = scmp.eq.s32.totalorder %s12, 0
    %p116 = por %p114, %p115
    %p117 = scmp.ne.s32.totalorder %s109, %s111
    %p118 = scmp.eq.s32.totalorder %s17, 1
    %p119 = por %p117, %p118
    %p120 = scmp.ne.s32.totalorder %s111, %s112
    %p121 = scmp.eq.s32.totalorder %s17, 0
    %p122 = por %p120, %p121
    %p123 = scmp.ne.s32.totalorder %s111, %s112
    %p124 = scmp.eq.s32.totalorder %s18, 1
    %p125 = por %p123, %p124
    %p127 = scmp.ne.s32.totalorder %s112, %s126
    %p128 = scmp.eq.s32.totalorder %s18, 0
    %p129 = por %p127, %p128
    %s131 = sadd.s32 %s130, 1
    %p134 = scmp.eq.s32.totalorder %s12, 1
    %p135 = scmp.ne.s32.totalorder %s130, %s132
    %p136 = scmp.eq.s32.totalorder %s12, 0
    %p137 = por %p135, %p136
    %p138 = scmp.ne.s32.totalorder %s130, %s132
    %p139 = scmp.eq.s32.totalorder %s17, 1
    %p140 = por %p138, %p139
    %p141 = scmp.ne.s32.totalorder %s132, %s133
    %p142 = scmp.eq.s32.totalorder %s17, 0
    %p143 = por %p141, %p142
    %p144 = scmp.ne.s32.totalorder %s132, %s133
    %p145 = scmp.eq.s32.totalorder %s18, 1
    %p146 = por %p144, %p145
    %p148 = scmp.ne.s32.totalorder %s133, %s147
    %p149 = scmp.eq.s32.totalorder %s18, 0
    %p150 = por %p148, %p149
    %s151 = ssub.s32 %s12, %s19
    %p152 = scmp.eq.s32.totalorder %s151, 0
    %s154 = sadd.s32 %s153, 1
    %s155 = scalar_select %p152, %s153, %s154
    %p158 = pneg %p152
    %p159 = scmp.eq.s32.totalorder %s12, 1
    %p160 = por %p158, %p159
    %p161 = scmp.ne.s32.totalorder %s153, %s156
    %p162 = scmp.eq.s32.totalorder %s12, 0
    %p163 = por %p161, %p162
    %p164 = scmp.ne.s32.totalorder %s153, %s156
    %p165 = scmp.eq.s32.totalorder %s17, 1
    %p166 = por %p164, %p165
    %p167 = scmp.ne.s32.totalorder %s156, %s157
    %p168 = scmp.eq.s32.totalorder %s17, 0
    %p169 = por %p167, %p168
    %p170 = scmp.ne.s32.totalorder %s156, %s157
    %p171 = scmp.eq.s32.totalorder %s18, 1
    %p172 = por %p170, %p171
    %p174 = scmp.ne.s32.totalorder %s157, %s173
    %p175 = scmp.eq.s32.totalorder %s18, 0
    %p176 = por %p174, %p175
    %p177 = scmp.le.s32.totalorder 1, %s12
    %p178 = scmp.lt.s32.totalorder %s12, 3
    %p179 = pnand %p177, %p178
    %p180 = pneg %p179
    // Predicated region
    $region9: #{tpu_custom_call.1} parent=5 // pred_check
      _
    $region10: #{tpu_custom_call.1} parent=5 // pred_check_branch
      %182 = sbr.rel (%p179) target = $region12
    $region11: #{tpu_custom_call.1} parent=5 // pred_region
      %s183 = ssub.s32 %s12, 1
      // Predicated region
      $region13: #{tpu_custom_call.1} parent=11 // pred_check
        %p184 = pneg %p59
      $region14: #{tpu_custom_call.1} parent=11 // pred_check_branch
        %186 = sbr.rel (%p184) target = $region16
      $region15: #{tpu_custom_call.1} parent=11 // pred_region
        _
      $region16: #{tpu_custom_call.1} parent=11 // pred_fallthru
        _
      // Predicated region
      $region17: #{tpu_custom_call.1} parent=11 // pred_check
        %p187 = pneg %p80
      $region18: #{tpu_custom_call.1} parent=11 // pred_check_branch
        %189 = sbr.rel (%p187) target = $region20
      $region19: #{tpu_custom_call.1} parent=11 // pred_region
        _
      $region20: #{tpu_custom_call.1} parent=11 // pred_fallthru
        _
      // Predicated region
      $region21: #{tpu_custom_call.1} parent=11 // pred_check
        %p190 = pneg %p101
      $region22: #{tpu_custom_call.1} parent=11 // pred_check_branch
        %192 = sbr.rel (%p190) target = $region24
      $region23: #{tpu_custom_call.1} parent=11 // pred_region
        _
      $region24: #{tpu_custom_call.1} parent=11 // pred_fallthru
        _
      // Predicated region
      $region25: #{tpu_custom_call.1} parent=11 // pred_check
        %p193 = pneg %p122
      $region26: #{tpu_custom_call.1} parent=11 // pred_check_branch
        %195 = sbr.rel (%p193) target = $region28
      $region27: #{tpu_custom_call.1} parent=11 // pred_region
        _
      $region28: #{tpu_custom_call.1} parent=11 // pred_fallthru
        _
      // Predicated region
      $region29: #{tpu_custom_call.1} parent=11 // pred_check
        %p196 = pneg %p143
      $region30: #{tpu_custom_call.1} parent=11 // pred_check_branch
        %198 = sbr.rel (%p196) target = $region32
      $region31: #{tpu_custom_call.1} parent=11 // pred_region
        _
      $region32: #{tpu_custom_call.1} parent=11 // pred_fallthru
        _
    $region12: #{tpu_custom_call.1} parent=5 // pred_fallthru
      _
    %p199 = scmp.lt.s32.totalorder %s12, 2
    // Predicated region
    $region33: #{tpu_custom_call.1} parent=5 // pred_check
      %p200 = pneg %p199
    $region34: #{tpu_custom_call.1} parent=5 // pred_check_branch
      %202 = sbr.rel (%p200) target = $region36
    $region35: #{tpu_custom_call.1} parent=5 // pred_region
      // Predicated region
      $region37: #{tpu_custom_call.1} parent=35 // pred_check
        %p203 = pneg %p32
      $region38: #{tpu_custom_call.1} parent=35 // pred_check_branch
        %205 = sbr.rel (%p203) target = $region40
      $region39: #{tpu_custom_call.1} parent=35 // pred_region
        %s206 = smul.u32 64, %s12
        %p207 = scmp.lt.s32.totalorder %s206, 127
        %s208 = scalar_select %p207, %s206, 127
        %s209 = smul.addr %s208, 2
        %s210 = smul.addr %s209, 4
        %s211 = scalar_lea.vmem %s0, %s210
        %s212 = smul.u32 64, %s12
      $region40: #{tpu_custom_call.1} parent=35 // pred_fallthru
        _
    $region36: #{tpu_custom_call.1} parent=5 // pred_fallthru
      _
    %p213 = scmp.le.s32.totalorder 1, %s12
    %p214 = scmp.lt.s32.totalorder %s12, 3
    %p215 = pnand %p213, %p214
    %p216 = pneg %p215
    // Predicated region
    $region41: #{tpu_custom_call.1} parent=5 // pred_check
      _
    $region42: #{tpu_custom_call.1} parent=5 // pred_check_branch
      %218 = sbr.rel (%p215) target = $region44
    $region43: #{tpu_custom_call.1} parent=5 // pred_region
      %s219 = ssub.s32 %s12, 1
      %s220 = smul.u32 64, %s17
      %p221 = scmp.lt.s32.totalorder %s220, 127
      %s222 = scalar_select %p221, %s220, 127
      %s223 = smul.addr %s222, 2
      %s224 = smul.addr %s223, 4
      %s225 = scalar_lea.vmem %s0, %s224
      %p226 = pneg %p38
      %p227 = pneg %p35
      %p228 = pneg %p59
      %p229 = pneg %p56
      %p230 = pneg %p80
      %p231 = pneg %p77
      %p232 = pneg %p101
      %p233 = pneg %p98
      %p234 = pneg %p122
      %p235 = pneg %p119
      %p236 = pneg %p143
      %p237 = pneg %p140
      %p238 = pneg %p169
      %p239 = pneg %p166
      %s240 = smul.u32 64, %s17
      %p241 = scmp.lt.s32.totalorder %s240, 127
      %s242 = scalar_select %p241, %s240, 127
      %s243 = smul.addr %s242, 2
      %s244 = smul.addr %s243, 4
      %s245 = scalar_lea.vmem %s6, %s244
      %s246 = smul.u32 64, %s17
      %p247 = scmp.lt.s32.totalorder %s246, 127
      %s248 = scalar_select %p247, %s246, 127
      %s249 = smul.addr %s248, 2
      %s250 = smul.addr %s249, 4
      %s251 = scalar_lea.vmem %s0, %s250
      %s252 = smul.u32 64, %s17
      %s253 = smul.u32 64, %s17
      %p254 = scmp.lt.s32.totalorder %s253, 127
      %s255 = scalar_select %p254, %s253, 127
      %s256 = smul.addr %s255, 2
      %s257 = smul.addr %s256, 4
      %s258 = scalar_lea.vmem %s6, %s257
      %s259 = smul.u32 64, %s17
      %v261 = vld [vmem:[%s251] sm:$0xff]
      %v262 = vld [vmem:[%s251 + $0x8] sm:$0xff]
      %v263 = vld [vmem:[%s251 + $0x10] sm:$0xff]
      %v264 = vld [vmem:[%s251 + $0x18] sm:$0xff]
      %v265 = vld [vmem:[%s251 + $0x20] sm:$0xff]
      %v266 = vld [vmem:[%s251 + $0x28] sm:$0xff]
      %v267 = vld [vmem:[%s251 + $0x30] sm:$0xff]
      %v268 = vld [vmem:[%s251 + $0x38] sm:$0xff]
      %v269 = vld [vmem:[%s251 + $0x40] sm:$0xff]
      %v270 = vld [vmem:[%s251 + $0x48] sm:$0xff]
      %v271 = vld [vmem:[%s251 + $0x50] sm:$0xff]
      %v272 = vld [vmem:[%s251 + $0x58] sm:$0xff]
      %v273 = vld [vmem:[%s251 + $0x60] sm:$0xff]
      %v274 = vld [vmem:[%s251 + $0x68] sm:$0xff]
      %v275 = vld [vmem:[%s251 + $0x70] sm:$0xff]
      %v276 = vld [vmem:[%s251 + $0x78] sm:$0xff]
      %v277 = vld [vmem:[%s251 + $0x80] sm:$0xff]
      %v278 = vld [vmem:[%s251 + $0x88] sm:$0xff]
      %v279 = vld [vmem:[%s251 + $0x90] sm:$0xff]
      %v280 = vld [vmem:[%s251 + $0x98] sm:$0xff]
      %v281 = vld [vmem:[%s251 + $0xa0] sm:$0xff]
      %v282 = vld [vmem:[%s251 + $0xa8] sm:$0xff]
      %v283 = vld [vmem:[%s251 + $0xb0] sm:$0xff]
      %v284 = vld [vmem:[%s251 + $0xb8] sm:$0xff]
      %v285 = vld [vmem:[%s251 + $0xc0] sm:$0xff]
      %v286 = vld [vmem:[%s251 + $0xc8] sm:$0xff]
      %v287 = vld [vmem:[%s251 + $0xd0] sm:$0xff]
      %v288 = vld [vmem:[%s251 + $0xd8] sm:$0xff]
      %v289 = vld [vmem:[%s251 + $0xe0] sm:$0xff]
      %v290 = vld [vmem:[%s251 + $0xe8] sm:$0xff]
      %v291 = vld [vmem:[%s251 + $0xf0] sm:$0xff]
      %v292 = vld [vmem:[%s251 + $0xf8] sm:$0xff]
      %v293 = vld [vmem:[%s251 + $0x100] sm:$0xff]
      %v294 = vld [vmem:[%s251 + $0x108] sm:$0xff]
      %v295 = vld [vmem:[%s251 + $0x110] sm:$0xff]
      %v296 = vld [vmem:[%s251 + $0x118] sm:$0xff]
      %v297 = vld [vmem:[%s251 + $0x120] sm:$0xff]
      %v298 = vld [vmem:[%s251 + $0x128] sm:$0xff]
      %v299 = vld [vmem:[%s251 + $0x130] sm:$0xff]
      %v300 = vld [vmem:[%s251 + $0x138] sm:$0xff]
      %v301 = vld [vmem:[%s251 + $0x140] sm:$0xff]
      %v302 = vld [vmem:[%s251 + $0x148] sm:$0xff]
      %v303 = vld [vmem:[%s251 + $0x150] sm:$0xff]
      %v304 = vld [vmem:[%s251 + $0x158] sm:$0xff]
      %v305 = vld [vmem:[%s251 + $0x160] sm:$0xff]
      %v306 = vld [vmem:[%s251 + $0x168] sm:$0xff]
      %v307 = vld [vmem:[%s251 + $0x170] sm:$0xff]
      %v308 = vld [vmem:[%s251 + $0x178] sm:$0xff]
      %v309 = vld [vmem:[%s251 + $0x180] sm:$0xff]
      %v310 = vld [vmem:[%s251 + $0x188] sm:$0xff]
      %v311 = vld [vmem:[%s251 + $0x190] sm:$0xff]
      %v312 = vld [vmem:[%s251 + $0x198] sm:$0xff]
      %v313 = vld [vmem:[%s251 + $0x1a0] sm:$0xff]
      %v314 = vld [vmem:[%s251 + $0x1a8] sm:$0xff]
      %v315 = vld [vmem:[%s251 + $0x1b0] sm:$0xff]
      %v316 = vld [vmem:[%s251 + $0x1b8] sm:$0xff]
      %v317 = vld [vmem:[%s251 + $0x1c0] sm:$0xff]
      %v318 = vld [vmem:[%s251 + $0x1c8] sm:$0xff]
      %v319 = vld [vmem:[%s251 + $0x1d0] sm:$0xff]
      %v320 = vld [vmem:[%s251 + $0x1d8] sm:$0xff]
      %v321 = vld [vmem:[%s251 + $0x1e0] sm:$0xff]
      %v322 = vld [vmem:[%s251 + $0x1e8] sm:$0xff]
      %v323 = vld [vmem:[%s251 + $0x1f0] sm:$0xff]
      %v324 = vld [vmem:[%s251 + $0x1f8] sm:$0xff]
      %v325 = vld [vmem:[%s1] sm:$0xff]
      %v326 = vld [vmem:[%s1 + $0x8] sm:$0xf]
      %v327 = vld [vmem:[%s1 + $0xc] sm:$0xff]
      %v328 = vld [vmem:[%s1 + $0x14] sm:$0xf]
      %v329 = vld [vmem:[%s1 + $0x18] sm:$0xff]
      %v330 = vld [vmem:[%s1 + $0x20] sm:$0xf]
      %v331 = vld [vmem:[%s1 + $0x24] sm:$0xff]
      %v332 = vld [vmem:[%s1 + $0x2c] sm:$0xf]
      %v333 = vld [vmem:[%s1 + $0x30] sm:$0xff]
      %v334 = vld [vmem:[%s1 + $0x38] sm:$0xf]
      %v335 = vld [vmem:[%s1 + $0x3c] sm:$0xff]
      %v336 = vld [vmem:[%s1 + $0x44] sm:$0xf]
      %v337 = vld [vmem:[%s1 + $0x48] sm:$0xff]
      %v338 = vld [vmem:[%s1 + $0x50] sm:$0xf]
      %v339 = vld [vmem:[%s1 + $0x54] sm:$0xff]
      %v340 = vld [vmem:[%s1 + $0x5c] sm:$0xf]
      %v341 = vld [vmem:[%s1 + $0x60] sm:$0xff]
      %v342 = vld [vmem:[%s1 + $0x68] sm:$0xf]
      %v343 = vld [vmem:[%s1 + $0x6c] sm:$0xff]
      %v344 = vld [vmem:[%s1 + $0x74] sm:$0xf]
      %v345 = vld [vmem:[%s1 + $0x78] sm:$0xff]
      %v346 = vld [vmem:[%s1 + $0x80] sm:$0xf]
      %v347 = vld [vmem:[%s1 + $0x84] sm:$0xff]
      %v348 = vld [vmem:[%s1 + $0x8c] sm:$0xf]
      %v349 = vld [vmem:[%s1 + $0x90] sm:$0xff]
      %v350 = vld [vmem:[%s1 + $0x98] sm:$0xf]
      %v351 = vld [vmem:[%s1 + $0x9c] sm:$0xff]
      %v352 = vld [vmem:[%s1 + $0xa4] sm:$0xf]
      %v353 = vld [vmem:[%s1 + $0xa8] sm:$0xff]
      %v354 = vld [vmem:[%s1 + $0xb0] sm:$0xf]
      %v355 = vld [vmem:[%s1 + $0xb4] sm:$0xff]
      %v356 = vld [vmem:[%s1 + $0xbc] sm:$0xf]
      %v357 = vld [vmem:[%s1 + $0xc0] sm:$0xff]
      %v358 = vld [vmem:[%s1 + $0xc8] sm:$0xf]
      %v359 = vld [vmem:[%s1 + $0xcc] sm:$0xff]
      %v360 = vld [vmem:[%s1 + $0xd4] sm:$0xf]
      %v361 = vld [vmem:[%s2] sm:$0x7]
      %v363 = vlaneseq
      %v364 = vshrl.u32 %v363, 7
      %v365 = vsub.s32 0, %v364
      %v366 = vrot.slane %v361, %v365
      %v367 = vlaneseq
      %v368 = vshrl.u32 %v367, 7
      %v369 = vsub.s32 1, %v368
      %v370 = vrot.slane %v361, %v369
      %v371 = vlaneseq
      %v372 = vshrl.u32 %v371, 7
      %v373 = vsub.s32 2, %v372
      %v374 = vrot.slane %v361, %v373
      %v442 = vunpack.c.l.b16 %v261
      %v443 = vunpack.c.h.b16 %v261
      %v444 = vunpack.c.l.b16 %v262
      %v445 = vunpack.c.h.b16 %v262
      %v446 = vunpack.c.l.b16 %v263
      %v447 = vunpack.c.h.b16 %v263
      %v448 = vunpack.c.l.b16 %v264
      %v449 = vunpack.c.h.b16 %v264
      %v450 = vunpack.c.l.b16 %v265
      %v451 = vunpack.c.h.b16 %v265
      %v452 = vunpack.c.l.b16 %v266
      %v453 = vunpack.c.h.b16 %v266
      %v454 = vunpack.c.l.b16 %v267
      %v455 = vunpack.c.h.b16 %v267
      %v456 = vunpack.c.l.b16 %v268
      %v457 = vunpack.c.h.b16 %v268
      %v458 = vunpack.c.l.b16 %v269
      %v459 = vunpack.c.h.b16 %v269
      %v460 = vunpack.c.l.b16 %v270
      %v461 = vunpack.c.h.b16 %v270
      %v462 = vunpack.c.l.b16 %v271
      %v463 = vunpack.c.h.b16 %v271
      %v464 = vunpack.c.l.b16 %v272
      %v465 = vunpack.c.h.b16 %v272
      %v466 = vunpack.c.l.b16 %v273
      %v467 = vunpack.c.h.b16 %v273
      %v468 = vunpack.c.l.b16 %v274
      %v469 = vunpack.c.h.b16 %v274
      %v470 = vunpack.c.l.b16 %v275
      %v471 = vunpack.c.h.b16 %v275
      %v472 = vunpack.c.l.b16 %v276
      %v473 = vunpack.c.h.b16 %v276
      %v474 = vunpack.c.l.b16 %v277
      %v475 = vunpack.c.h.b16 %v277
      %v476 = vunpack.c.l.b16 %v278
      %v477 = vunpack.c.h.b16 %v278
      %v478 = vunpack.c.l.b16 %v279
      %v479 = vunpack.c.h.b16 %v279
      %v480 = vunpack.c.l.b16 %v280
      %v481 = vunpack.c.h.b16 %v280
      %v482 = vunpack.c.l.b16 %v281
      %v483 = vunpack.c.h.b16 %v281
      %v484 = vunpack.c.l.b16 %v282
      %v485 = vunpack.c.h.b16 %v282
      %v486 = vunpack.c.l.b16 %v283
      %v487 = vunpack.c.h.b16 %v283
      %v488 = vunpack.c.l.b16 %v284
      %v489 = vunpack.c.h.b16 %v284
      %v490 = vunpack.c.l.b16 %v285
      %v491 = vunpack.c.h.b16 %v285
      %v492 = vunpack.c.l.b16 %v286
      %v493 = vunpack.c.h.b16 %v286
      %v494 = vunpack.c.l.b16 %v287
      %v495 = vunpack.c.h.b16 %v287
      %v496 = vunpack.c.l.b16 %v288
      %v497 = vunpack.c.h.b16 %v288
      %v498 = vunpack.c.l.b16 %v289
      %v499 = vunpack.c.h.b16 %v289
      %v500 = vunpack.c.l.b16 %v290
      %v501 = vunpack.c.h.b16 %v290
      %v502 = vunpack.c.l.b16 %v291
      %v503 = vunpack.c.h.b16 %v291
      %v504 = vunpack.c.l.b16 %v292
      %v505 = vunpack.c.h.b16 %v292
      %v506 = vunpack.c.l.b16 %v293
      %v507 = vunpack.c.h.b16 %v293
      %v508 = vunpack.c.l.b16 %v294
      %v509 = vunpack.c.h.b16 %v294
      %v510 = vunpack.c.l.b16 %v295
      %v511 = vunpack.c.h.b16 %v295
      %v512 = vunpack.c.l.b16 %v296
      %v513 = vunpack.c.h.b16 %v296
      %v514 = vunpack.c.l.b16 %v297
      %v515 = vunpack.c.h.b16 %v297
      %v516 = vunpack.c.l.b16 %v298
      %v517 = vunpack.c.h.b16 %v298
      %v518 = vunpack.c.l.b16 %v299
      %v519 = vunpack.c.h.b16 %v299
      %v520 = vunpack.c.l.b16 %v300
      %v521 = vunpack.c.h.b16 %v300
      %v522 = vunpack.c.l.b16 %v301
      %v523 = vunpack.c.h.b16 %v301
      %v524 = vunpack.c.l.b16 %v302
      %v525 = vunpack.c.h.b16 %v302
      %v526 = vunpack.c.l.b16 %v303
      %v527 = vunpack.c.h.b16 %v303
      %v528 = vunpack.c.l.b16 %v304
      %v529 = vunpack.c.h.b16 %v304
      %v530 = vunpack.c.l.b16 %v305
      %v531 = vunpack.c.h.b16 %v305
      %v532 = vunpack.c.l.b16 %v306
      %v533 = vunpack.c.h.b16 %v306
      %v534 = vunpack.c.l.b16 %v307
      %v535 = vunpack.c.h.b16 %v307
      %v536 = vunpack.c.l.b16 %v308
      %v537 = vunpack.c.h.b16 %v308
      %v538 = vunpack.c.l.b16 %v309
      %v539 = vunpack.c.h.b16 %v309
      %v540 = vunpack.c.l.b16 %v310
      %v541 = vunpack.c.h.b16 %v310
      %v542 = vunpack.c.l.b16 %v311
      %v543 = vunpack.c.h.b16 %v311
      %v544 = vunpack.c.l.b16 %v312
      %v545 = vunpack.c.h.b16 %v312
      %v546 = vunpack.c.l.b16 %v313
      %v547 = vunpack.c.h.b16 %v313
      %v548 = vunpack.c.l.b16 %v314
      %v549 = vunpack.c.h.b16 %v314
      %v550 = vunpack.c.l.b16 %v315
      %v551 = vunpack.c.h.b16 %v315
      %v552 = vunpack.c.l.b16 %v316
      %v553 = vunpack.c.h.b16 %v316
      %v554 = vunpack.c.l.b16 %v317
      %v555 = vunpack.c.h.b16 %v317
      %v556 = vunpack.c.l.b16 %v318
      %v557 = vunpack.c.h.b16 %v318
      %v558 = vunpack.c.l.b16 %v319
      %v559 = vunpack.c.h.b16 %v319
      %v560 = vunpack.c.l.b16 %v320
      %v561 = vunpack.c.h.b16 %v320
      %v562 = vunpack.c.l.b16 %v321
      %v563 = vunpack.c.h.b16 %v321
      %v564 = vunpack.c.l.b16 %v322
      %v565 = vunpack.c.h.b16 %v322
      %v566 = vunpack.c.l.b16 %v323
      %v567 = vunpack.c.h.b16 %v323
      %v568 = vunpack.c.l.b16 %v324
      %v569 = vunpack.c.h.b16 %v324
      %v570 = vpack.c.b16 %v444, %v442
      %v571 = vpack.c.b16 %v445, %v443
      %v572 = vpack.c.b16 %v448, %v446
      %v573 = vpack.c.b16 %v449, %v447
      %v574 = vpack.c.b16 %v452, %v450
      %v575 = vpack.c.b16 %v453, %v451
      %v576 = vpack.c.b16 %v456, %v454
      %v577 = vpack.c.b16 %v457, %v455
      %v578 = vpack.c.b16 %v460, %v458
      %v579 = vpack.c.b16 %v461, %v459
      %v580 = vpack.c.b16 %v464, %v462
      %v581 = vpack.c.b16 %v465, %v463
      %v582 = vpack.c.b16 %v468, %v466
      %v583 = vpack.c.b16 %v469, %v467
      %v584 = vpack.c.b16 %v472, %v470
      %v585 = vpack.c.b16 %v473, %v471
      %v586 = vpack.c.b16 %v476, %v474
      %v587 = vpack.c.b16 %v477, %v475
      %v588 = vpack.c.b16 %v480, %v478
      %v589 = vpack.c.b16 %v481, %v479
      %v590 = vpack.c.b16 %v484, %v482
      %v591 = vpack.c.b16 %v485, %v483
      %v592 = vpack.c.b16 %v488, %v486
      %v593 = vpack.c.b16 %v489, %v487
      %v594 = vpack.c.b16 %v492, %v490
      %v595 = vpack.c.b16 %v493, %v491
      %v596 = vpack.c.b16 %v496, %v494
      %v597 = vpack.c.b16 %v497, %v495
      %v598 = vpack.c.b16 %v500, %v498
      %v599 = vpack.c.b16 %v501, %v499
      %v600 = vpack.c.b16 %v504, %v502
      %v601 = vpack.c.b16 %v505, %v503
      %v602 = vpack.c.b16 %v508, %v506
      %v603 = vpack.c.b16 %v509, %v507
      %v604 = vpack.c.b16 %v512, %v510
      %v605 = vpack.c.b16 %v513, %v511
      %v606 = vpack.c.b16 %v516, %v514
      %v607 = vpack.c.b16 %v517, %v515
      %v608 = vpack.c.b16 %v520, %v518
      %v609 = vpack.c.b16 %v521, %v519
      %v610 = vpack.c.b16 %v524, %v522
      %v611 = vpack.c.b16 %v525, %v523
      %v612 = vpack.c.b16 %v528, %v526
      %v613 = vpack.c.b16 %v529, %v527
      %v614 = vpack.c.b16 %v532, %v530
      %v615 = vpack.c.b16 %v533, %v531
      %v616 = vpack.c.b16 %v536, %v534
      %v617 = vpack.c.b16 %v537, %v535
      %v618 = vpack.c.b16 %v540, %v538
      %v619 = vpack.c.b16 %v541, %v539
      %v620 = vpack.c.b16 %v544, %v542
      %v621 = vpack.c.b16 %v545, %v543
      %v622 = vpack.c.b16 %v548, %v546
      %v623 = vpack.c.b16 %v549, %v547
      %v624 = vpack.c.b16 %v552, %v550
      %v625 = vpack.c.b16 %v553, %v551
      %v626 = vpack.c.b16 %v556, %v554
      %v627 = vpack.c.b16 %v557, %v555
      %v628 = vpack.c.b16 %v560, %v558
      %v629 = vpack.c.b16 %v561, %v559
      %v630 = vpack.c.b16 %v564, %v562
      %v631 = vpack.c.b16 %v565, %v563
      %v632 = vpack.c.b16 %v568, %v566
      %v633 = vpack.c.b16 %v569, %v567
      %v702 = vunpack.c.l.b16 %v325
      %v703 = vunpack.c.h.b16 %v325
      %v704 = vunpack.c.l.b16 %v326
      %v705 = vunpack.c.l.b16 %v327
      %v706 = vunpack.c.h.b16 %v327
      %v707 = vunpack.c.l.b16 %v328
      %v708 = vunpack.c.l.b16 %v329
      %v709 = vunpack.c.h.b16 %v329
      %v710 = vunpack.c.l.b16 %v330
      %v711 = vunpack.c.l.b16 %v331
      %v712 = vunpack.c.h.b16 %v331
      %v713 = vunpack.c.l.b16 %v332
      %v714 = vunpack.c.l.b16 %v333
      %v715 = vunpack.c.h.b16 %v333
      %v716 = vunpack.c.l.b16 %v334
      %v717 = vunpack.c.l.b16 %v335
      %v718 = vunpack.c.h.b16 %v335
      %v719 = vunpack.c.l.b16 %v336
      %v720 = vunpack.c.l.b16 %v337
      %v721 = vunpack.c.h.b16 %v337
      %v722 = vunpack.c.l.b16 %v338
      %v723 = vunpack.c.l.b16 %v339
      %v724 = vunpack.c.h.b16 %v339
      %v725 = vunpack.c.l.b16 %v340
      %v726 = vunpack.c.l.b16 %v341
      %v727 = vunpack.c.h.b16 %v341
      %v728 = vunpack.c.l.b16 %v342
      %v729 = vunpack.c.l.b16 %v343
      %v730 = vunpack.c.h.b16 %v343
      %v731 = vunpack.c.l.b16 %v344
      %v732 = vunpack.c.l.b16 %v345
      %v733 = vunpack.c.h.b16 %v345
      %v734 = vunpack.c.l.b16 %v346
      %v735 = vunpack.c.l.b16 %v347
      %v736 = vunpack.c.h.b16 %v347
      %v737 = vunpack.c.l.b16 %v348
      %v738 = vunpack.c.l.b16 %v349
      %v739 = vunpack.c.h.b16 %v349
      %v740 = vunpack.c.l.b16 %v350
      %v741 = vunpack.c.l.b16 %v351
      %v742 = vunpack.c.h.b16 %v351
      %v743 = vunpack.c.l.b16 %v352
      %v744 = vunpack.c.l.b16 %v353
      %v745 = vunpack.c.h.b16 %v353
      %v746 = vunpack.c.l.b16 %v354
      %v747 = vunpack.c.l.b16 %v355
      %v748 = vunpack.c.h.b16 %v355
      %v749 = vunpack.c.l.b16 %v356
      %v750 = vunpack.c.l.b16 %v357
      %v751 = vunpack.c.h.b16 %v357
      %v752 = vunpack.c.l.b16 %v358
      %v753 = vunpack.c.l.b16 %v359
      %v754 = vunpack.c.h.b16 %v359
      %v755 = vunpack.c.l.b16 %v360
      %v756 = vpack.c.b16 %v705, %v702
      %v757 = vpack.c.b16 %v706, %v703
      %v758 = vpack.c.b16 %v707, %v704
      %v759 = vpack.c.b16 %v711, %v708
      %v760 = vpack.c.b16 %v712, %v709
      %v761 = vpack.c.b16 %v713, %v710
      %v762 = vpack.c.b16 %v717, %v714
      %v763 = vpack.c.b16 %v718, %v715
      %v764 = vpack.c.b16 %v719, %v716
      %v765 = vpack.c.b16 %v723, %v720
      %v766 = vpack.c.b16 %v724, %v721
      %v767 = vpack.c.b16 %v725, %v722
      %v768 = vpack.c.b16 %v729, %v726
      %v769 = vpack.c.b16 %v730, %v727
      %v770 = vpack.c.b16 %v731, %v728
      %v771 = vpack.c.b16 %v735, %v732
      %v772 = vpack.c.b16 %v736, %v733
      %v773 = vpack.c.b16 %v737, %v734
      %v774 = vpack.c.b16 %v741, %v738
      %v775 = vpack.c.b16 %v742, %v739
      %v776 = vpack.c.b16 %v743, %v740
      %v777 = vpack.c.b16 %v747, %v744
      %v778 = vpack.c.b16 %v748, %v745
      %v779 = vpack.c.b16 %v749, %v746
      %v780 = vpack.c.b16 %v753, %v750
      %v781 = vpack.c.b16 %v754, %v751
      %v782 = vpack.c.b16 %v755, %v752
      %vm810 = vcmask 130048
      %v812 = vsel %vm810, %v571, 0
      %v815 = vsel %vm810, %v573, 0
      %v818 = vsel %vm810, %v575, 0
      %v821 = vsel %vm810, %v577, 0
      %v824 = vsel %vm810, %v579, 0
      %v827 = vsel %vm810, %v581, 0
      %v830 = vsel %vm810, %v583, 0
      %v833 = vsel %vm810, %v585, 0
      %v836 = vsel %vm810, %v587, 0
      %v839 = vsel %vm810, %v589, 0
      %v842 = vsel %vm810, %v591, 0
      %v845 = vsel %vm810, %v593, 0
      %v848 = vsel %vm810, %v595, 0
      %v851 = vsel %vm810, %v597, 0
      %v854 = vsel %vm810, %v599, 0
      %v857 = vsel %vm810, %v601, 0
      %v860 = vsel %vm810, %v603, 0
      %v863 = vsel %vm810, %v605, 0
      %v866 = vsel %vm810, %v607, 0
      %v869 = vsel %vm810, %v609, 0
      %v872 = vsel %vm810, %v611, 0
      %v875 = vsel %vm810, %v613, 0
      %v878 = vsel %vm810, %v615, 0
      %v881 = vsel %vm810, %v617, 0
      %v884 = vsel %vm810, %v619, 0
      %v887 = vsel %vm810, %v621, 0
      %v890 = vsel %vm810, %v623, 0
      %v893 = vsel %vm810, %v625, 0
      %v896 = vsel %vm810, %v627, 0
      %v899 = vsel %vm810, %v629, 0
      %v902 = vsel %vm810, %v631, 0
      %v905 = vsel %vm810, %v633, 0
      %907 = vmatprep.subr.bf16.mxu0 %v757
      %908 = vmatpush1.bf16.msra.mxu0 %v756
      %909 = vmatprep.subr.bf16.mxu0 %v760
      %910 = vmatpush1.bf16.msra.mxu0 %v759
      %911 = vmatprep.subr.bf16.mxu0 %v763
      %912 = vmatpush1.bf16.msra.mxu0 %v762
      %913 = vmatprep.subr.bf16.mxu0 %v766
      %914 = vmatpush1.bf16.msra.mxu0 %v765
      %915 = vmatprep.subr.bf16.mxu0 %v769
      %916 = vmatpush1.bf16.msra.mxu0 %v768
      %917 = vmatprep.subr.bf16.mxu0 %v772
      %918 = vmatpush1.bf16.msra.mxu0 %v771
      %919 = vmatprep.subr.bf16.mxu0 %v775
      %920 = vmatpush1.bf16.msra.mxu0 %v774
      %921 = vmatprep.subr.bf16.mxu0 %v778
      %922 = vmatpush1.bf16.msra.mxu0 %v777
      %923 = vmatprep.subr.bf16.mxu0 %v781
      %924 = vmatpush1.bf16.msra.mxu0 %v780
      %925 = vmatprep.subr.bf16.mxu0 0
      %926 = vmatpush1.bf16.msra.mxu0 0
      %927 = vmatprep.subr.bf16.mxu0 0
      %928 = vmatpush1.bf16.msra.mxu0 0
      %929 = vmatprep.subr.bf16.mxu0 0
      %930 = vmatpush1.bf16.msra.mxu0 0
      %931 = vmatprep.subr.bf16.mxu0 0
      %932 = vmatpush1.bf16.msra.mxu0 0
      %933 = vmatprep.subr.bf16.mxu0 0
      %934 = vmatpush1.bf16.msra.mxu0 0
      %935 = vmatprep.subr.bf16.mxu0 0
      %936 = vmatpush1.bf16.msra.mxu0 0
      %937 = vmatprep.subr.bf16.mxu0 0
      %938 = vmatpush1.bf16.msra.mxu0 0
      %939 = vmatprep.mubr.bf16.mxu0 %v812
      %940 = vmatmul.mubr.bf16.gmra.mrb[0].mxu0 %v570
      %v941 = vpop.f32.mrb[0].mxu0
      %v942 = vadd.f32 %v366, %v941
      %v943 = vpop.f32.mrb[0].mxu0
      %v944 = vadd.f32 %v370, %v943
      %v945 = vpop.f32.mrb[0].mxu0
      %v946 = vadd.f32 %v366, %v945
      %v947 = vpop.f32.mrb[0].mxu0
      %v948 = vadd.f32 %v370, %v947
      %949 = vmatprep.mubr.bf16.mxu0 %v815
      %950 = vmatmul.mubr.bf16.gmra.mrb[0].mxu0 %v572
      %v951 = vpop.f32.mrb[0].mxu0
      %v952 = vadd.f32 %v366, %v951
      %v953 = vpop.f32.mrb[0].mxu0
      %v954 = vadd.f32 %v370, %v953
      %v955 = vpop.f32.mrb[0].mxu0
      %v956 = vadd.f32 %v366, %v955
      %v957 = vpop.f32.mrb[0].mxu0
      %v958 = vadd.f32 %v370, %v957
      %959 = vmatprep.mubr.bf16.mxu0 %v818
      %960 = vmatmul.mubr.bf16.gmra.mrb[0].mxu0 %v574
      %v961 = vpop.f32.mrb[0].mxu0
      %v962 = vadd.f32 %v366, %v961
      %v963 = vpop.f32.mrb[0].mxu0
      %v964 = vadd.f32 %v370, %v963
      %v965 = vpop.f32.mrb[0].mxu0
      %v966 = vadd.f32 %v366, %v965
      %v967 = vpop.f32.mrb[0].mxu0
      %v968 = vadd.f32 %v370, %v967
      %969 = vmatprep.mubr.bf16.mxu0 %v821
      %970 = vmatmul.mubr.bf16.gmra.mrb[0].mxu0 %v576
      %v971 = vpop.f32.mrb[0].mxu0
      %v972 = vadd.f32 %v366, %v971
      %v973 = vpop.f32.mrb[0].mxu0
      %v974 = vadd.f32 %v370, %v973
      %v975 = vpop.f32.mrb[0].mxu0
      %v976 = vadd.f32 %v366, %v975
      %v977 = vpop.f32.mrb[0].mxu0
      %v978 = vadd.f32 %v370, %v977
      %979 = vmatprep.mubr.bf16.mxu0 %v824
      %980 = vmatmul.mubr.bf16.gmra.mrb[0].mxu0 %v578
      %v981 = vpop.f32.mrb[0].mxu0
      %v982 = vadd.f32 %v366, %v981
      %v983 = vpop.f32.mrb[0].mxu0
      %v984 = vadd.f32 %v370, %v983
      %v985 = vpop.f32.mrb[0].mxu0
      %v986 = vadd.f32 %v366, %v985
      %v987 = vpop.f32.mrb[0].mxu0
      %v988 = vadd.f32 %v370, %v987
      %989 = vmatprep.mubr.bf16.mxu0 %v827
      %990 = vmatmul.mubr.bf16.gmra.mrb[0].mxu0 %v580
      %v991 = vpop.f32.mrb[0].mxu0
      %v992 = vadd.f32 %v366, %v991
      %v993 = vpop.f32.mrb[0].mxu0
      %v994 = vadd.f32 %v370, %v993
      %v995 = vpop.f32.mrb[0].mxu0
      %v996 = vadd.f32 %v366, %v995
      %v997 = vpop.f32.mrb[0].mxu0
      %v998 = vadd.f32 %v370, %v997
      %999 = vmatprep.mubr.bf16.mxu0 %v830
      %1000 = vmatmul.mubr.bf16.gmra.mrb[0].mxu0 %v582
      %v1001 = vpop.f32.mrb[0].mxu0
      %v1002 = vadd.f32 %v366, %v1001
      %v1003 = vpop.f32.mrb[0].mxu0
      %v1004 = vadd.f32 %v370, %v1003
      %v1005 = vpop.f32.mrb[0].mxu0
      %v1006 = vadd.f32 %v366, %v1005
      %v1007 = vpop.f32.mrb[0].mxu0
      %v1008 = vadd.f32 %v370, %v1007
      %1009 = vmatprep.mubr.bf16.mxu0 %v833
      %1010 = vmatmul.mubr.bf16.gmra.mrb[0].mxu0 %v584
      %v1011 = vpop.f32.mrb[0].mxu0
      %v1012 = vadd.f32 %v366, %v1011
      %v1013 = vpop.f32.mrb[0].mxu0
      %v1014 = vadd.f32 %v370, %v1013
      %v1015 = vpop.f32.mrb[0].mxu0
      %v1016 = vadd.f32 %v366, %v1015
      %v1017 = vpop.f32.mrb[0].mxu0
      %v1018 = vadd.f32 %v370, %v1017
      %1019 = vmatprep.mubr.bf16.mxu0 %v836
      %1020 = vmatmul.mubr.bf16.gmra.mrb[0].mxu0 %v586
      %v1021 = vpop.f32.mrb[0].mxu0
      %v1022 = vadd.f32 %v366, %v1021
      %v1023 = vpop.f32.mrb[0].mxu0
      %v1024 = vadd.f32 %v370, %v1023
      %v1025 = vpop.f32.mrb[0].mxu0
      %v1026 = vadd.f32 %v366, %v1025
      %v1027 = vpop.f32.mrb[0].mxu0
      %v1028 = vadd.f32 %v370, %v1027
      %1029 = vmatprep.mubr.bf16.mxu0 %v839
      %1030 = vmatmul.mubr.bf16.gmra.mrb[0].mxu0 %v588
      %v1031 = vpop.f32.mrb[0].mxu0
      %v1032 = vadd.f32 %v366, %v1031
      %v1033 = vpop.f32.mrb[0].mxu0
      %v1034 = vadd.f32 %v370, %v1033
      %v1035 = vpop.f32.mrb[0].mxu0
      %v1036 = vadd.f32 %v366, %v1035
      %v1037 = vpop.f32.mrb[0].mxu0
      %v1038 = vadd.f32 %v370, %v1037
      %1039 = vmatprep.mubr.bf16.mxu0 %v842
      %1040 = vmatmul.mubr.bf16.gmra.mrb[0].mxu0 %v590
      %v1041 = vpop.f32.mrb[0].mxu0
      %v1042 = vadd.f32 %v366, %v1041
      %v1043 = vpop.f32.mrb[0].mxu0
      %v1044 = vadd.f32 %v370, %v1043
      %v1045 = vpop.f32.mrb[0].mxu0
      %v1046 = vadd.f32 %v366, %v1045
      %v1047 = vpop.f32.mrb[0].mxu0
      %v1048 = vadd.f32 %v370, %v1047
      %1049 = vmatprep.mubr.bf16.mxu0 %v845
      %1050 = vmatmul.mubr.bf16.gmra.mrb[0].mxu0 %v592
      %v1051 = vpop.f32.mrb[0].mxu0
      %v1052 = vadd.f32 %v366, %v1051
      %v1053 = vpop.f32.mrb[0].mxu0
      %v1054 = vadd.f32 %v370, %v1053
      %v1055 = vpop.f32.mrb[0].mxu0
      %v1056 = vadd.f32 %v366, %v1055
      %v1057 = vpop.f32.mrb[0].mxu0
      %v1058 = vadd.f32 %v370, %v1057
      %1059 = vmatprep.mubr.bf16.mxu0 %v848
      %1060 = vmatmul.mubr.bf16.gmra.mrb[0].mxu0 %v594
      %v1061 = vpop.f32.mrb[0].mxu0
      %v1062 = vadd.f32 %v366, %v1061
      %v1063 = vpop.f32.mrb[0].mxu0
      %v1064 = vadd.f32 %v370, %v1063
      %v1065 = vpop.f32.mrb[0].mxu0
      %v1066 = vadd.f32 %v366, %v1065
      %v1067 = vpop.f32.mrb[0].mxu0
      %v1068 = vadd.f32 %v370, %v1067
      %1069 = vmatprep.mubr.bf16.mxu0 %v851
      %1070 = vmatmul.mubr.bf16.gmra.mrb[0].mxu0 %v596
      %v1071 = vpop.f32.mrb[0].mxu0
      %v1072 = vadd.f32 %v366, %v1071
      %v1073 = vpop.f32.mrb[0].mxu0
      %v1074 = vadd.f32 %v370, %v1073
      %v1075 = vpop.f32.mrb[0].mxu0
      %v1076 = vadd.f32 %v366, %v1075
      %v1077 = vpop.f32.mrb[0].mxu0
      %v1078 = vadd.f32 %v370, %v1077
      %1079 = vmatprep.mubr.bf16.mxu0 %v854
      %1080 = vmatmul.mubr.bf16.gmra.mrb[0].mxu0 %v598
      %v1081 = vpop.f32.mrb[0].mxu0
      %v1082 = vadd.f32 %v366, %v1081
      %v1083 = vpop.f32.mrb[0].mxu0
      %v1084 = vadd.f32 %v370, %v1083
      %v1085 = vpop.f32.mrb[0].mxu0
      %v1086 = vadd.f32 %v366, %v1085
      %v1087 = vpop.f32.mrb[0].mxu0
      %v1088 = vadd.f32 %v370, %v1087
      %1089 = vmatprep.mubr.bf16.mxu0 %v857
      %1090 = vmatmul.mubr.bf16.gmra.mrb[0].mxu0 %v600
      %v1091 = vpop.f32.mrb[0].mxu0
      %v1092 = vadd.f32 %v366, %v1091
      %v1093 = vpop.f32.mrb[0].mxu0
      %v1094 = vadd.f32 %v370, %v1093
      %v1095 = vpop.f32.mrb[0].mxu0
      %v1096 = vadd.f32 %v366, %v1095
      %v1097 = vpop.f32.mrb[0].mxu0
      %v1098 = vadd.f32 %v370, %v1097
      %1099 = vmatprep.mubr.bf16.mxu0 %v860
      %1100 = vmatmul.mubr.bf16.gmra.mrb[0].mxu0 %v602
      %v1101 = vpop.f32.mrb[0].mxu0
      %v1102 = vadd.f32 %v366, %v1101
      %v1103 = vpop.f32.mrb[0].mxu0
      %v1104 = vadd.f32 %v370, %v1103
      %v1105 = vpop.f32.mrb[0].mxu0
      %v1106 = vadd.f32 %v366, %v1105
      %v1107 = vpop.f32.mrb[0].mxu0
      %v1108 = vadd.f32 %v370, %v1107
      %1109 = vmatprep.mubr.bf16.mxu0 %v863
      %1110 = vmatmul.mubr.bf16.gmra.mrb[0].mxu0 %v604
      %v1111 = vpop.f32.mrb[0].mxu0
      %v1112 = vadd.f32 %v366, %v1111
      %v1113 = vpop.f32.mrb[0].mxu0
      %v1114 = vadd.f32 %v370, %v1113
      %v1115 = vpop.f32.mrb[0].mxu0
      %v1116 = vadd.f32 %v366, %v1115
      %v1117 = vpop.f32.mrb[0].mxu0
      %v1118 = vadd.f32 %v370, %v1117
      %1119 = vmatprep.mubr.bf16.mxu0 %v866
      %1120 = vmatmul.mubr.bf16.gmra.mrb[0].mxu0 %v606
      %v1121 = vpop.f32.mrb[0].mxu0
      %v1122 = vadd.f32 %v366, %v1121
      %v1123 = vpop.f32.mrb[0].mxu0
      %v1124 = vadd.f32 %v370, %v1123
      %v1125 = vpop.f32.mrb[0].mxu0
      %v1126 = vadd.f32 %v366, %v1125
      %v1127 = vpop.f32.mrb[0].mxu0
      %v1128 = vadd.f32 %v370, %v1127
      %1129 = vmatprep.mubr.bf16.mxu0 %v869
      %1130 = vmatmul.mubr.bf16.gmra.mrb[0].mxu0 %v608
      %v1131 = vpop.f32.mrb[0].mxu0
      %v1132 = vadd.f32 %v366, %v1131
      %v1133 = vpop.f32.mrb[0].mxu0
      %v1134 = vadd.f32 %v370, %v1133
      %v1135 = vpop.f32.mrb[0].mxu0
      %v1136 = vadd.f32 %v366, %v1135
      %v1137 = vpop.f32.mrb[0].mxu0
      %v1138 = vadd.f32 %v370, %v1137
      %1139 = vmatprep.mubr.bf16.mxu0 %v872
      %1140 = vmatmul.mubr.bf16.gmra.mrb[0].mxu0 %v610
      %v1141 = vpop.f32.mrb[0].mxu0
      %v1142 = vadd.f32 %v366, %v1141
      %v1143 = vpop.f32.mrb[0].mxu0
      %v1144 = vadd.f32 %v370, %v1143
      %v1145 = vpop.f32.mrb[0].mxu0
      %v1146 = vadd.f32 %v366, %v1145
      %v1147 = vpop.f32.mrb[0].mxu0
      %v1148 = vadd.f32 %v370, %v1147
      %1149 = vmatprep.mubr.bf16.mxu0 %v875
      %1150 = vmatmul.mubr.bf16.gmra.mrb[0].mxu0 %v612
      %v1151 = vpop.f32.mrb[0].mxu0
      %v1152 = vadd.f32 %v366, %v1151
      %v1153 = vpop.f32.mrb[0].mxu0
      %v1154 = vadd.f32 %v370, %v1153
      %v1155 = vpop.f32.mrb[0].mxu0
      %v1156 = vadd.f32 %v366, %v1155
      %v1157 = vpop.f32.mrb[0].mxu0
      %v1158 = vadd.f32 %v370, %v1157
      %1159 = vmatprep.mubr.bf16.mxu0 %v878
      %1160 = vmatmul.mubr.bf16.gmra.mrb[0].mxu0 %v614
      %v1161 = vpop.f32.mrb[0].mxu0
      %v1162 = vadd.f32 %v366, %v1161
      %v1163 = vpop.f32.mrb[0].mxu0
      %v1164 = vadd.f32 %v370, %v1163
      %v1165 = vpop.f32.mrb[0].mxu0
      %v1166 = vadd.f32 %v366, %v1165
      %v1167 = vpop.f32.mrb[0].mxu0
      %v1168 = vadd.f32 %v370, %v1167
      %1169 = vmatprep.mubr.bf16.mxu0 %v881
      %1170 = vmatmul.mubr.bf16.gmra.mrb[0].mxu0 %v616
      %v1171 = vpop.f32.mrb[0].mxu0
      %v1172 = vadd.f32 %v366, %v1171
      %v1173 = vpop.f32.mrb[0].mxu0
      %v1174 = vadd.f32 %v370, %v1173
      %v1175 = vpop.f32.mrb[0].mxu0
      %v1176 = vadd.f32 %v366, %v1175
      %v1177 = vpop.f32.mrb[0].mxu0
      %v1178 = vadd.f32 %v370, %v1177
      %1179 = vmatprep.mubr.bf16.mxu0 %v884
      %1180 = vmatmul.mubr.bf16.gmra.mrb[0].mxu0 %v618
      %v1181 = vpop.f32.mrb[0].mxu0
      %v1182 = vadd.f32 %v366, %v1181
      %v1183 = vpop.f32.mrb[0].mxu0
      %v1184 = vadd.f32 %v370, %v1183
      %v1185 = vpop.f32.mrb[0].mxu0
      %v1186 = vadd.f32 %v366, %v1185
      %v1187 = vpop.f32.mrb[0].mxu0
      %v1188 = vadd.f32 %v370, %v1187
      %1189 = vmatprep.mubr.bf16.mxu0 %v887
      %1190 = vmatmul.mubr.bf16.gmra.mrb[0].mxu0 %v620
      %v1191 = vpop.f32.mrb[0].mxu0
      %v1192 = vadd.f32 %v366, %v1191
      %v1193 = vpop.f32.mrb[0].mxu0
      %v1194 = vadd.f32 %v370, %v1193
      %v1195 = vpop.f32.mrb[0].mxu0
      %v1196 = vadd.f32 %v366, %v1195
      %v1197 = vpop.f32.mrb[0].mxu0
      %v1198 = vadd.f32 %v370, %v1197
      %1199 = vmatprep.mubr.bf16.mxu0 %v890
      %1200 = vmatmul.mubr.bf16.gmra.mrb[0].mxu0 %v622
      %v1201 = vpop.f32.mrb[0].mxu0
      %v1202 = vadd.f32 %v366, %v1201
      %v1203 = vpop.f32.mrb[0].mxu0
      %v1204 = vadd.f32 %v370, %v1203
      %v1205 = vpop.f32.mrb[0].mxu0
      %v1206 = vadd.f32 %v366, %v1205
      %v1207 = vpop.f32.mrb[0].mxu0
      %v1208 = vadd.f32 %v370, %v1207
      %1209 = vmatprep.mubr.bf16.mxu0 %v893
      %1210 = vmatmul.mubr.bf16.gmra.mrb[0].mxu0 %v624
      %v1211 = vpop.f32.mrb[0].mxu0
      %v1212 = vadd.f32 %v366, %v1211
      %v1213 = vpop.f32.mrb[0].mxu0
      %v1214 = vadd.f32 %v370, %v1213
      %v1215 = vpop.f32.mrb[0].mxu0
      %v1216 = vadd.f32 %v366, %v1215
      %v1217 = vpop.f32.mrb[0].mxu0
      %v1218 = vadd.f32 %v370, %v1217
      %1219 = vmatprep.mubr.bf16.mxu0 %v896
      %1220 = vmatmul.mubr.bf16.gmra.mrb[0].mxu0 %v626
      %v1221 = vpop.f32.mrb[0].mxu0
      %v1222 = vadd.f32 %v366, %v1221
      %v1223 = vpop.f32.mrb[0].mxu0
      %v1224 = vadd.f32 %v370, %v1223
      %v1225 = vpop.f32.mrb[0].mxu0
      %v1226 = vadd.f32 %v366, %v1225
      %v1227 = vpop.f32.mrb[0].mxu0
      %v1228 = vadd.f32 %v370, %v1227
      %1229 = vmatprep.mubr.bf16.mxu0 %v899
      %1230 = vmatmul.mubr.bf16.gmra.mrb[0].mxu0 %v628
      %v1231 = vpop.f32.mrb[0].mxu0
      %v1232 = vadd.f32 %v366, %v1231
      %v1233 = vpop.f32.mrb[0].mxu0
      %v1234 = vadd.f32 %v370, %v1233
      %v1235 = vpop.f32.mrb[0].mxu0
      %v1236 = vadd.f32 %v366, %v1235
      %v1237 = vpop.f32.mrb[0].mxu0
      %v1238 = vadd.f32 %v370, %v1237
      %1239 = vmatprep.mubr.bf16.mxu0 %v902
      %1240 = vmatmul.mubr.bf16.gmra.mrb[0].mxu0 %v630
      %v1241 = vpop.f32.mrb[0].mxu0
      %v1242 = vadd.f32 %v366, %v1241
      %v1243 = vpop.f32.mrb[0].mxu0
      %v1244 = vadd.f32 %v370, %v1243
      %v1245 = vpop.f32.mrb[0].mxu0
      %v1246 = vadd.f32 %v366, %v1245
      %v1247 = vpop.f32.mrb[0].mxu0
      %v1248 = vadd.f32 %v370, %v1247
      %1249 = vmatprep.mubr.bf16.mxu0 %v905
      %1250 = vmatmul.mubr.bf16.gmra.mrb[0].mxu0 %v632
      %v1251 = vpop.f32.mrb[0].mxu0
      %v1252 = vadd.f32 %v366, %v1251
      %v1253 = vpop.f32.mrb[0].mxu0
      %v1254 = vadd.f32 %v370, %v1253
      %v1255 = vpop.f32.mrb[0].mxu0
      %v1256 = vadd.f32 %v366, %v1255
      %v1257 = vpop.f32.mrb[0].mxu0
      %v1258 = vadd.f32 %v370, %v1257
      %1259 = vdwg.mxu0
      %1260 = vmatprep.subr.bf16.mxu0 0
      %1261 = vmatpush1.bf16.msra.mxu0 %v758
      %1262 = vmatprep.subr.bf16.mxu0 0
      %1263 = vmatpush1.bf16.msra.mxu0 %v761
      %1264 = vmatprep.subr.bf16.mxu0 0
      %1265 = vmatpush1.bf16.msra.mxu0 %v764
      %1266 = vmatprep.subr.bf16.mxu0 0
      %1267 = vmatpush1.bf16.msra.mxu0 %v767
      %1268 = vmatprep.subr.bf16.mxu0 0
      %1269 = vmatpush1.bf16.msra.mxu0 %v770
      %1270 = vmatprep.subr.bf16.mxu0 0
      %1271 = vmatpush1.bf16.msra.mxu0 %v773
      %1272 = vmatprep.subr.bf16.mxu0 0
      %1273 = vmatpush1.bf16.msra.mxu0 %v776
      %1274 = vmatprep.subr.bf16.mxu0 0
      %1275 = vmatpush1.bf16.msra.mxu0 %v779
      %1276 = vmatprep.subr.bf16.mxu0 0
      %1277 = vmatpush1.bf16.msra.mxu0 %v782
      %1278 = vmatprep.subr.bf16.mxu0 0
      %1279 = vmatpush1.bf16.msra.mxu0 0
      %1280 = vmatprep.subr.bf16.mxu0 0
      %1281 = vmatpush1.bf16.msra.mxu0 0
      %1282 = vmatprep.subr.bf16.mxu0 0
      %1283 = vmatpush1.bf16.msra.mxu0 0
      %1284 = vmatprep.subr.bf16.mxu0 0
      %1285 = vmatpush1.bf16.msra.mxu0 0
      %1286 = vmatprep.subr.bf16.mxu0 0
      %1287 = vmatpush1.bf16.msra.mxu0 0
      %1288 = vmatprep.subr.bf16.mxu0 0
      %1289 = vmatpush1.bf16.msra.mxu0 0
      %1290 = vmatprep.subr.bf16.mxu0 0
      %1291 = vmatpush1.bf16.msra.mxu0 0
      %1292 = vmatprep.mubr.bf16.mxu0 %v812
      %1293 = vmatmul.mubr.bf16.gmra.mrb[0].mxu0 %v570
      %v1294 = vpop.f32.mrb[0].mxu0
      %v1295 = vadd.f32 %v374, %v1294
      %v1296 = vpop.f32.mrb[0].mxu0
      %v1297 = vpop.f32.mrb[0].mxu0
      %v1298 = vadd.f32 %v374, %v1297
      %v1299 = vpop.f32.mrb[0].mxu0
      %1300 = vmatprep.mubr.bf16.mxu0 %v815
      %1301 = vmatmul.mubr.bf16.gmra.mrb[0].mxu0 %v572
      %v1302 = vpop.f32.mrb[0].mxu0
      %v1303 = vadd.f32 %v374, %v1302
      %v1304 = vpop.f32.mrb[0].mxu0
      %v1305 = vpop.f32.mrb[0].mxu0
      %v1306 = vadd.f32 %v374, %v1305
      %v1307 = vpop.f32.mrb[0].mxu0
      %1308 = vmatprep.mubr.bf16.mxu0 %v818
      %1309 = vmatmul.mubr.bf16.gmra.mrb[0].mxu0 %v574
      %v1310 = vpop.f32.mrb[0].mxu0
      %v1311 = vadd.f32 %v374, %v1310
      %v1312 = vpop.f32.mrb[0].mxu0
      %v1313 = vpop.f32.mrb[0].mxu0
      %v1314 = vadd.f32 %v374, %v1313
      %v1315 = vpop.f32.mrb[0].mxu0
      %1316 = vmatprep.mubr.bf16.mxu0 %v821
      %1317 = vmatmul.mubr.bf16.gmra.mrb[0].mxu0 %v576
      %v1318 = vpop.f32.mrb[0].mxu0
      %v1319 = vadd.f32 %v374, %v1318
      %v1320 = vpop.f32.mrb[0].mxu0
      %v1321 = vpop.f32.mrb[0].mxu0
      %v1322 = vadd.f32 %v374, %v1321
      %v1323 = vpop.f32.mrb[0].mxu0
      %1324 = vmatprep.mubr.bf16.mxu0 %v824
      %1325 = vmatmul.mubr.bf16.gmra.mrb[0].mxu0 %v578
      %v1326 = vpop.f32.mrb[0].mxu0
      %v1327 = vadd.f32 %v374, %v1326
      %v1328 = vpop.f32.mrb[0].mxu0
      %v1329 = vpop.f32.mrb[0].mxu0
      %v1330 = vadd.f32 %v374, %v1329
      %v1331 = vpop.f32.mrb[0].mxu0
      %1332 = vmatprep.mubr.bf16.mxu0 %v827
      %1333 = vmatmul.mubr.bf16.gmra.mrb[0].mxu0 %v580
      %v1334 = vpop.f32.mrb[0].mxu0
      %v1335 = vadd.f32 %v374, %v1334
      %v1336 = vpop.f32.mrb[0].mxu0
      %v1337 = vpop.f32.mrb[0].mxu0
      %v1338 = vadd.f32 %v374, %v1337
      %v1339 = vpop.f32.mrb[0].mxu0
      %1340 = vmatprep.mubr.bf16.mxu0 %v830
      %1341 = vmatmul.mubr.bf16.gmra.mrb[0].mxu0 %v582
      %v1342 = vpop.f32.mrb[0].mxu0
      %v1343 = vadd.f32 %v374, %v1342
      %v1344 = vpop.f32.mrb[0].mxu0
      %v1345 = vpop.f32.mrb[0].mxu0
      %v1346 = vadd.f32 %v374, %v1345
      %v1347 = vpop.f32.mrb[0].mxu0
      %1348 = vmatprep.mubr.bf16.mxu0 %v833
      %1349 = vmatmul.mubr.bf16.gmra.mrb[0].mxu0 %v584
      %v1350 = vpop.f32.mrb[0].mxu0
      %v1351 = vadd.f32 %v374, %v1350
      %v1352 = vpop.f32.mrb[0].mxu0
      %v1353 = vpop.f32.mrb[0].mxu0
      %v1354 = vadd.f32 %v374, %v1353
      %v1355 = vpop.f32.mrb[0].mxu0
      %1356 = vmatprep.mubr.bf16.mxu0 %v836
      %1357 = vmatmul.mubr.bf16.gmra.mrb[0].mxu0 %v586
      %v1358 = vpop.f32.mrb[0].mxu0
      %v1359 = vadd.f32 %v374, %v1358
      %v1360 = vpop.f32.mrb[0].mxu0
      %v1361 = vpop.f32.mrb[0].mxu0
      %v1362 = vadd.f32 %v374, %v1361
      %v1363 = vpop.f32.mrb[0].mxu0
      %1364 = vmatprep.mubr.bf16.mxu0 %v839
      %1365 = vmatmul.mubr.bf16.gmra.mrb[0].mxu0 %v588
      %v1366 = vpop.f32.mrb[0].mxu0
      %v1367 = vadd.f32 %v374, %v1366
      %v1368 = vpop.f32.mrb[0].mxu0
      %v1369 = vpop.f32.mrb[0].mxu0
      %v1370 = vadd.f32 %v374, %v1369
      %v1371 = vpop.f32.mrb[0].mxu0
      %1372 = vmatprep.mubr.bf16.mxu0 %v842
      %1373 = vmatmul.mubr.bf16.gmra.mrb[0].mxu0 %v590
      %v1374 = vpop.f32.mrb[0].mxu0
      %v1375 = vadd.f32 %v374, %v1374
      %v1376 = vpop.f32.mrb[0].mxu0
      %v1377 = vpop.f32.mrb[0].mxu0
      %v1378 = vadd.f32 %v374, %v1377
      %v1379 = vpop.f32.mrb[0].mxu0
      %1380 = vmatprep.mubr.bf16.mxu0 %v845
      %1381 = vmatmul.mubr.bf16.gmra.mrb[0].mxu0 %v592
      %v1382 = vpop.f32.mrb[0].mxu0
      %v1383 = vadd.f32 %v374, %v1382
      %v1384 = vpop.f32.mrb[0].mxu0
      %v1385 = vpop.f32.mrb[0].mxu0
      %v1386 = vadd.f32 %v374, %v1385
      %v1387 = vpop.f32.mrb[0].mxu0
      %1388 = vmatprep.mubr.bf16.mxu0 %v848
      %1389 = vmatmul.mubr.bf16.gmra.mrb[0].mxu0 %v594
      %v1390 = vpop.f32.mrb[0].mxu0
      %v1391 = vadd.f32 %v374, %v1390
      %v1392 = vpop.f32.mrb[0].mxu0
      %v1393 = vpop.f32.mrb[0].mxu0
      %v1394 = vadd.f32 %v374, %v1393
      %v1395 = vpop.f32.mrb[0].mxu0
      %1396 = vmatprep.mubr.bf16.mxu0 %v851
      %1397 = vmatmul.mubr.bf16.gmra.mrb[0].mxu0 %v596
      %v1398 = vpop.f32.mrb[0].mxu0
      %v1399 = vadd.f32 %v374, %v1398
      %v1400 = vpop.f32.mrb[0].mxu0
      %v1401 = vpop.f32.mrb[0].mxu0
      %v1402 = vadd.f32 %v374, %v1401
      %v1403 = vpop.f32.mrb[0].mxu0
      %1404 = vmatprep.mubr.bf16.mxu0 %v854
      %1405 = vmatmul.mubr.bf16.gmra.mrb[0].mxu0 %v598
      %v1406 = vpop.f32.mrb[0].mxu0
      %v1407 = vadd.f32 %v374, %v1406
      %v1408 = vpop.f32.mrb[0].mxu0
      %v1409 = vpop.f32.mrb[0].mxu0
      %v1410 = vadd.f32 %v374, %v1409
      %v1411 = vpop.f32.mrb[0].mxu0
      %1412 = vmatprep.mubr.bf16.mxu0 %v857
      %1413 = vmatmul.mubr.bf16.gmra.mrb[0].mxu0 %v600
      %v1414 = vpop.f32.mrb[0].mxu0
      %v1415 = vadd.f32 %v374, %v1414
      %v1416 = vpop.f32.mrb[0].mxu0
      %v1417 = vpop.f32.mrb[0].mxu0
      %v1418 = vadd.f32 %v374, %v1417
      %v1419 = vpop.f32.mrb[0].mxu0
      %1420 = vmatprep.mubr.bf16.mxu0 %v860
      %1421 = vmatmul.mubr.bf16.gmra.mrb[0].mxu0 %v602
      %v1422 = vpop.f32.mrb[0].mxu0
      %v1423 = vadd.f32 %v374, %v1422
      %v1424 = vpop.f32.mrb[0].mxu0
      %v1425 = vpop.f32.mrb[0].mxu0
      %v1426 = vadd.f32 %v374, %v1425
      %v1427 = vpop.f32.mrb[0].mxu0
      %1428 = vmatprep.mubr.bf16.mxu0 %v863
      %1429 = vmatmul.mubr.bf16.gmra.mrb[0].mxu0 %v604
      %v1430 = vpop.f32.mrb[0].mxu0
      %v1431 = vadd.f32 %v374, %v1430
      %v1432 = vpop.f32.mrb[0].mxu0
      %v1433 = vpop.f32.mrb[0].mxu0
      %v1434 = vadd.f32 %v374, %v1433
      %v1435 = vpop.f32.mrb[0].mxu0
      %1436 = vmatprep.mubr.bf16.mxu0 %v866
      %1437 = vmatmul.mubr.bf16.gmra.mrb[0].mxu0 %v606
      %v1438 = vpop.f32.mrb[0].mxu0
      %v1439 = vadd.f32 %v374, %v1438
      %v1440 = vpop.f32.mrb[0].mxu0
      %v1441 = vpop.f32.mrb[0].mxu0
      %v1442 = vadd.f32 %v374, %v1441
      %v1443 = vpop.f32.mrb[0].mxu0
      %1444 = vmatprep.mubr.bf16.mxu0 %v869
      %1445 = vmatmul.mubr.bf16.gmra.mrb[0].mxu0 %v608
      %v1446 = vpop.f32.mrb[0].mxu0
      %v1447 = vadd.f32 %v374, %v1446
      %v1448 = vpop.f32.mrb[0].mxu0
      %v1449 = vpop.f32.mrb[0].mxu0
      %v1450 = vadd.f32 %v374, %v1449
      %v1451 = vpop.f32.mrb[0].mxu0
      %1452 = vmatprep.mubr.bf16.mxu0 %v872
      %1453 = vmatmul.mubr.bf16.gmra.mrb[0].mxu0 %v610
      %v1454 = vpop.f32.mrb[0].mxu0
      %v1455 = vadd.f32 %v374, %v1454
      %v1456 = vpop.f32.mrb[0].mxu0
      %v1457 = vpop.f32.mrb[0].mxu0
      %v1458 = vadd.f32 %v374, %v1457
      %v1459 = vpop.f32.mrb[0].mxu0
      %1460 = vmatprep.mubr.bf16.mxu0 %v875
      %1461 = vmatmul.mubr.bf16.gmra.mrb[0].mxu0 %v612
      %v1462 = vpop.f32.mrb[0].mxu0
      %v1463 = vadd.f32 %v374, %v1462
      %v1464 = vpop.f32.mrb[0].mxu0
      %v1465 = vpop.f32.mrb[0].mxu0
      %v1466 = vadd.f32 %v374, %v1465
      %v1467 = vpop.f32.mrb[0].mxu0
      %1468 = vmatprep.mubr.bf16.mxu0 %v878
      %1469 = vmatmul.mubr.bf16.gmra.mrb[0].mxu0 %v614
      %v1470 = vpop.f32.mrb[0].mxu0
      %v1471 = vadd.f32 %v374, %v1470
      %v1472 = vpop.f32.mrb[0].mxu0
      %v1473 = vpop.f32.mrb[0].mxu0
      %v1474 = vadd.f32 %v374, %v1473
      %v1475 = vpop.f32.mrb[0].mxu0
      %1476 = vmatprep.mubr.bf16.mxu0 %v881
      %1477 = vmatmul.mubr.bf16.gmra.mrb[0].mxu0 %v616
      %v1478 = vpop.f32.mrb[0].mxu0
      %v1479 = vadd.f32 %v374, %v1478
      %v1480 = vpop.f32.mrb[0].mxu0
      %v1481 = vpop.f32.mrb[0].mxu0
      %v1482 = vadd.f32 %v374, %v1481
      %v1483 = vpop.f32.mrb[0].mxu0
      %1484 = vmatprep.mubr.bf16.mxu0 %v884
      %1485 = vmatmul.mubr.bf16.gmra.mrb[0].mxu0 %v618
      %v1486 = vpop.f32.mrb[0].mxu0
      %v1487 = vadd.f32 %v374, %v1486
      %v1488 = vpop.f32.mrb[0].mxu0
      %v1489 = vpop.f32.mrb[0].mxu0
      %v1490 = vadd.f32 %v374, %v1489
      %v1491 = vpop.f32.mrb[0].mxu0
      %1492 = vmatprep.mubr.bf16.mxu0 %v887
      %1493 = vmatmul.mubr.bf16.gmra.mrb[0].mxu0 %v620
      %v1494 = vpop.f32.mrb[0].mxu0
      %v1495 = vadd.f32 %v374, %v1494
      %v1496 = vpop.f32.mrb[0].mxu0
      %v1497 = vpop.f32.mrb[0].mxu0
      %v1498 = vadd.f32 %v374, %v1497
      %v1499 = vpop.f32.mrb[0].mxu0
      %1500 = vmatprep.mubr.bf16.mxu0 %v890
      %1501 = vmatmul.mubr.bf16.gmra.mrb[0].mxu0 %v622
      %v1502 = vpop.f32.mrb[0].mxu0
      %v1503 = vadd.f32 %v374, %v1502
      %v1504 = vpop.f32.mrb[0].mxu0
      %v1505 = vpop.f32.mrb[0].mxu0
      %v1506 = vadd.f32 %v374, %v1505
      %v1507 = vpop.f32.mrb[0].mxu0
      %1508 = vmatprep.mubr.bf16.mxu0 %v893
      %1509 = vmatmul.mubr.bf16.gmra.mrb[0].mxu0 %v624
      %v1510 = vpop.f32.mrb[0].mxu0
      %v1511 = vadd.f32 %v374, %v1510
      %v1512 = vpop.f32.mrb[0].mxu0
      %v1513 = vpop.f32.mrb[0].mxu0
      %v1514 = vadd.f32 %v374, %v1513
      %v1515 = vpop.f32.mrb[0].mxu0
      %1516 = vmatprep.mubr.bf16.mxu0 %v896
      %1517 = vmatmul.mubr.bf16.gmra.mrb[0].mxu0 %v626
      %v1518 = vpop.f32.mrb[0].mxu0
      %v1519 = vadd.f32 %v374, %v1518
      %v1520 = vpop.f32.mrb[0].mxu0
      %v1521 = vpop.f32.mrb[0].mxu0
      %v1522 = vadd.f32 %v374, %v1521
      %v1523 = vpop.f32.mrb[0].mxu0
      %1524 = vmatprep.mubr.bf16.mxu0 %v899
      %1525 = vmatmul.mubr.bf16.gmra.mrb[0].mxu0 %v628
      %v1526 = vpop.f32.mrb[0].mxu0
      %v1527 = vadd.f32 %v374, %v1526
      %v1528 = vpop.f32.mrb[0].mxu0
      %v1529 = vpop.f32.mrb[0].mxu0
      %v1530 = vadd.f32 %v374, %v1529
      %v1531 = vpop.f32.mrb[0].mxu0
      %1532 = vmatprep.mubr.bf16.mxu0 %v902
      %1533 = vmatmul.mubr.bf16.gmra.mrb[0].mxu0 %v630
      %v1534 = vpop.f32.mrb[0].mxu0
      %v1535 = vadd.f32 %v374, %v1534
      %v1536 = vpop.f32.mrb[0].mxu0
      %v1537 = vpop.f32.mrb[0].mxu0
      %v1538 = vadd.f32 %v374, %v1537
      %v1539 = vpop.f32.mrb[0].mxu0
      %1540 = vmatprep.mubr.bf16.mxu0 %v905
      %1541 = vmatmul.mubr.bf16.gmra.mrb[0].mxu0 %v632
      %v1542 = vpop.f32.mrb[0].mxu0
      %v1543 = vadd.f32 %v374, %v1542
      %v1544 = vpop.f32.mrb[0].mxu0
      %v1545 = vpop.f32.mrb[0].mxu0
      %v1546 = vadd.f32 %v374, %v1545
      %v1547 = vpop.f32.mrb[0].mxu0
      %1548 = vdwg.mxu0
      %v1549 = vxor.u32 %v1295, 2147483648
      %v1550 = vxor.u32 %v1298, 2147483648
      %v1551 = vxor.u32 %v1303, 2147483648
      %v1552 = vxor.u32 %v1306, 2147483648
      %v1553 = vxor.u32 %v1311, 2147483648
      %v1554 = vxor.u32 %v1314, 2147483648
      %v1555 = vxor.u32 %v1319, 2147483648
      %v1556 = vxor.u32 %v1322, 2147483648
      %v1557 = vxor.u32 %v1327, 2147483648
      %v1558 = vxor.u32 %v1330, 2147483648
      %v1559 = vxor.u32 %v1335, 2147483648
      %v1560 = vxor.u32 %v1338, 2147483648
      %v1561 = vxor.u32 %v1343, 2147483648
      %v1562 = vxor.u32 %v1346, 2147483648
      %v1563 = vxor.u32 %v1351, 2147483648
      %v1564 = vxor.u32 %v1354, 2147483648
      %v1565 = vxor.u32 %v1359, 2147483648
      %v1566 = vxor.u32 %v1362, 2147483648
      %v1567 = vxor.u32 %v1367, 2147483648
      %v1568 = vxor.u32 %v1370, 2147483648
      %v1569 = vxor.u32 %v1375, 2147483648
      %v1570 = vxor.u32 %v1378, 2147483648
      %v1571 = vxor.u32 %v1383, 2147483648
      %v1572 = vxor.u32 %v1386, 2147483648
      %v1573 = vxor.u32 %v1391, 2147483648
      %v1574 = vxor.u32 %v1394, 2147483648
      %v1575 = vxor.u32 %v1399, 2147483648
      %v1576 = vxor.u32 %v1402, 2147483648
      %v1577 = vxor.u32 %v1407, 2147483648
      %v1578 = vxor.u32 %v1410, 2147483648
      %v1579 = vxor.u32 %v1415, 2147483648
      %v1580 = vxor.u32 %v1418, 2147483648
      %v1581 = vxor.u32 %v1423, 2147483648
      %v1582 = vxor.u32 %v1426, 2147483648
      %v1583 = vxor.u32 %v1431, 2147483648
      %v1584 = vxor.u32 %v1434, 2147483648
      %v1585 = vxor.u32 %v1439, 2147483648
      %v1586 = vxor.u32 %v1442, 2147483648
      %v1587 = vxor.u32 %v1447, 2147483648
      %v1588 = vxor.u32 %v1450, 2147483648
      %v1589 = vxor.u32 %v1455, 2147483648
      %v1590 = vxor.u32 %v1458, 2147483648
      %v1591 = vxor.u32 %v1463, 2147483648
      %v1592 = vxor.u32 %v1466, 2147483648
      %v1593 = vxor.u32 %v1471, 2147483648
      %v1594 = vxor.u32 %v1474, 2147483648
      %v1595 = vxor.u32 %v1479, 2147483648
      %v1596 = vxor.u32 %v1482, 2147483648
      %v1597 = vxor.u32 %v1487, 2147483648
      %v1598 = vxor.u32 %v1490, 2147483648
      %v1599 = vxor.u32 %v1495, 2147483648
      %v1600 = vxor.u32 %v1498, 2147483648
      %v1601 = vxor.u32 %v1503, 2147483648
      %v1602 = vxor.u32 %v1506, 2147483648
      %v1603 = vxor.u32 %v1511, 2147483648
      %v1604 = vxor.u32 %v1514, 2147483648
      %v1605 = vxor.u32 %v1519, 2147483648
      %v1606 = vxor.u32 %v1522, 2147483648
      %v1607 = vxor.u32 %v1527, 2147483648
      %v1608 = vxor.u32 %v1530, 2147483648
      %v1609 = vxor.u32 %v1535, 2147483648
      %v1610 = vxor.u32 %v1538, 2147483648
      %v1611 = vxor.u32 %v1543, 2147483648
      %v1612 = vxor.u32 %v1546, 2147483648
      %v1613 = vmul.f32 %v1549, 1.442695
      %v1614 = vpow.pop %v1613
      %v1615 = vmul.f32 %v1550, 1.442695
      %v1616 = vpow.pop %v1615
      %v1617 = vmul.f32 %v1551, 1.442695
      %v1618 = vpow.pop %v1617
      %v1619 = vmul.f32 %v1552, 1.442695
      %v1620 = vpow.pop %v1619
      %v1621 = vmul.f32 %v1553, 1.442695
      %v1622 = vpow.pop %v1621
      %v1623 = vmul.f32 %v1554, 1.442695
      %v1624 = vpow.pop %v1623
      %v1625 = vmul.f32 %v1555, 1.442695
      %v1626 = vpow.pop %v1625
      %v1627 = vmul.f32 %v1556, 1.442695
      %v1628 = vpow.pop %v1627
      %v1629 = vmul.f32 %v1557, 1.442695
      %v1630 = vpow.pop %v1629
      %v1631 = vmul.f32 %v1558, 1.442695
      %v1632 = vpow.pop %v1631
      %v1633 = vmul.f32 %v1559, 1.442695
      %v1634 = vpow.pop %v1633
      %v1635 = vmul.f32 %v1560, 1.442695
      %v1636 = vpow.pop %v1635
      %v1637 = vmul.f32 %v1561, 1.442695
      %v1638 = vpow.pop %v1637
      %v1639 = vmul.f32 %v1562, 1.442695
      %v1640 = vpow.pop %v1639
      %v1641 = vmul.f32 %v1563, 1.442695
      %v1642 = vpow.pop %v1641
      %v1643 = vmul.f32 %v1564, 1.442695
      %v1644 = vpow.pop %v1643
      %v1645 = vmul.f32 %v1565, 1.442695
      %v1646 = vpow.pop %v1645
      %v1647 = vmul.f32 %v1566, 1.442695
      %v1648 = vpow.pop %v1647
      %v1649 = vmul.f32 %v1567, 1.442695
      %v1650 = vpow.pop %v1649
      %v1651 = vmul.f32 %v1568, 1.442695
      %v1652 = vpow.pop %v1651
      %v1653 = vmul.f32 %v1569, 1.442695
      %v1654 = vpow.pop %v1653
      %v1655 = vmul.f32 %v1570, 1.442695
      %v1656 = vpow.pop %v1655
      %v1657 = vmul.f32 %v1571, 1.442695
      %v1658 = vpow.pop %v1657
      %v1659 = vmul.f32 %v1572, 1.442695
      %v1660 = vpow.pop %v1659
      %v1661 = vmul.f32 %v1573, 1.442695
      %v1662 = vpow.pop %v1661
      %v1663 = vmul.f32 %v1574, 1.442695
      %v1664 = vpow.pop %v1663
      %v1665 = vmul.f32 %v1575, 1.442695
      %v1666 = vpow.pop %v1665
      %v1667 = vmul.f32 %v1576, 1.442695
      %v1668 = vpow.pop %v1667
      %v1669 = vmul.f32 %v1577, 1.442695
      %v1670 = vpow.pop %v1669
      %v1671 = vmul.f32 %v1578, 1.442695
      %v1672 = vpow.pop %v1671
      %v1673 = vmul.f32 %v1579, 1.442695
      %v1674 = vpow.pop %v1673
      %v1675 = vmul.f32 %v1580, 1.442695
      %v1676 = vpow.pop %v1675
      %v1677 = vmul.f32 %v1581, 1.442695
      %v1678 = vpow.pop %v1677
      %v1679 = vmul.f32 %v1582, 1.442695
      %v1680 = vpow.pop %v1679
      %v1681 = vmul.f32 %v1583, 1.442695
      %v1682 = vpow.pop %v1681
      %v1683 = vmul.f32 %v1584, 1.442695
      %v1684 = vpow.pop %v1683
      %v1685 = vmul.f32 %v1585, 1.442695
      %v1686 = vpow.pop %v1685
      %v1687 = vmul.f32 %v1586, 1.442695
      %v1688 = vpow.pop %v1687
      %v1689 = vmul.f32 %v1587, 1.442695
      %v1690 = vpow.pop %v1689
      %v1691 = vmul.f32 %v1588, 1.442695
      %v1692 = vpow.pop %v1691
      %v1693 = vmul.f32 %v1589, 1.442695
      %v1694 = vpow.pop %v1693
      %v1695 = vmul.f32 %v1590, 1.442695
      %v1696 = vpow.pop %v1695
      %v1697 = vmul.f32 %v1591, 1.442695
      %v1698 = vpow.pop %v1697
      %v1699 = vmul.f32 %v1592, 1.442695
      %v1700 = vpow.pop %v1699
      %v1701 = vmul.f32 %v1593, 1.442695
      %v1702 = vpow.pop %v1701
      %v1703 = vmul.f32 %v1594, 1.442695
      %v1704 = vpow.pop %v1703
      %v1705 = vmul.f32 %v1595, 1.442695
      %v1706 = vpow.pop %v1705
      %v1707 = vmul.f32 %v1596, 1.442695
      %v1708 = vpow.pop %v1707
      %v1709 = vmul.f32 %v1597, 1.442695
      %v1710 = vpow.pop %v1709
      %v1711 = vmul.f32 %v1598, 1.442695
      %v1712 = vpow.pop %v1711
      %v1713 = vmul.f32 %v1599, 1.442695
      %v1714 = vpow.pop %v1713
      %v1715 = vmul.f32 %v1600, 1.442695
      %v1716 = vpow.pop %v1715
      %v1717 = vmul.f32 %v1601, 1.442695
      %v1718 = vpow.pop %v1717
      %v1719 = vmul.f32 %v1602, 1.442695
      %v1720 = vpow.pop %v1719
      %v1721 = vmul.f32 %v1603, 1.442695
      %v1722 = vpow.pop %v1721
      %v1723 = vmul.f32 %v1604, 1.442695
      %v1724 = vpow.pop %v1723
      %v1725 = vmul.f32 %v1605, 1.442695
      %v1726 = vpow.pop %v1725
      %v1727 = vmul.f32 %v1606, 1.442695
      %v1728 = vpow.pop %v1727
      %v1729 = vmul.f32 %v1607, 1.442695
      %v1730 = vpow.pop %v1729
      %v1731 = vmul.f32 %v1608, 1.442695
      %v1732 = vpow.pop %v1731
      %v1733 = vmul.f32 %v1609, 1.442695
      %v1734 = vpow.pop %v1733
      %v1735 = vmul.f32 %v1610, 1.442695
      %v1736 = vpow.pop %v1735
      %v1737 = vmul.f32 %v1611, 1.442695
      %v1738 = vpow.pop %v1737
      %v1739 = vmul.f32 %v1612, 1.442695
      %v1740 = vpow.pop %v1739
      %v1741 = vadd.f32 %v1614, 1.0
      %v1742 = vadd.f32 %v1616, 1.0
      %v1743 = vadd.f32 %v1618, 1.0
      %v1744 = vadd.f32 %v1620, 1.0
      %v1745 = vadd.f32 %v1622, 1.0
      %v1746 = vadd.f32 %v1624, 1.0
      %v1747 = vadd.f32 %v1626, 1.0
      %v1748 = vadd.f32 %v1628, 1.0
      %v1749 = vadd.f32 %v1630, 1.0
      %v1750 = vadd.f32 %v1632, 1.0
      %v1751 = vadd.f32 %v1634, 1.0
      %v1752 = vadd.f32 %v1636, 1.0
      %v1753 = vadd.f32 %v1638, 1.0
      %v1754 = vadd.f32 %v1640, 1.0
      %v1755 = vadd.f32 %v1642, 1.0
      %v1756 = vadd.f32 %v1644, 1.0
      %v1757 = vadd.f32 %v1646, 1.0
      %v1758 = vadd.f32 %v1648, 1.0
      %v1759 = vadd.f32 %v1650, 1.0
      %v1760 = vadd.f32 %v1652, 1.0
      %v1761 = vadd.f32 %v1654, 1.0
      %v1762 = vadd.f32 %v1656, 1.0
      %v1763 = vadd.f32 %v1658, 1.0
      %v1764 = vadd.f32 %v1660, 1.0
      %v1765 = vadd.f32 %v1662, 1.0
      %v1766 = vadd.f32 %v1664, 1.0
      %v1767 = vadd.f32 %v1666, 1.0
      %v1768 = vadd.f32 %v1668, 1.0
      %v1769 = vadd.f32 %v1670, 1.0
      %v1770 = vadd.f32 %v1672, 1.0
      %v1771 = vadd.f32 %v1674, 1.0
      %v1772 = vadd.f32 %v1676, 1.0
      %v1773 = vadd.f32 %v1678, 1.0
      %v1774 = vadd.f32 %v1680, 1.0
      %v1775 = vadd.f32 %v1682, 1.0
      %v1776 = vadd.f32 %v1684, 1.0
      %v1777 = vadd.f32 %v1686, 1.0
      %v1778 = vadd.f32 %v1688, 1.0
      %v1779 = vadd.f32 %v1690, 1.0
      %v1780 = vadd.f32 %v1692, 1.0
      %v1781 = vadd.f32 %v1694, 1.0
      %v1782 = vadd.f32 %v1696, 1.0
      %v1783 = vadd.f32 %v1698, 1.0
      %v1784 = vadd.f32 %v1700, 1.0
      %v1785 = vadd.f32 %v1702, 1.0
      %v1786 = vadd.f32 %v1704, 1.0
      %v1787 = vadd.f32 %v1706, 1.0
      %v1788 = vadd.f32 %v1708, 1.0
      %v1789 = vadd.f32 %v1710, 1.0
      %v1790 = vadd.f32 %v1712, 1.0
      %v1791 = vadd.f32 %v1714, 1.0
      %v1792 = vadd.f32 %v1716, 1.0
      %v1793 = vadd.f32 %v1718, 1.0
      %v1794 = vadd.f32 %v1720, 1.0
      %v1795 = vadd.f32 %v1722, 1.0
      %v1796 = vadd.f32 %v1724, 1.0
      %v1797 = vadd.f32 %v1726, 1.0
      %v1798 = vadd.f32 %v1728, 1.0
      %v1799 = vadd.f32 %v1730, 1.0
      %v1800 = vadd.f32 %v1732, 1.0
      %v1801 = vadd.f32 %v1734, 1.0
      %v1802 = vadd.f32 %v1736, 1.0
      %v1803 = vadd.f32 %v1738, 1.0
      %v1804 = vadd.f32 %v1740, 1.0
      %v1805 = vrcp.pop %v1741
      %v1806 = vmul.f32 1.0, %v1805
      %v1807 = vrcp.pop %v1742
      %v1808 = vmul.f32 1.0, %v1807
      %v1809 = vrcp.pop %v1743
      %v1810 = vmul.f32 1.0, %v1809
      %v1811 = vrcp.pop %v1744
      %v1812 = vmul.f32 1.0, %v1811
      %v1813 = vrcp.pop %v1745
      %v1814 = vmul.f32 1.0, %v1813
      %v1815 = vrcp.pop %v1746
      %v1816 = vmul.f32 1.0, %v1815
      %v1817 = vrcp.pop %v1747
      %v1818 = vmul.f32 1.0, %v1817
      %v1819 = vrcp.pop %v1748
      %v1820 = vmul.f32 1.0, %v1819
      %v1821 = vrcp.pop %v1749
      %v1822 = vmul.f32 1.0, %v1821
      %v1823 = vrcp.pop %v1750
      %v1824 = vmul.f32 1.0, %v1823
      %v1825 = vrcp.pop %v1751
      %v1826 = vmul.f32 1.0, %v1825
      %v1827 = vrcp.pop %v1752
      %v1828 = vmul.f32 1.0, %v1827
      %v1829 = vrcp.pop %v1753
      %v1830 = vmul.f32 1.0, %v1829
      %v1831 = vrcp.pop %v1754
      %v1832 = vmul.f32 1.0, %v1831
      %v1833 = vrcp.pop %v1755
      %v1834 = vmul.f32 1.0, %v1833
      %v1835 = vrcp.pop %v1756
      %v1836 = vmul.f32 1.0, %v1835
      %v1837 = vrcp.pop %v1757
      %v1838 = vmul.f32 1.0, %v1837
      %v1839 = vrcp.pop %v1758
      %v1840 = vmul.f32 1.0, %v1839
      %v1841 = vrcp.pop %v1759
      %v1842 = vmul.f32 1.0, %v1841
      %v1843 = vrcp.pop %v1760
      %v1844 = vmul.f32 1.0, %v1843
      %v1845 = vrcp.pop %v1761
      %v1846 = vmul.f32 1.0, %v1845
      %v1847 = vrcp.pop %v1762
      %v1848 = vmul.f32 1.0, %v1847
      %v1849 = vrcp.pop %v1763
      %v1850 = vmul.f32 1.0, %v1849
      %v1851 = vrcp.pop %v1764
      %v1852 = vmul.f32 1.0, %v1851
      %v1853 = vrcp.pop %v1765
      %v1854 = vmul.f32 1.0, %v1853
      %v1855 = vrcp.pop %v1766
      %v1856 = vmul.f32 1.0, %v1855
      %v1857 = vrcp.pop %v1767
      %v1858 = vmul.f32 1.0, %v1857
      %v1859 = vrcp.pop %v1768
      %v1860 = vmul.f32 1.0, %v1859
      %v1861 = vrcp.pop %v1769
      %v1862 = vmul.f32 1.0, %v1861
      %v1863 = vrcp.pop %v1770
      %v1864 = vmul.f32 1.0, %v1863
      %v1865 = vrcp.pop %v1771
      %v1866 = vmul.f32 1.0, %v1865
      %v1867 = vrcp.pop %v1772
      %v1868 = vmul.f32 1.0, %v1867
      %v1869 = vrcp.pop %v1773
      %v1870 = vmul.f32 1.0, %v1869
      %v1871 = vrcp.pop %v1774
      %v1872 = vmul.f32 1.0, %v1871
      %v1873 = vrcp.pop %v1775
      %v1874 = vmul.f32 1.0, %v1873
      %v1875 = vrcp.pop %v1776
      %v1876 = vmul.f32 1.0, %v1875
      %v1877 = vrcp.pop %v1777
      %v1878 = vmul.f32 1.0, %v1877
      %v1879 = vrcp.pop %v1778
      %v1880 = vmul.f32 1.0, %v1879
      %v1881 = vrcp.pop %v1779
      %v1882 = vmul.f32 1.0, %v1881
      %v1883 = vrcp.pop %v1780
      %v1884 = vmul.f32 1.0, %v1883
      %v1885 = vrcp.pop %v1781
      %v1886 = vmul.f32 1.0, %v1885
      %v1887 = vrcp.pop %v1782
      %v1888 = vmul.f32 1.0, %v1887
      %v1889 = vrcp.pop %v1783
      %v1890 = vmul.f32 1.0, %v1889
      %v1891 = vrcp.pop %v1784
      %v1892 = vmul.f32 1.0, %v1891
      %v1893 = vrcp.pop %v1785
      %v1894 = vmul.f32 1.0, %v1893
      %v1895 = vrcp.pop %v1786
      %v1896 = vmul.f32 1.0, %v1895
      %v1897 = vrcp.pop %v1787
      %v1898 = vmul.f32 1.0, %v1897
      %v1899 = vrcp.pop %v1788
      %v1900 = vmul.f32 1.0, %v1899
      %v1901 = vrcp.pop %v1789
      %v1902 = vmul.f32 1.0, %v1901
      %v1903 = vrcp.pop %v1790
      %v1904 = vmul.f32 1.0, %v1903
      %v1905 = vrcp.pop %v1791
      %v1906 = vmul.f32 1.0, %v1905
      %v1907 = vrcp.pop %v1792
      %v1908 = vmul.f32 1.0, %v1907
      %v1909 = vrcp.pop %v1793
      %v1910 = vmul.f32 1.0, %v1909
      %v1911 = vrcp.pop %v1794
      %v1912 = vmul.f32 1.0, %v1911
      %v1913 = vrcp.pop %v1795
      %v1914 = vmul.f32 1.0, %v1913
      %v1915 = vrcp.pop %v1796
      %v1916 = vmul.f32 1.0, %v1915
      %v1917 = vrcp.pop %v1797
      %v1918 = vmul.f32 1.0, %v1917
      %v1919 = vrcp.pop %v1798
      %v1920 = vmul.f32 1.0, %v1919
      %v1921 = vrcp.pop %v1799
      %v1922 = vmul.f32 1.0, %v1921
      %v1923 = vrcp.pop %v1800
      %v1924 = vmul.f32 1.0, %v1923
      %v1925 = vrcp.pop %v1801
      %v1926 = vmul.f32 1.0, %v1925
      %v1927 = vrcp.pop %v1802
      %v1928 = vmul.f32 1.0, %v1927
      %v1929 = vrcp.pop %v1803
      %v1930 = vmul.f32 1.0, %v1929
      %v1931 = vrcp.pop %v1804
      %v1932 = vmul.f32 1.0, %v1931
      %v1933 = vmul.f32 %v1295, %v1806
      %v1934 = vmul.f32 %v1298, %v1808
      %v1935 = vmul.f32 %v1303, %v1810
      %v1936 = vmul.f32 %v1306, %v1812
      %v1937 = vmul.f32 %v1311, %v1814
      %v1938 = vmul.f32 %v1314, %v1816
      %v1939 = vmul.f32 %v1319, %v1818
      %v1940 = vmul.f32 %v1322, %v1820
      %v1941 = vmul.f32 %v1327, %v1822
      %v1942 = vmul.f32 %v1330, %v1824
      %v1943 = vmul.f32 %v1335, %v1826
      %v1944 = vmul.f32 %v1338, %v1828
      %v1945 = vmul.f32 %v1343, %v1830
      %v1946 = vmul.f32 %v1346, %v1832
      %v1947 = vmul.f32 %v1351, %v1834
      %v1948 = vmul.f32 %v1354, %v1836
      %v1949 = vmul.f32 %v1359, %v1838
      %v1950 = vmul.f32 %v1362, %v1840
      %v1951 = vmul.f32 %v1367, %v1842
      %v1952 = vmul.f32 %v1370, %v1844
      %v1953 = vmul.f32 %v1375, %v1846
      %v1954 = vmul.f32 %v1378, %v1848
      %v1955 = vmul.f32 %v1383, %v1850
      %v1956 = vmul.f32 %v1386, %v1852
      %v1957 = vmul.f32 %v1391, %v1854
      %v1958 = vmul.f32 %v1394, %v1856
      %v1959 = vmul.f32 %v1399, %v1858
      %v1960 = vmul.f32 %v1402, %v1860
      %v1961 = vmul.f32 %v1407, %v1862
      %v1962 = vmul.f32 %v1410, %v1864
      %v1963 = vmul.f32 %v1415, %v1866
      %v1964 = vmul.f32 %v1418, %v1868
      %v1965 = vmul.f32 %v1423, %v1870
      %v1966 = vmul.f32 %v1426, %v1872
      %v1967 = vmul.f32 %v1431, %v1874
      %v1968 = vmul.f32 %v1434, %v1876
      %v1969 = vmul.f32 %v1439, %v1878
      %v1970 = vmul.f32 %v1442, %v1880
      %v1971 = vmul.f32 %v1447, %v1882
      %v1972 = vmul.f32 %v1450, %v1884
      %v1973 = vmul.f32 %v1455, %v1886
      %v1974 = vmul.f32 %v1458, %v1888
      %v1975 = vmul.f32 %v1463, %v1890
      %v1976 = vmul.f32 %v1466, %v1892
      %v1977 = vmul.f32 %v1471, %v1894
      %v1978 = vmul.f32 %v1474, %v1896
      %v1979 = vmul.f32 %v1479, %v1898
      %v1980 = vmul.f32 %v1482, %v1900
      %v1981 = vmul.f32 %v1487, %v1902
      %v1982 = vmul.f32 %v1490, %v1904
      %v1983 = vmul.f32 %v1495, %v1906
      %v1984 = vmul.f32 %v1498, %v1908
      %v1985 = vmul.f32 %v1503, %v1910
      %v1986 = vmul.f32 %v1506, %v1912
      %v1987 = vmul.f32 %v1511, %v1914
      %v1988 = vmul.f32 %v1514, %v1916
      %v1989 = vmul.f32 %v1519, %v1918
      %v1990 = vmul.f32 %v1522, %v1920
      %v1991 = vmul.f32 %v1527, %v1922
      %v1992 = vmul.f32 %v1530, %v1924
      %v1993 = vmul.f32 %v1535, %v1926
      %v1994 = vmul.f32 %v1538, %v1928
      %v1995 = vmul.f32 %v1543, %v1930
      %v1996 = vmul.f32 %v1546, %v1932
      %v1997 = vxor.u32 %v1933, 2147483648
      %v1998 = vxor.u32 %v1934, 2147483648
      %v1999 = vxor.u32 %v1935, 2147483648
      %v2000 = vxor.u32 %v1936, 2147483648
      %v2001 = vxor.u32 %v1937, 2147483648
      %v2002 = vxor.u32 %v1938, 2147483648
      %v2003 = vxor.u32 %v1939, 2147483648
      %v2004 = vxor.u32 %v1940, 2147483648
      %v2005 = vxor.u32 %v1941, 2147483648
      %v2006 = vxor.u32 %v1942, 2147483648
      %v2007 = vxor.u32 %v1943, 2147483648
      %v2008 = vxor.u32 %v1944, 2147483648
      %v2009 = vxor.u32 %v1945, 2147483648
      %v2010 = vxor.u32 %v1946, 2147483648
      %v2011 = vxor.u32 %v1947, 2147483648
      %v2012 = vxor.u32 %v1948, 2147483648
      %v2013 = vxor.u32 %v1949, 2147483648
      %v2014 = vxor.u32 %v1950, 2147483648
      %v2015 = vxor.u32 %v1951, 2147483648
      %v2016 = vxor.u32 %v1952, 2147483648
      %v2017 = vxor.u32 %v1953, 2147483648
      %v2018 = vxor.u32 %v1954, 2147483648
      %v2019 = vxor.u32 %v1955, 2147483648
      %v2020 = vxor.u32 %v1956, 2147483648
      %v2021 = vxor.u32 %v1957, 2147483648
      %v2022 = vxor.u32 %v1958, 2147483648
      %v2023 = vxor.u32 %v1959, 2147483648
      %v2024 = vxor.u32 %v1960, 2147483648
      %v2025 = vxor.u32 %v1961, 2147483648
      %v2026 = vxor.u32 %v1962, 2147483648
      %v2027 = vxor.u32 %v1963, 2147483648
      %v2028 = vxor.u32 %v1964, 2147483648
      %v2029 = vxor.u32 %v1965, 2147483648
      %v2030 = vxor.u32 %v1966, 2147483648
      %v2031 = vxor.u32 %v1967, 2147483648
      %v2032 = vxor.u32 %v1968, 2147483648
      %v2033 = vxor.u32 %v1969, 2147483648
      %v2034 = vxor.u32 %v1970, 2147483648
      %v2035 = vxor.u32 %v1971, 2147483648
      %v2036 = vxor.u32 %v1972, 2147483648
      %v2037 = vxor.u32 %v1973, 2147483648
      %v2038 = vxor.u32 %v1974, 2147483648
      %v2039 = vxor.u32 %v1975, 2147483648
      %v2040 = vxor.u32 %v1976, 2147483648
      %v2041 = vxor.u32 %v1977, 2147483648
      %v2042 = vxor.u32 %v1978, 2147483648
      %v2043 = vxor.u32 %v1979, 2147483648
      %v2044 = vxor.u32 %v1980, 2147483648
      %v2045 = vxor.u32 %v1981, 2147483648
      %v2046 = vxor.u32 %v1982, 2147483648
      %v2047 = vxor.u32 %v1983, 2147483648
      %v2048 = vxor.u32 %v1984, 2147483648
      %v2049 = vxor.u32 %v1985, 2147483648
      %v2050 = vxor.u32 %v1986, 2147483648
      %v2051 = vxor.u32 %v1987, 2147483648
      %v2052 = vxor.u32 %v1988, 2147483648
      %v2053 = vxor.u32 %v1989, 2147483648
      %v2054 = vxor.u32 %v1990, 2147483648
      %v2055 = vxor.u32 %v1991, 2147483648
      %v2056 = vxor.u32 %v1992, 2147483648
      %v2057 = vxor.u32 %v1993, 2147483648
      %v2058 = vxor.u32 %v1994, 2147483648
      %v2059 = vxor.u32 %v1995, 2147483648
      %v2060 = vxor.u32 %v1996, 2147483648
      %v2061 = vmul.f32 %v1997, 1.442695
      %v2062 = vpow.pop %v2061
      %v2063 = vmul.f32 %v1998, 1.442695
      %v2064 = vpow.pop %v2063
      %v2065 = vmul.f32 %v1999, 1.442695
      %v2066 = vpow.pop %v2065
      %v2067 = vmul.f32 %v2000, 1.442695
      %v2068 = vpow.pop %v2067
      %v2069 = vmul.f32 %v2001, 1.442695
      %v2070 = vpow.pop %v2069
      %v2071 = vmul.f32 %v2002, 1.442695
      %v2072 = vpow.pop %v2071
      %v2073 = vmul.f32 %v2003, 1.442695
      %v2074 = vpow.pop %v2073
      %v2075 = vmul.f32 %v2004, 1.442695
      %v2076 = vpow.pop %v2075
      %v2077 = vmul.f32 %v2005, 1.442695
      %v2078 = vpow.pop %v2077
      %v2079 = vmul.f32 %v2006, 1.442695
      %v2080 = vpow.pop %v2079
      %v2081 = vmul.f32 %v2007, 1.442695
      %v2082 = vpow.pop %v2081
      %v2083 = vmul.f32 %v2008, 1.442695
      %v2084 = vpow.pop %v2083
      %v2085 = vmul.f32 %v2009, 1.442695
      %v2086 = vpow.pop %v2085
      %v2087 = vmul.f32 %v2010, 1.442695
      %v2088 = vpow.pop %v2087
      %v2089 = vmul.f32 %v2011, 1.442695
      %v2090 = vpow.pop %v2089
      %v2091 = vmul.f32 %v2012, 1.442695
      %v2092 = vpow.pop %v2091
      %v2093 = vmul.f32 %v2013, 1.442695
      %v2094 = vpow.pop %v2093
      %v2095 = vmul.f32 %v2014, 1.442695
      %v2096 = vpow.pop %v2095
      %v2097 = vmul.f32 %v2015, 1.442695
      %v2098 = vpow.pop %v2097
      %v2099 = vmul.f32 %v2016, 1.442695
      %v2100 = vpow.pop %v2099
      %v2101 = vmul.f32 %v2017, 1.442695
      %v2102 = vpow.pop %v2101
      %v2103 = vmul.f32 %v2018, 1.442695
      %v2104 = vpow.pop %v2103
      %v2105 = vmul.f32 %v2019, 1.442695
      %v2106 = vpow.pop %v2105
      %v2107 = vmul.f32 %v2020, 1.442695
      %v2108 = vpow.pop %v2107
      %v2109 = vmul.f32 %v2021, 1.442695
      %v2110 = vpow.pop %v2109
      %v2111 = vmul.f32 %v2022, 1.442695
      %v2112 = vpow.pop %v2111
      %v2113 = vmul.f32 %v2023, 1.442695
      %v2114 = vpow.pop %v2113
      %v2115 = vmul.f32 %v2024, 1.442695
      %v2116 = vpow.pop %v2115
      %v2117 = vmul.f32 %v2025, 1.442695
      %v2118 = vpow.pop %v2117
      %v2119 = vmul.f32 %v2026, 1.442695
      %v2120 = vpow.pop %v2119
      %v2121 = vmul.f32 %v2027, 1.442695
      %v2122 = vpow.pop %v2121
      %v2123 = vmul.f32 %v2028, 1.442695
      %v2124 = vpow.pop %v2123
      %v2125 = vmul.f32 %v2029, 1.442695
      %v2126 = vpow.pop %v2125
      %v2127 = vmul.f32 %v2030, 1.442695
      %v2128 = vpow.pop %v2127
      %v2129 = vmul.f32 %v2031, 1.442695
      %v2130 = vpow.pop %v2129
      %v2131 = vmul.f32 %v2032, 1.442695
      %v2132 = vpow.pop %v2131
      %v2133 = vmul.f32 %v2033, 1.442695
      %v2134 = vpow.pop %v2133
      %v2135 = vmul.f32 %v2034, 1.442695
      %v2136 = vpow.pop %v2135
      %v2137 = vmul.f32 %v2035, 1.442695
      %v2138 = vpow.pop %v2137
      %v2139 = vmul.f32 %v2036, 1.442695
      %v2140 = vpow.pop %v2139
      %v2141 = vmul.f32 %v2037, 1.442695
      %v2142 = vpow.pop %v2141
      %v2143 = vmul.f32 %v2038, 1.442695
      %v2144 = vpow.pop %v2143
      %v2145 = vmul.f32 %v2039, 1.442695
      %v2146 = vpow.pop %v2145
      %v2147 = vmul.f32 %v2040, 1.442695
      %v2148 = vpow.pop %v2147
      %v2149 = vmul.f32 %v2041, 1.442695
      %v2150 = vpow.pop %v2149
      %v2151 = vmul.f32 %v2042, 1.442695
      %v2152 = vpow.pop %v2151
      %v2153 = vmul.f32 %v2043, 1.442695
      %v2154 = vpow.pop %v2153
      %v2155 = vmul.f32 %v2044, 1.442695
      %v2156 = vpow.pop %v2155
      %v2157 = vmul.f32 %v2045, 1.442695
      %v2158 = vpow.pop %v2157
      %v2159 = vmul.f32 %v2046, 1.442695
      %v2160 = vpow.pop %v2159
      %v2161 = vmul.f32 %v2047, 1.442695
      %v2162 = vpow.pop %v2161
      %v2163 = vmul.f32 %v2048, 1.442695
      %v2164 = vpow.pop %v2163
      %v2165 = vmul.f32 %v2049, 1.442695
      %v2166 = vpow.pop %v2165
      %v2167 = vmul.f32 %v2050, 1.442695
      %v2168 = vpow.pop %v2167
      %v2169 = vmul.f32 %v2051, 1.442695
      %v2170 = vpow.pop %v2169
      %v2171 = vmul.f32 %v2052, 1.442695
      %v2172 = vpow.pop %v2171
      %v2173 = vmul.f32 %v2053, 1.442695
      %v2174 = vpow.pop %v2173
      %v2175 = vmul.f32 %v2054, 1.442695
      %v2176 = vpow.pop %v2175
      %v2177 = vmul.f32 %v2055, 1.442695
      %v2178 = vpow.pop %v2177
      %v2179 = vmul.f32 %v2056, 1.442695
      %v2180 = vpow.pop %v2179
      %v2181 = vmul.f32 %v2057, 1.442695
      %v2182 = vpow.pop %v2181
      %v2183 = vmul.f32 %v2058, 1.442695
      %v2184 = vpow.pop %v2183
      %v2185 = vmul.f32 %v2059, 1.442695
      %v2186 = vpow.pop %v2185
      %v2187 = vmul.f32 %v2060, 1.442695
      %v2188 = vpow.pop %v2187
      %v2189 = vadd.f32 %v2062, 1.0
      %v2190 = vadd.f32 %v2064, 1.0
      %v2191 = vadd.f32 %v2066, 1.0
      %v2192 = vadd.f32 %v2068, 1.0
      %v2193 = vadd.f32 %v2070, 1.0
      %v2194 = vadd.f32 %v2072, 1.0
      %v2195 = vadd.f32 %v2074, 1.0
      %v2196 = vadd.f32 %v2076, 1.0
      %v2197 = vadd.f32 %v2078, 1.0
      %v2198 = vadd.f32 %v2080, 1.0
      %v2199 = vadd.f32 %v2082, 1.0
      %v2200 = vadd.f32 %v2084, 1.0
      %v2201 = vadd.f32 %v2086, 1.0
      %v2202 = vadd.f32 %v2088, 1.0
      %v2203 = vadd.f32 %v2090, 1.0
      %v2204 = vadd.f32 %v2092, 1.0
      %v2205 = vadd.f32 %v2094, 1.0
      %v2206 = vadd.f32 %v2096, 1.0
      %v2207 = vadd.f32 %v2098, 1.0
      %v2208 = vadd.f32 %v2100, 1.0
      %v2209 = vadd.f32 %v2102, 1.0
      %v2210 = vadd.f32 %v2104, 1.0
      %v2211 = vadd.f32 %v2106, 1.0
      %v2212 = vadd.f32 %v2108, 1.0
      %v2213 = vadd.f32 %v2110, 1.0
      %v2214 = vadd.f32 %v2112, 1.0
      %v2215 = vadd.f32 %v2114, 1.0
      %v2216 = vadd.f32 %v2116, 1.0
      %v2217 = vadd.f32 %v2118, 1.0
      %v2218 = vadd.f32 %v2120, 1.0
      %v2219 = vadd.f32 %v2122, 1.0
      %v2220 = vadd.f32 %v2124, 1.0
      %v2221 = vadd.f32 %v2126, 1.0
      %v2222 = vadd.f32 %v2128, 1.0
      %v2223 = vadd.f32 %v2130, 1.0
      %v2224 = vadd.f32 %v2132, 1.0
      %v2225 = vadd.f32 %v2134, 1.0
      %v2226 = vadd.f32 %v2136, 1.0
      %v2227 = vadd.f32 %v2138, 1.0
      %v2228 = vadd.f32 %v2140, 1.0
      %v2229 = vadd.f32 %v2142, 1.0
      %v2230 = vadd.f32 %v2144, 1.0
      %v2231 = vadd.f32 %v2146, 1.0
      %v2232 = vadd.f32 %v2148, 1.0
      %v2233 = vadd.f32 %v2150, 1.0
      %v2234 = vadd.f32 %v2152, 1.0
      %v2235 = vadd.f32 %v2154, 1.0
      %v2236 = vadd.f32 %v2156, 1.0
      %v2237 = vadd.f32 %v2158, 1.0
      %v2238 = vadd.f32 %v2160, 1.0
      %v2239 = vadd.f32 %v2162, 1.0
      %v2240 = vadd.f32 %v2164, 1.0
      %v2241 = vadd.f32 %v2166, 1.0
      %v2242 = vadd.f32 %v2168, 1.0
      %v2243 = vadd.f32 %v2170, 1.0
      %v2244 = vadd.f32 %v2172, 1.0
      %v2245 = vadd.f32 %v2174, 1.0
      %v2246 = vadd.f32 %v2176, 1.0
      %v2247 = vadd.f32 %v2178, 1.0
      %v2248 = vadd.f32 %v2180, 1.0
      %v2249 = vadd.f32 %v2182, 1.0
      %v2250 = vadd.f32 %v2184, 1.0
      %v2251 = vadd.f32 %v2186, 1.0
      %v2252 = vadd.f32 %v2188, 1.0
      %v2253 = vrcp.pop %v2189
      %v2254 = vmul.f32 1.0, %v2253
      %v2255 = vrcp.pop %v2190
      %v2256 = vmul.f32 1.0, %v2255
      %v2257 = vrcp.pop %v2191
      %v2258 = vmul.f32 1.0, %v2257
      %v2259 = vrcp.pop %v2192
      %v2260 = vmul.f32 1.0, %v2259
      %v2261 = vrcp.pop %v2193
      %v2262 = vmul.f32 1.0, %v2261
      %v2263 = vrcp.pop %v2194
      %v2264 = vmul.f32 1.0, %v2263
      %v2265 = vrcp.pop %v2195
      %v2266 = vmul.f32 1.0, %v2265
      %v2267 = vrcp.pop %v2196
      %v2268 = vmul.f32 1.0, %v2267
      %v2269 = vrcp.pop %v2197
      %v2270 = vmul.f32 1.0, %v2269
      %v2271 = vrcp.pop %v2198
      %v2272 = vmul.f32 1.0, %v2271
      %v2273 = vrcp.pop %v2199
      %v2274 = vmul.f32 1.0, %v2273
      %v2275 = vrcp.pop %v2200
      %v2276 = vmul.f32 1.0, %v2275
      %v2277 = vrcp.pop %v2201
      %v2278 = vmul.f32 1.0, %v2277
      %v2279 = vrcp.pop %v2202
      %v2280 = vmul.f32 1.0, %v2279
      %v2281 = vrcp.pop %v2203
      %v2282 = vmul.f32 1.0, %v2281
      %v2283 = vrcp.pop %v2204
      %v2284 = vmul.f32 1.0, %v2283
      %v2285 = vrcp.pop %v2205
      %v2286 = vmul.f32 1.0, %v2285
      %v2287 = vrcp.pop %v2206
      %v2288 = vmul.f32 1.0, %v2287
      %v2289 = vrcp.pop %v2207
      %v2290 = vmul.f32 1.0, %v2289
      %v2291 = vrcp.pop %v2208
      %v2292 = vmul.f32 1.0, %v2291
      %v2293 = vrcp.pop %v2209
      %v2294 = vmul.f32 1.0, %v2293
      %v2295 = vrcp.pop %v2210
      %v2296 = vmul.f32 1.0, %v2295
      %v2297 = vrcp.pop %v2211
      %v2298 = vmul.f32 1.0, %v2297
      %v2299 = vrcp.pop %v2212
      %v2300 = vmul.f32 1.0, %v2299
      %v2301 = vrcp.pop %v2213
      %v2302 = vmul.f32 1.0, %v2301
      %v2303 = vrcp.pop %v2214
      %v2304 = vmul.f32 1.0, %v2303
      %v2305 = vrcp.pop %v2215
      %v2306 = vmul.f32 1.0, %v2305
      %v2307 = vrcp.pop %v2216
      %v2308 = vmul.f32 1.0, %v2307
      %v2309 = vrcp.pop %v2217
      %v2310 = vmul.f32 1.0, %v2309
      %v2311 = vrcp.pop %v2218
      %v2312 = vmul.f32 1.0, %v2311
      %v2313 = vrcp.pop %v2219
      %v2314 = vmul.f32 1.0, %v2313
      %v2315 = vrcp.pop %v2220
      %v2316 = vmul.f32 1.0, %v2315
      %v2317 = vrcp.pop %v2221
      %v2318 = vmul.f32 1.0, %v2317
      %v2319 = vrcp.pop %v2222
      %v2320 = vmul.f32 1.0, %v2319
      %v2321 = vrcp.pop %v2223
      %v2322 = vmul.f32 1.0, %v2321
      %v2323 = vrcp.pop %v2224
      %v2324 = vmul.f32 1.0, %v2323
      %v2325 = vrcp.pop %v2225
      %v2326 = vmul.f32 1.0, %v2325
      %v2327 = vrcp.pop %v2226
      %v2328 = vmul.f32 1.0, %v2327
      %v2329 = vrcp.pop %v2227
      %v2330 = vmul.f32 1.0, %v2329
      %v2331 = vrcp.pop %v2228
      %v2332 = vmul.f32 1.0, %v2331
      %v2333 = vrcp.pop %v2229
      %v2334 = vmul.f32 1.0, %v2333
      %v2335 = vrcp.pop %v2230
      %v2336 = vmul.f32 1.0, %v2335
      %v2337 = vrcp.pop %v2231
      %v2338 = vmul.f32 1.0, %v2337
      %v2339 = vrcp.pop %v2232
      %v2340 = vmul.f32 1.0, %v2339
      %v2341 = vrcp.pop %v2233
      %v2342 = vmul.f32 1.0, %v2341
      %v2343 = vrcp.pop %v2234
      %v2344 = vmul.f32 1.0, %v2343
      %v2345 = vrcp.pop %v2235
      %v2346 = vmul.f32 1.0, %v2345
      %v2347 = vrcp.pop %v2236
      %v2348 = vmul.f32 1.0, %v2347
      %v2349 = vrcp.pop %v2237
      %v2350 = vmul.f32 1.0, %v2349
      %v2351 = vrcp.pop %v2238
      %v2352 = vmul.f32 1.0, %v2351
      %v2353 = vrcp.pop %v2239
      %v2354 = vmul.f32 1.0, %v2353
      %v2355 = vrcp.pop %v2240
      %v2356 = vmul.f32 1.0, %v2355
      %v2357 = vrcp.pop %v2241
      %v2358 = vmul.f32 1.0, %v2357
      %v2359 = vrcp.pop %v2242
      %v2360 = vmul.f32 1.0, %v2359
      %v2361 = vrcp.pop %v2243
      %v2362 = vmul.f32 1.0, %v2361
      %v2363 = vrcp.pop %v2244
      %v2364 = vmul.f32 1.0, %v2363
      %v2365 = vrcp.pop %v2245
      %v2366 = vmul.f32 1.0, %v2365
      %v2367 = vrcp.pop %v2246
      %v2368 = vmul.f32 1.0, %v2367
      %v2369 = vrcp.pop %v2247
      %v2370 = vmul.f32 1.0, %v2369
      %v2371 = vrcp.pop %v2248
      %v2372 = vmul.f32 1.0, %v2371
      %v2373 = vrcp.pop %v2249
      %v2374 = vmul.f32 1.0, %v2373
      %v2375 = vrcp.pop %v2250
      %v2376 = vmul.f32 1.0, %v2375
      %v2377 = vrcp.pop %v2251
      %v2378 = vmul.f32 1.0, %v2377
      %v2379 = vrcp.pop %v2252
      %v2380 = vmul.f32 1.0, %v2379
      %v2381 = vpack.c.bf16 %v2256, %v2254
      %v2382 = vpack.c.bf16 %v2260, %v2258
      %v2383 = vpack.c.bf16 %v2264, %v2262
      %v2384 = vpack.c.bf16 %v2268, %v2266
      %v2385 = vpack.c.bf16 %v2272, %v2270
      %v2386 = vpack.c.bf16 %v2276, %v2274
      %v2387 = vpack.c.bf16 %v2280, %v2278
      %v2388 = vpack.c.bf16 %v2284, %v2282
      %v2389 = vpack.c.bf16 %v2288, %v2286
      %v2390 = vpack.c.bf16 %v2292, %v2290
      %v2391 = vpack.c.bf16 %v2296, %v2294
      %v2392 = vpack.c.bf16 %v2300, %v2298
      %v2393 = vpack.c.bf16 %v2304, %v2302
      %v2394 = vpack.c.bf16 %v2308, %v2306
      %v2395 = vpack.c.bf16 %v2312, %v2310
      %v2396 = vpack.c.bf16 %v2316, %v2314
      %v2397 = vpack.c.bf16 %v2320, %v2318
      %v2398 = vpack.c.bf16 %v2324, %v2322
      %v2399 = vpack.c.bf16 %v2328, %v2326
      %v2400 = vpack.c.bf16 %v2332, %v2330
      %v2401 = vpack.c.bf16 %v2336, %v2334
      %v2402 = vpack.c.bf16 %v2340, %v2338
      %v2403 = vpack.c.bf16 %v2344, %v2342
      %v2404 = vpack.c.bf16 %v2348, %v2346
      %v2405 = vpack.c.bf16 %v2352, %v2350
      %v2406 = vpack.c.bf16 %v2356, %v2354
      %v2407 = vpack.c.bf16 %v2360, %v2358
      %v2408 = vpack.c.bf16 %v2364, %v2362
      %v2409 = vpack.c.bf16 %v2368, %v2366
      %v2410 = vpack.c.bf16 %v2372, %v2370
      %v2411 = vpack.c.bf16 %v2376, %v2374
      %v2412 = vpack.c.bf16 %v2380, %v2378
      %v2413 = vld [vmem:[%s3] sm:$0xff]
      %v2414 = vld [vmem:[%s3 + $0x8] sm:$0xff]
      %v2415 = vld [vmem:[%s3 + $0x10] sm:$0xff]
      %v2416 = vld [vmem:[%s3 + $0x18] sm:$0xff]
      %v2417 = vld [vmem:[%s3 + $0x20] sm:$0xff]
      %v2418 = vld [vmem:[%s3 + $0x28] sm:$0xff]
      %v2419 = vld [vmem:[%s3 + $0x30] sm:$0xff]
      %v2420 = vld [vmem:[%s3 + $0x38] sm:$0xff]
      %2453 = vrot.lane.b32.xlu0 %v2381, 96
      %v2454 = vpop.permute.xlu0 %2453
      %2455 = vrot.lane.b32.xlu0 %v2382, 96
      %v2456 = vpop.permute.xlu0 %2455
      %2457 = vrot.lane.b32.xlu0 %v2383, 96
      %v2458 = vpop.permute.xlu0 %2457
      %2459 = vrot.lane.b32.xlu0 %v2384, 96
      %v2460 = vpop.permute.xlu0 %2459
      %2461 = vrot.lane.b32.xlu0 %v2385, 96
      %v2462 = vpop.permute.xlu0 %2461
      %2463 = vrot.lane.b32.xlu0 %v2386, 96
      %v2464 = vpop.permute.xlu0 %2463
      %2465 = vrot.lane.b32.xlu0 %v2387, 96
      %v2466 = vpop.permute.xlu0 %2465
      %2467 = vrot.lane.b32.xlu0 %v2388, 96
      %v2468 = vpop.permute.xlu0 %2467
      %2469 = vrot.lane.b32.xlu0 %v2389, 96
      %v2470 = vpop.permute.xlu0 %2469
      %2471 = vrot.lane.b32.xlu0 %v2390, 96
      %v2472 = vpop.permute.xlu0 %2471
      %2473 = vrot.lane.b32.xlu0 %v2391, 96
      %v2474 = vpop.permute.xlu0 %2473
      %2475 = vrot.lane.b32.xlu0 %v2392, 96
      %v2476 = vpop.permute.xlu0 %2475
      %2477 = vrot.lane.b32.xlu0 %v2393, 96
      %v2478 = vpop.permute.xlu0 %2477
      %2479 = vrot.lane.b32.xlu0 %v2394, 96
      %v2480 = vpop.permute.xlu0 %2479
      %2481 = vrot.lane.b32.xlu0 %v2395, 96
      %v2482 = vpop.permute.xlu0 %2481
      %2483 = vrot.lane.b32.xlu0 %v2396, 96
      %v2484 = vpop.permute.xlu0 %2483
      %2485 = vrot.lane.b32.xlu0 %v2397, 96
      %v2486 = vpop.permute.xlu0 %2485
      %2487 = vrot.lane.b32.xlu0 %v2398, 96
      %v2488 = vpop.permute.xlu0 %2487
      %2489 = vrot.lane.b32.xlu0 %v2399, 96
      %v2490 = vpop.permute.xlu0 %2489
      %2491 = vrot.lane.b32.xlu0 %v2400, 96
      %v2492 = vpop.permute.xlu0 %2491
      %2493 = vrot.lane.b32.xlu0 %v2401, 96
      %v2494 = vpop.permute.xlu0 %2493
      %2495 = vrot.lane.b32.xlu0 %v2402, 96
      %v2496 = vpop.permute.xlu0 %2495
      %2497 = vrot.lane.b32.xlu0 %v2403, 96
      %v2498 = vpop.permute.xlu0 %2497
      %2499 = vrot.lane.b32.xlu0 %v2404, 96
      %v2500 = vpop.permute.xlu0 %2499
      %2501 = vrot.lane.b32.xlu0 %v2405, 96
      %v2502 = vpop.permute.xlu0 %2501
      %2503 = vrot.lane.b32.xlu0 %v2406, 96
      %v2504 = vpop.permute.xlu0 %2503
      %2505 = vrot.lane.b32.xlu0 %v2407, 96
      %v2506 = vpop.permute.xlu0 %2505
      %2507 = vrot.lane.b32.xlu0 %v2408, 96
      %v2508 = vpop.permute.xlu0 %2507
      %2509 = vrot.lane.b32.xlu0 %v2409, 96
      %v2510 = vpop.permute.xlu0 %2509
      %2511 = vrot.lane.b32.xlu0 %v2410, 96
      %v2512 = vpop.permute.xlu0 %2511
      %2513 = vrot.lane.b32.xlu0 %v2411, 96
      %v2514 = vpop.permute.xlu0 %2513
      %2515 = vrot.lane.b32.xlu0 %v2412, 96
      %v2516 = vpop.permute.xlu0 %2515
      %v2525 = vunpack.c.l.b16 %v2413
      %v2526 = vunpack.c.h.b16 %v2413
      %v2527 = vunpack.c.l.b16 %v2414
      %v2528 = vunpack.c.h.b16 %v2414
      %v2529 = vunpack.c.l.b16 %v2415
      %v2530 = vunpack.c.h.b16 %v2415
      %v2531 = vunpack.c.l.b16 %v2416
      %v2532 = vunpack.c.h.b16 %v2416
      %v2533 = vunpack.c.l.b16 %v2417
      %v2534 = vunpack.c.h.b16 %v2417
      %v2535 = vunpack.c.l.b16 %v2418
      %v2536 = vunpack.c.h.b16 %v2418
      %v2537 = vunpack.c.l.b16 %v2419
      %v2538 = vunpack.c.h.b16 %v2419
      %v2539 = vunpack.c.l.b16 %v2420
      %v2540 = vunpack.c.h.b16 %v2420
      %v2541 = vpack.c.b16 %v2527, %v2525
      %v2542 = vpack.c.b16 %v2528, %v2526
      %v2543 = vpack.c.b16 %v2531, %v2529
      %v2544 = vpack.c.b16 %v2532, %v2530
      %v2545 = vpack.c.b16 %v2535, %v2533
      %v2546 = vpack.c.b16 %v2536, %v2534
      %v2547 = vpack.c.b16 %v2539, %v2537
      %v2548 = vpack.c.b16 %v2540, %v2538
      %vm2557 = vcmask 523264
      %v2559 = vsel %vm2557, %v2454, 0
      %v2562 = vsel %vm2557, %v2456, 0
      %v2565 = vsel %vm2557, %v2458, 0
      %v2568 = vsel %vm2557, %v2460, 0
      %v2571 = vsel %vm2557, %v2462, 0
      %v2574 = vsel %vm2557, %v2464, 0
      %v2577 = vsel %vm2557, %v2466, 0
      %v2580 = vsel %vm2557, %v2468, 0
      %v2583 = vsel %vm2557, %v2470, 0
      %v2586 = vsel %vm2557, %v2472, 0
      %v2589 = vsel %vm2557, %v2474, 0
      %v2592 = vsel %vm2557, %v2476, 0
      %v2595 = vsel %vm2557, %v2478, 0
      %v2598 = vsel %vm2557, %v2480, 0
      %v2601 = vsel %vm2557, %v2482, 0
      %v2604 = vsel %vm2557, %v2484, 0
      %v2607 = vsel %vm2557, %v2486, 0
      %v2610 = vsel %vm2557, %v2488, 0
      %v2613 = vsel %vm2557, %v2490, 0
      %v2616 = vsel %vm2557, %v2492, 0
      %v2619 = vsel %vm2557, %v2494, 0
      %v2622 = vsel %vm2557, %v2496, 0
      %v2625 = vsel %vm2557, %v2498, 0
      %v2628 = vsel %vm2557, %v2500, 0
      %v2631 = vsel %vm2557, %v2502, 0
      %v2634 = vsel %vm2557, %v2504, 0
      %v2637 = vsel %vm2557, %v2506, 0
      %v2640 = vsel %vm2557, %v2508, 0
      %v2643 = vsel %vm2557, %v2510, 0
      %v2646 = vsel %vm2557, %v2512, 0
      %v2649 = vsel %vm2557, %v2514, 0
      %v2652 = vsel %vm2557, %v2516, 0
      %2654 = vmatprep.subr.bf16.mxu0 %v2542
      %2655 = vmatpush1.bf16.msra.mxu0 %v2541
      %2656 = vmatprep.subr.bf16.mxu0 %v2544
      %2657 = vmatpush1.bf16.msra.mxu0 %v2543
      %2658 = vmatprep.subr.bf16.mxu0 %v2546
      %2659 = vmatpush1.bf16.msra.mxu0 %v2545
      %2660 = vmatprep.subr.bf16.mxu0 %v2548
      %2661 = vmatpush1.bf16.msra.mxu0 %v2547
      %2662 = vmatprep.subr.bf16.mxu0 0
      %2663 = vmatpush1.bf16.msra.mxu0 0
      %2664 = vmatprep.subr.bf16.mxu0 0
      %2665 = vmatpush1.bf16.msra.mxu0 0
      %2666 = vmatprep.subr.bf16.mxu0 0
      %2667 = vmatpush1.bf16.msra.mxu0 0
      %2668 = vmatprep.subr.bf16.mxu0 0
      %2669 = vmatpush1.bf16.msra.mxu0 0
      %2670 = vmatprep.subr.bf16.mxu0 0
      %2671 = vmatpush1.bf16.msra.mxu0 0
      %2672 = vmatprep.subr.bf16.mxu0 0
      %2673 = vmatpush1.bf16.msra.mxu0 0
      %2674 = vmatprep.subr.bf16.mxu0 0
      %2675 = vmatpush1.bf16.msra.mxu0 0
      %2676 = vmatprep.subr.bf16.mxu0 0
      %2677 = vmatpush1.bf16.msra.mxu0 0
      %2678 = vmatprep.subr.bf16.mxu0 0
      %2679 = vmatpush1.bf16.msra.mxu0 0
      %2680 = vmatprep.subr.bf16.mxu0 0
      %2681 = vmatpush1.bf16.msra.mxu0 0
      %2682 = vmatprep.subr.bf16.mxu0 0
      %2683 = vmatpush1.bf16.msra.mxu0 0
      %2684 = vmatprep.subr.bf16.mxu0 0
      %2685 = vmatpush1.bf16.msra.mxu0 0
      %2686 = vmatprep.mubr.bf16.mxu0 0
      %2687 = vmatmul.mubr.bf16.gmra.mrb[0].mxu0 %v2559
      %v2688 = vpop.f32.mrb[0].mxu0
      %v2689 = vadd.f32 0.0, %v2688
      %v2690 = vpop.f32.mrb[0].mxu0
      %v2691 = vadd.f32 0.0, %v2690
      %v2692 = vpop.f32.mrb[0].mxu0
      %v2693 = vadd.f32 0.0, %v2692
      %v2694 = vpop.f32.mrb[0].mxu0
      %v2695 = vadd.f32 0.0, %v2694
      %2696 = vmatprep.mubr.bf16.mxu0 0
      %2697 = vmatmul.mubr.bf16.gmra.mrb[0].mxu0 %v2562
      %v2698 = vpop.f32.mrb[0].mxu0
      %v2699 = vadd.f32 0.0, %v2698
      %v2700 = vpop.f32.mrb[0].mxu0
      %v2701 = vadd.f32 0.0, %v2700
      %v2702 = vpop.f32.mrb[0].mxu0
      %v2703 = vadd.f32 0.0, %v2702
      %v2704 = vpop.f32.mrb[0].mxu0
      %v2705 = vadd.f32 0.0, %v2704
      %2706 = vmatprep.mubr.bf16.mxu0 0
      %2707 = vmatmul.mubr.bf16.gmra.mrb[0].mxu0 %v2565
      %v2708 = vpop.f32.mrb[0].mxu0
      %v2709 = vadd.f32 0.0, %v2708
      %v2710 = vpop.f32.mrb[0].mxu0
      %v2711 = vadd.f32 0.0, %v2710
      %v2712 = vpop.f32.mrb[0].mxu0
      %v2713 = vadd.f32 0.0, %v2712
      %v2714 = vpop.f32.mrb[0].mxu0
      %v2715 = vadd.f32 0.0, %v2714
      %2716 = vmatprep.mubr.bf16.mxu0 0
      %2717 = vmatmul.mubr.bf16.gmra.mrb[0].mxu0 %v2568
      %v2718 = vpop.f32.mrb[0].mxu0
      %v2719 = vadd.f32 0.0, %v2718
      %v2720 = vpop.f32.mrb[0].mxu0
      %v2721 = vadd.f32 0.0, %v2720
      %v2722 = vpop.f32.mrb[0].mxu0
      %v2723 = vadd.f32 0.0, %v2722
      %v2724 = vpop.f32.mrb[0].mxu0
      %v2725 = vadd.f32 0.0, %v2724
      %2726 = vmatprep.mubr.bf16.mxu0 0
      %2727 = vmatmul.mubr.bf16.gmra.mrb[0].mxu0 %v2571
      %v2728 = vpop.f32.mrb[0].mxu0
      %v2729 = vadd.f32 0.0, %v2728
      %v2730 = vpop.f32.mrb[0].mxu0
      %v2731 = vadd.f32 0.0, %v2730
      %v2732 = vpop.f32.mrb[0].mxu0
      %v2733 = vadd.f32 0.0, %v2732
      %v2734 = vpop.f32.mrb[0].mxu0
      %v2735 = vadd.f32 0.0, %v2734
      %2736 = vmatprep.mubr.bf16.mxu0 0
      %2737 = vmatmul.mubr.bf16.gmra.mrb[0].mxu0 %v2574
      %v2738 = vpop.f32.mrb[0].mxu0
      %v2739 = vadd.f32 0.0, %v2738
      %v2740 = vpop.f32.mrb[0].mxu0
      %v2741 = vadd.f32 0.0, %v2740
      %v2742 = vpop.f32.mrb[0].mxu0
      %v2743 = vadd.f32 0.0, %v2742
      %v2744 = vpop.f32.mrb[0].mxu0
      %v2745 = vadd.f32 0.0, %v2744
      %2746 = vmatprep.mubr.bf16.mxu0 0
      %2747 = vmatmul.mubr.bf16.gmra.mrb[0].mxu0 %v2577
      %v2748 = vpop.f32.mrb[0].mxu0
      %v2749 = vadd.f32 0.0, %v2748
      %v2750 = vpop.f32.mrb[0].mxu0
      %v2751 = vadd.f32 0.0, %v2750
      %v2752 = vpop.f32.mrb[0].mxu0
      %v2753 = vadd.f32 0.0, %v2752
      %v2754 = vpop.f32.mrb[0].mxu0
      %v2755 = vadd.f32 0.0, %v2754
      %2756 = vmatprep.mubr.bf16.mxu0 0
      %2757 = vmatmul.mubr.bf16.gmra.mrb[0].mxu0 %v2580
      %v2758 = vpop.f32.mrb[0].mxu0
      %v2759 = vadd.f32 0.0, %v2758
      %v2760 = vpop.f32.mrb[0].mxu0
      %v2761 = vadd.f32 0.0, %v2760
      %v2762 = vpop.f32.mrb[0].mxu0
      %v2763 = vadd.f32 0.0, %v2762
      %v2764 = vpop.f32.mrb[0].mxu0
      %v2765 = vadd.f32 0.0, %v2764
      %2766 = vmatprep.mubr.bf16.mxu0 0
      %2767 = vmatmul.mubr.bf16.gmra.mrb[0].mxu0 %v2583
      %v2768 = vpop.f32.mrb[0].mxu0
      %v2769 = vadd.f32 0.0, %v2768
      %v2770 = vpop.f32.mrb[0].mxu0
      %v2771 = vadd.f32 0.0, %v2770
      %v2772 = vpop.f32.mrb[0].mxu0
      %v2773 = vadd.f32 0.0, %v2772
      %v2774 = vpop.f32.mrb[0].mxu0
      %v2775 = vadd.f32 0.0, %v2774
      %2776 = vmatprep.mubr.bf16.mxu0 0
      %2777 = vmatmul.mubr.bf16.gmra.mrb[0].mxu0 %v2586
      %v2778 = vpop.f32.mrb[0].mxu0
      %v2779 = vadd.f32 0.0, %v2778
      %v2780 = vpop.f32.mrb[0].mxu0
      %v2781 = vadd.f32 0.0, %v2780
      %v2782 = vpop.f32.mrb[0].mxu0
      %v2783 = vadd.f32 0.0, %v2782
      %v2784 = vpop.f32.mrb[0].mxu0
      %v2785 = vadd.f32 0.0, %v2784
      %2786 = vmatprep.mubr.bf16.mxu0 0
      %2787 = vmatmul.mubr.bf16.gmra.mrb[0].mxu0 %v2589
      %v2788 = vpop.f32.mrb[0].mxu0
      %v2789 = vadd.f32 0.0, %v2788
      %v2790 = vpop.f32.mrb[0].mxu0
      %v2791 = vadd.f32 0.0, %v2790
      %v2792 = vpop.f32.mrb[0].mxu0
      %v2793 = vadd.f32 0.0, %v2792
      %v2794 = vpop.f32.mrb[0].mxu0
      %v2795 = vadd.f32 0.0, %v2794
      %2796 = vmatprep.mubr.bf16.mxu0 0
      %2797 = vmatmul.mubr.bf16.gmra.mrb[0].mxu0 %v2592
      %v2798 = vpop.f32.mrb[0].mxu0
      %v2799 = vadd.f32 0.0, %v2798
      %v2800 = vpop.f32.mrb[0].mxu0
      %v2801 = vadd.f32 0.0, %v2800
      %v2802 = vpop.f32.mrb[0].mxu0
      %v2803 = vadd.f32 0.0, %v2802
      %v2804 = vpop.f32.mrb[0].mxu0
      %v2805 = vadd.f32 0.0, %v2804
      %2806 = vmatprep.mubr.bf16.mxu0 0
      %2807 = vmatmul.mubr.bf16.gmra.mrb[0].mxu0 %v2595
      %v2808 = vpop.f32.mrb[0].mxu0
      %v2809 = vadd.f32 0.0, %v2808
      %v2810 = vpop.f32.mrb[0].mxu0
      %v2811 = vadd.f32 0.0, %v2810
      %v2812 = vpop.f32.mrb[0].mxu0
      %v2813 = vadd.f32 0.0, %v2812
      %v2814 = vpop.f32.mrb[0].mxu0
      %v2815 = vadd.f32 0.0, %v2814
      %2816 = vmatprep.mubr.bf16.mxu0 0
      %2817 = vmatmul.mubr.bf16.gmra.mrb[0].mxu0 %v2598
      %v2818 = vpop.f32.mrb[0].mxu0
      %v2819 = vadd.f32 0.0, %v2818
      %v2820 = vpop.f32.mrb[0].mxu0
      %v2821 = vadd.f32 0.0, %v2820
      %v2822 = vpop.f32.mrb[0].mxu0
      %v2823 = vadd.f32 0.0, %v2822
      %v2824 = vpop.f32.mrb[0].mxu0
      %v2825 = vadd.f32 0.0, %v2824
      %2826 = vmatprep.mubr.bf16.mxu0 0
      %2827 = vmatmul.mubr.bf16.gmra.mrb[0].mxu0 %v2601
      %v2828 = vpop.f32.mrb[0].mxu0
      %v2829 = vadd.f32 0.0, %v2828
      %v2830 = vpop.f32.mrb[0].mxu0
      %v2831 = vadd.f32 0.0, %v2830
      %v2832 = vpop.f32.mrb[0].mxu0
      %v2833 = vadd.f32 0.0, %v2832
      %v2834 = vpop.f32.mrb[0].mxu0
      %v2835 = vadd.f32 0.0, %v2834
      %2836 = vmatprep.mubr.bf16.mxu0 0
      %2837 = vmatmul.mubr.bf16.gmra.mrb[0].mxu0 %v2604
      %v2838 = vpop.f32.mrb[0].mxu0
      %v2839 = vadd.f32 0.0, %v2838
      %v2840 = vpop.f32.mrb[0].mxu0
      %v2841 = vadd.f32 0.0, %v2840
      %v2842 = vpop.f32.mrb[0].mxu0
      %v2843 = vadd.f32 0.0, %v2842
      %v2844 = vpop.f32.mrb[0].mxu0
      %v2845 = vadd.f32 0.0, %v2844
      %2846 = vmatprep.mubr.bf16.mxu0 0
      %2847 = vmatmul.mubr.bf16.gmra.mrb[0].mxu0 %v2607
      %v2848 = vpop.f32.mrb[0].mxu0
      %v2849 = vadd.f32 0.0, %v2848
      %v2850 = vpop.f32.mrb[0].mxu0
      %v2851 = vadd.f32 0.0, %v2850
      %v2852 = vpop.f32.mrb[0].mxu0
      %v2853 = vadd.f32 0.0, %v2852
      %v2854 = vpop.f32.mrb[0].mxu0
      %v2855 = vadd.f32 0.0, %v2854
      %2856 = vmatprep.mubr.bf16.mxu0 0
      %2857 = vmatmul.mubr.bf16.gmra.mrb[0].mxu0 %v2610
      %v2858 = vpop.f32.mrb[0].mxu0
      %v2859 = vadd.f32 0.0, %v2858
      %v2860 = vpop.f32.mrb[0].mxu0
      %v2861 = vadd.f32 0.0, %v2860
      %v2862 = vpop.f32.mrb[0].mxu0
      %v2863 = vadd.f32 0.0, %v2862
      %v2864 = vpop.f32.mrb[0].mxu0
      %v2865 = vadd.f32 0.0, %v2864
      %2866 = vmatprep.mubr.bf16.mxu0 0
      %2867 = vmatmul.mubr.bf16.gmra.mrb[0].mxu0 %v2613
      %v2868 = vpop.f32.mrb[0].mxu0
      %v2869 = vadd.f32 0.0, %v2868
      %v2870 = vpop.f32.mrb[0].mxu0
      %v2871 = vadd.f32 0.0, %v2870
      %v2872 = vpop.f32.mrb[0].mxu0
      %v2873 = vadd.f32 0.0, %v2872
      %v2874 = vpop.f32.mrb[0].mxu0
      %v2875 = vadd.f32 0.0, %v2874
      %2876 = vmatprep.mubr.bf16.mxu0 0
      %2877 = vmatmul.mubr.bf16.gmra.mrb[0].mxu0 %v2616
      %v2878 = vpop.f32.mrb[0].mxu0
      %v2879 = vadd.f32 0.0, %v2878
      %v2880 = vpop.f32.mrb[0].mxu0
      %v2881 = vadd.f32 0.0, %v2880
      %v2882 = vpop.f32.mrb[0].mxu0
      %v2883 = vadd.f32 0.0, %v2882
      %v2884 = vpop.f32.mrb[0].mxu0
      %v2885 = vadd.f32 0.0, %v2884
      %2886 = vmatprep.mubr.bf16.mxu0 0
      %2887 = vmatmul.mubr.bf16.gmra.mrb[0].mxu0 %v2619
      %v2888 = vpop.f32.mrb[0].mxu0
      %v2889 = vadd.f32 0.0, %v2888
      %v2890 = vpop.f32.mrb[0].mxu0
      %v2891 = vadd.f32 0.0, %v2890
      %v2892 = vpop.f32.mrb[0].mxu0
      %v2893 = vadd.f32 0.0, %v2892
      %v2894 = vpop.f32.mrb[0].mxu0
      %v2895 = vadd.f32 0.0, %v2894
      %2896 = vmatprep.mubr.bf16.mxu0 0
      %2897 = vmatmul.mubr.bf16.gmra.mrb[0].mxu0 %v2622
      %v2898 = vpop.f32.mrb[0].mxu0
      %v2899 = vadd.f32 0.0, %v2898
      %v2900 = vpop.f32.mrb[0].mxu0
      %v2901 = vadd.f32 0.0, %v2900
      %v2902 = vpop.f32.mrb[0].mxu0
      %v2903 = vadd.f32 0.0, %v2902
      %v2904 = vpop.f32.mrb[0].mxu0
      %v2905 = vadd.f32 0.0, %v2904
      %2906 = vmatprep.mubr.bf16.mxu0 0
      %2907 = vmatmul.mubr.bf16.gmra.mrb[0].mxu0 %v2625
      %v2908 = vpop.f32.mrb[0].mxu0
      %v2909 = vadd.f32 0.0, %v2908
      %v2910 = vpop.f32.mrb[0].mxu0
      %v2911 = vadd.f32 0.0, %v2910
      %v2912 = vpop.f32.mrb[0].mxu0
      %v2913 = vadd.f32 0.0, %v2912
      %v2914 = vpop.f32.mrb[0].mxu0
      %v2915 = vadd.f32 0.0, %v2914
      %2916 = vmatprep.mubr.bf16.mxu0 0
      %2917 = vmatmul.mubr.bf16.gmra.mrb[0].mxu0 %v2628
      %v2918 = vpop.f32.mrb[0].mxu0
      %v2919 = vadd.f32 0.0, %v2918
      %v2920 = vpop.f32.mrb[0].mxu0
      %v2921 = vadd.f32 0.0, %v2920
      %v2922 = vpop.f32.mrb[0].mxu0
      %v2923 = vadd.f32 0.0, %v2922
      %v2924 = vpop.f32.mrb[0].mxu0
      %v2925 = vadd.f32 0.0, %v2924
      %2926 = vmatprep.mubr.bf16.mxu0 0
      %2927 = vmatmul.mubr.bf16.gmra.mrb[0].mxu0 %v2631
      %v2928 = vpop.f32.mrb[0].mxu0
      %v2929 = vadd.f32 0.0, %v2928
      %v2930 = vpop.f32.mrb[0].mxu0
      %v2931 = vadd.f32 0.0, %v2930
      %v2932 = vpop.f32.mrb[0].mxu0
      %v2933 = vadd.f32 0.0, %v2932
      %v2934 = vpop.f32.mrb[0].mxu0
      %v2935 = vadd.f32 0.0, %v2934
      %2936 = vmatprep.mubr.bf16.mxu0 0
      %2937 = vmatmul.mubr.bf16.gmra.mrb[0].mxu0 %v2634
      %v2938 = vpop.f32.mrb[0].mxu0
      %v2939 = vadd.f32 0.0, %v2938
      %v2940 = vpop.f32.mrb[0].mxu0
      %v2941 = vadd.f32 0.0, %v2940
      %v2942 = vpop.f32.mrb[0].mxu0
      %v2943 = vadd.f32 0.0, %v2942
      %v2944 = vpop.f32.mrb[0].mxu0
      %v2945 = vadd.f32 0.0, %v2944
      %2946 = vmatprep.mubr.bf16.mxu0 0
      %2947 = vmatmul.mubr.bf16.gmra.mrb[0].mxu0 %v2637
      %v2948 = vpop.f32.mrb[0].mxu0
      %v2949 = vadd.f32 0.0, %v2948
      %v2950 = vpop.f32.mrb[0].mxu0
      %v2951 = vadd.f32 0.0, %v2950
      %v2952 = vpop.f32.mrb[0].mxu0
      %v2953 = vadd.f32 0.0, %v2952
      %v2954 = vpop.f32.mrb[0].mxu0
      %v2955 = vadd.f32 0.0, %v2954
      %2956 = vmatprep.mubr.bf16.mxu0 0
      %2957 = vmatmul.mubr.bf16.gmra.mrb[0].mxu0 %v2640
      %v2958 = vpop.f32.mrb[0].mxu0
      %v2959 = vadd.f32 0.0, %v2958
      %v2960 = vpop.f32.mrb[0].mxu0
      %v2961 = vadd.f32 0.0, %v2960
      %v2962 = vpop.f32.mrb[0].mxu0
      %v2963 = vadd.f32 0.0, %v2962
      %v2964 = vpop.f32.mrb[0].mxu0
      %v2965 = vadd.f32 0.0, %v2964
      %2966 = vmatprep.mubr.bf16.mxu0 0
      %2967 = vmatmul.mubr.bf16.gmra.mrb[0].mxu0 %v2643
      %v2968 = vpop.f32.mrb[0].mxu0
      %v2969 = vadd.f32 0.0, %v2968
      %v2970 = vpop.f32.mrb[0].mxu0
      %v2971 = vadd.f32 0.0, %v2970
      %v2972 = vpop.f32.mrb[0].mxu0
      %v2973 = vadd.f32 0.0, %v2972
      %v2974 = vpop.f32.mrb[0].mxu0
      %v2975 = vadd.f32 0.0, %v2974
      %2976 = vmatprep.mubr.bf16.mxu0 0
      %2977 = vmatmul.mubr.bf16.gmra.mrb[0].mxu0 %v2646
      %v2978 = vpop.f32.mrb[0].mxu0
      %v2979 = vadd.f32 0.0, %v2978
      %v2980 = vpop.f32.mrb[0].mxu0
      %v2981 = vadd.f32 0.0, %v2980
      %v2982 = vpop.f32.mrb[0].mxu0
      %v2983 = vadd.f32 0.0, %v2982
      %v2984 = vpop.f32.mrb[0].mxu0
      %v2985 = vadd.f32 0.0, %v2984
      %2986 = vmatprep.mubr.bf16.mxu0 0
      %2987 = vmatmul.mubr.bf16.gmra.mrb[0].mxu0 %v2649
      %v2988 = vpop.f32.mrb[0].mxu0
      %v2989 = vadd.f32 0.0, %v2988
      %v2990 = vpop.f32.mrb[0].mxu0
      %v2991 = vadd.f32 0.0, %v2990
      %v2992 = vpop.f32.mrb[0].mxu0
      %v2993 = vadd.f32 0.0, %v2992
      %v2994 = vpop.f32.mrb[0].mxu0
      %v2995 = vadd.f32 0.0, %v2994
      %2996 = vmatprep.mubr.bf16.mxu0 0
      %2997 = vmatmul.mubr.bf16.gmra.mrb[0].mxu0 %v2652
      %v2998 = vpop.f32.mrb[0].mxu0
      %v2999 = vadd.f32 0.0, %v2998
      %v3000 = vpop.f32.mrb[0].mxu0
      %v3001 = vadd.f32 0.0, %v3000
      %v3002 = vpop.f32.mrb[0].mxu0
      %v3003 = vadd.f32 0.0, %v3002
      %v3004 = vpop.f32.mrb[0].mxu0
      %v3005 = vadd.f32 0.0, %v3004
      %3006 = vdwg.mxu0
      %v3007 = vmul.f32 %v942, %v2689
      %v3008 = vmul.f32 %v944, %v2691
      %v3009 = vmul.f32 %v946, %v2693
      %v3010 = vmul.f32 %v948, %v2695
      %v3011 = vmul.f32 %v952, %v2699
      %v3012 = vmul.f32 %v954, %v2701
      %v3013 = vmul.f32 %v956, %v2703
      %v3014 = vmul.f32 %v958, %v2705
      %v3015 = vmul.f32 %v962, %v2709
      %v3016 = vmul.f32 %v964, %v2711
      %v3017 = vmul.f32 %v966, %v2713
      %v3018 = vmul.f32 %v968, %v2715
      %v3019 = vmul.f32 %v972, %v2719
      %v3020 = vmul.f32 %v974, %v2721
      %v3021 = vmul.f32 %v976, %v2723
      %v3022 = vmul.f32 %v978, %v2725
      %v3023 = vmul.f32 %v982, %v2729
      %v3024 = vmul.f32 %v984, %v2731
      %v3025 = vmul.f32 %v986, %v2733
      %v3026 = vmul.f32 %v988, %v2735
      %v3027 = vmul.f32 %v992, %v2739
      %v3028 = vmul.f32 %v994, %v2741
      %v3029 = vmul.f32 %v996, %v2743
      %v3030 = vmul.f32 %v998, %v2745
      %v3031 = vmul.f32 %v1002, %v2749
      %v3032 = vmul.f32 %v1004, %v2751
      %v3033 = vmul.f32 %v1006, %v2753
      %v3034 = vmul.f32 %v1008, %v2755
      %v3035 = vmul.f32 %v1012, %v2759
      %v3036 = vmul.f32 %v1014, %v2761
      %v3037 = vmul.f32 %v1016, %v2763
      %v3038 = vmul.f32 %v1018, %v2765
      %v3039 = vmul.f32 %v1022, %v2769
      %v3040 = vmul.f32 %v1024, %v2771
      %v3041 = vmul.f32 %v1026, %v2773
      %v3042 = vmul.f32 %v1028, %v2775
      %v3043 = vmul.f32 %v1032, %v2779
      %v3044 = vmul.f32 %v1034, %v2781
      %v3045 = vmul.f32 %v1036, %v2783
      %v3046 = vmul.f32 %v1038, %v2785
      %v3047 = vmul.f32 %v1042, %v2789
      %v3048 = vmul.f32 %v1044, %v2791
      %v3049 = vmul.f32 %v1046, %v2793
      %v3050 = vmul.f32 %v1048, %v2795
      %v3051 = vmul.f32 %v1052, %v2799
      %v3052 = vmul.f32 %v1054, %v2801
      %v3053 = vmul.f32 %v1056, %v2803
      %v3054 = vmul.f32 %v1058, %v2805
      %v3055 = vmul.f32 %v1062, %v2809
      %v3056 = vmul.f32 %v1064, %v2811
      %v3057 = vmul.f32 %v1066, %v2813
      %v3058 = vmul.f32 %v1068, %v2815
      %v3059 = vmul.f32 %v1072, %v2819
      %v3060 = vmul.f32 %v1074, %v2821
      %v3061 = vmul.f32 %v1076, %v2823
      %v3062 = vmul.f32 %v1078, %v2825
      %v3063 = vmul.f32 %v1082, %v2829
      %v3064 = vmul.f32 %v1084, %v2831
      %v3065 = vmul.f32 %v1086, %v2833
      %v3066 = vmul.f32 %v1088, %v2835
      %v3067 = vmul.f32 %v1092, %v2839
      %v3068 = vmul.f32 %v1094, %v2841
      %v3069 = vmul.f32 %v1096, %v2843
      %v3070 = vmul.f32 %v1098, %v2845
      %v3071 = vmul.f32 %v1102, %v2849
      %v3072 = vmul.f32 %v1104, %v2851
      %v3073 = vmul.f32 %v1106, %v2853
      %v3074 = vmul.f32 %v1108, %v2855
      %v3075 = vmul.f32 %v1112, %v2859
      %v3076 = vmul.f32 %v1114, %v2861
      %v3077 = vmul.f32 %v1116, %v2863
      %v3078 = vmul.f32 %v1118, %v2865
      %v3079 = vmul.f32 %v1122, %v2869
      %v3080 = vmul.f32 %v1124, %v2871
      %v3081 = vmul.f32 %v1126, %v2873
      %v3082 = vmul.f32 %v1128, %v2875
      %v3083 = vmul.f32 %v1132, %v2879
      %v3084 = vmul.f32 %v1134, %v2881
      %v3085 = vmul.f32 %v1136, %v2883
      %v3086 = vmul.f32 %v1138, %v2885
      %v3087 = vmul.f32 %v1142, %v2889
      %v3088 = vmul.f32 %v1144, %v2891
      %v3089 = vmul.f32 %v1146, %v2893
      %v3090 = vmul.f32 %v1148, %v2895
      %v3091 = vmul.f32 %v1152, %v2899
      %v3092 = vmul.f32 %v1154, %v2901
      %v3093 = vmul.f32 %v1156, %v2903
      %v3094 = vmul.f32 %v1158, %v2905
      %v3095 = vmul.f32 %v1162, %v2909
      %v3096 = vmul.f32 %v1164, %v2911
      %v3097 = vmul.f32 %v1166, %v2913
      %v3098 = vmul.f32 %v1168, %v2915
      %v3099 = vmul.f32 %v1172, %v2919
      %v3100 = vmul.f32 %v1174, %v2921
      %v3101 = vmul.f32 %v1176, %v2923
      %v3102 = vmul.f32 %v1178, %v2925
      %v3103 = vmul.f32 %v1182, %v2929
      %v3104 = vmul.f32 %v1184, %v2931
      %v3105 = vmul.f32 %v1186, %v2933
      %v3106 = vmul.f32 %v1188, %v2935
      %v3107 = vmul.f32 %v1192, %v2939
      %v3108 = vmul.f32 %v1194, %v2941
      %v3109 = vmul.f32 %v1196, %v2943
      %v3110 = vmul.f32 %v1198, %v2945
      %v3111 = vmul.f32 %v1202, %v2949
      %v3112 = vmul.f32 %v1204, %v2951
      %v3113 = vmul.f32 %v1206, %v2953
      %v3114 = vmul.f32 %v1208, %v2955
      %v3115 = vmul.f32 %v1212, %v2959
      %v3116 = vmul.f32 %v1214, %v2961
      %v3117 = vmul.f32 %v1216, %v2963
      %v3118 = vmul.f32 %v1218, %v2965
      %v3119 = vmul.f32 %v1222, %v2969
      %v3120 = vmul.f32 %v1224, %v2971
      %v3121 = vmul.f32 %v1226, %v2973
      %v3122 = vmul.f32 %v1228, %v2975
      %v3123 = vmul.f32 %v1232, %v2979
      %v3124 = vmul.f32 %v1234, %v2981
      %v3125 = vmul.f32 %v1236, %v2983
      %v3126 = vmul.f32 %v1238, %v2985
      %v3127 = vmul.f32 %v1242, %v2989
      %v3128 = vmul.f32 %v1244, %v2991
      %v3129 = vmul.f32 %v1246, %v2993
      %v3130 = vmul.f32 %v1248, %v2995
      %v3131 = vmul.f32 %v1252, %v2999
      %v3132 = vmul.f32 %v1254, %v3001
      %v3133 = vmul.f32 %v1256, %v3003
      %v3134 = vmul.f32 %v1258, %v3005
      %v3135 = vpack.c.bf16 %v3009, %v3007
      %v3136 = vpack.c.bf16 %v3010, %v3008
      %v3137 = vpack.c.bf16 %v1934, %v1933
      %v3138 = vpack.c.bf16 %v3013, %v3011
      %v3139 = vpack.c.bf16 %v3014, %v3012
      %v3140 = vpack.c.bf16 %v1936, %v1935
      %v3141 = vpack.c.bf16 %v3017, %v3015
      %v3142 = vpack.c.bf16 %v3018, %v3016
      %v3143 = vpack.c.bf16 %v1938, %v1937
      %v3144 = vpack.c.bf16 %v3021, %v3019
      %v3145 = vpack.c.bf16 %v3022, %v3020
      %v3146 = vpack.c.bf16 %v1940, %v1939
      %v3147 = vpack.c.bf16 %v3025, %v3023
      %v3148 = vpack.c.bf16 %v3026, %v3024
      %v3149 = vpack.c.bf16 %v1942, %v1941
      %v3150 = vpack.c.bf16 %v3029, %v3027
      %v3151 = vpack.c.bf16 %v3030, %v3028
      %v3152 = vpack.c.bf16 %v1944, %v1943
      %v3153 = vpack.c.bf16 %v3033, %v3031
      %v3154 = vpack.c.bf16 %v3034, %v3032
      %v3155 = vpack.c.bf16 %v1946, %v1945
      %v3156 = vpack.c.bf16 %v3037, %v3035
      %v3157 = vpack.c.bf16 %v3038, %v3036
      %v3158 = vpack.c.bf16 %v1948, %v1947
      %v3159 = vpack.c.bf16 %v3041, %v3039
      %v3160 = vpack.c.bf16 %v3042, %v3040
      %v3161 = vpack.c.bf16 %v1950, %v1949
      %v3162 = vpack.c.bf16 %v3045, %v3043
      %v3163 = vpack.c.bf16 %v3046, %v3044
      %v3164 = vpack.c.bf16 %v1952, %v1951
      %v3165 = vpack.c.bf16 %v3049, %v3047
      %v3166 = vpack.c.bf16 %v3050, %v3048
      %v3167 = vpack.c.bf16 %v1954, %v1953
      %v3168 = vpack.c.bf16 %v3053, %v3051
      %v3169 = vpack.c.bf16 %v3054, %v3052
      %v3170 = vpack.c.bf16 %v1956, %v1955
      %v3171 = vpack.c.bf16 %v3057, %v3055
      %v3172 = vpack.c.bf16 %v3058, %v3056
      %v3173 = vpack.c.bf16 %v1958, %v1957
      %v3174 = vpack.c.bf16 %v3061, %v3059
      %v3175 = vpack.c.bf16 %v3062, %v3060
      %v3176 = vpack.c.bf16 %v1960, %v1959
      %v3177 = vpack.c.bf16 %v3065, %v3063
      %v3178 = vpack.c.bf16 %v3066, %v3064
      %v3179 = vpack.c.bf16 %v1962, %v1961
      %v3180 = vpack.c.bf16 %v3069, %v3067
      %v3181 = vpack.c.bf16 %v3070, %v3068
      %v3182 = vpack.c.bf16 %v1964, %v1963
      %v3183 = vpack.c.bf16 %v3073, %v3071
      %v3184 = vpack.c.bf16 %v3074, %v3072
      %v3185 = vpack.c.bf16 %v1966, %v1965
      %v3186 = vpack.c.bf16 %v3077, %v3075
      %v3187 = vpack.c.bf16 %v3078, %v3076
      %v3188 = vpack.c.bf16 %v1968, %v1967
      %v3189 = vpack.c.bf16 %v3081, %v3079
      %v3190 = vpack.c.bf16 %v3082, %v3080
      %v3191 = vpack.c.bf16 %v1970, %v1969
      %v3192 = vpack.c.bf16 %v3085, %v3083
      %v3193 = vpack.c.bf16 %v3086, %v3084
      %v3194 = vpack.c.bf16 %v1972, %v1971
      %v3195 = vpack.c.bf16 %v3089, %v3087
      %v3196 = vpack.c.bf16 %v3090, %v3088
      %v3197 = vpack.c.bf16 %v1974, %v1973
      %v3198 = vpack.c.bf16 %v3093, %v3091
      %v3199 = vpack.c.bf16 %v3094, %v3092
      %v3200 = vpack.c.bf16 %v1976, %v1975
      %v3201 = vpack.c.bf16 %v3097, %v3095
      %v3202 = vpack.c.bf16 %v3098, %v3096
      %v3203 = vpack.c.bf16 %v1978, %v1977
      %v3204 = vpack.c.bf16 %v3101, %v3099
      %v3205 = vpack.c.bf16 %v3102, %v3100
      %v3206 = vpack.c.bf16 %v1980, %v1979
      %v3207 = vpack.c.bf16 %v3105, %v3103
      %v3208 = vpack.c.bf16 %v3106, %v3104
      %v3209 = vpack.c.bf16 %v1982, %v1981
      %v3210 = vpack.c.bf16 %v3109, %v3107
      %v3211 = vpack.c.bf16 %v3110, %v3108
      %v3212 = vpack.c.bf16 %v1984, %v1983
      %v3213 = vpack.c.bf16 %v3113, %v3111
      %v3214 = vpack.c.bf16 %v3114, %v3112
      %v3215 = vpack.c.bf16 %v1986, %v1985
      %v3216 = vpack.c.bf16 %v3117, %v3115
      %v3217 = vpack.c.bf16 %v3118, %v3116
      %v3218 = vpack.c.bf16 %v1988, %v1987
      %v3219 = vpack.c.bf16 %v3121, %v3119
      %v3220 = vpack.c.bf16 %v3122, %v3120
      %v3221 = vpack.c.bf16 %v1990, %v1989
      %v3222 = vpack.c.bf16 %v3125, %v3123
      %v3223 = vpack.c.bf16 %v3126, %v3124
      %v3224 = vpack.c.bf16 %v1992, %v1991
      %v3225 = vpack.c.bf16 %v3129, %v3127
      %v3226 = vpack.c.bf16 %v3130, %v3128
      %v3227 = vpack.c.bf16 %v1994, %v1993
      %v3228 = vpack.c.bf16 %v3133, %v3131
      %v3229 = vpack.c.bf16 %v3134, %v3132
      %v3230 = vpack.c.bf16 %v1996, %v1995
      %v3231 = vld [vmem:[%s4] sm:$0xff]
      %v3232 = vld [vmem:[%s4 + $0x8] sm:$0xff]
      %v3233 = vld [vmem:[%s4 + $0x10] sm:$0xff]
      %v3234 = vld [vmem:[%s4 + $0x18] sm:$0xff]
      %v3235 = vld [vmem:[%s4 + $0x20] sm:$0xff]
      %v3236 = vld [vmem:[%s4 + $0x28] sm:$0xff]
      %v3237 = vld [vmem:[%s4 + $0x30] sm:$0xff]
      %v3238 = vld [vmem:[%s4 + $0x38] sm:$0xff]
      %v3239 = vld [vmem:[%s4 + $0x40] sm:$0xff]
      %v3240 = vld [vmem:[%s4 + $0x48] sm:$0xff]
      %v3241 = vld [vmem:[%s4 + $0x50] sm:$0xff]
      %v3242 = vld [vmem:[%s4 + $0x58] sm:$0xff]
      %v3243 = vld [vmem:[%s4 + $0x60] sm:$0xff]
      %v3244 = vld [vmem:[%s4 + $0x68] sm:$0xff]
      %v3245 = vld [vmem:[%s4 + $0x70] sm:$0xff]
      %v3246 = vld [vmem:[%s4 + $0x78] sm:$0xff]
      %v3247 = vld [vmem:[%s4 + $0x80] sm:$0xff]
      %v3248 = vld [vmem:[%s4 + $0x88] sm:$0xff]
      %v3249 = vld [vmem:[%s4 + $0x90] sm:$0xff]
      %v3250 = vld [vmem:[%s4 + $0x98] sm:$0xff]
      %v3251 = vld [vmem:[%s4 + $0xa0] sm:$0xff]
      %v3252 = vld [vmem:[%s4 + $0xa8] sm:$0xff]
      %v3253 = vld [vmem:[%s4 + $0xb0] sm:$0xff]
      %v3254 = vld [vmem:[%s4 + $0xb8] sm:$0xff]
      %v3255 = vld [vmem:[%s4 + $0xc0] sm:$0xff]
      %v3256 = vld [vmem:[%s4 + $0xc8] sm:$0xff]
      %v3257 = vld [vmem:[%s4 + $0xd0] sm:$0xff]
      %v3258 = vld [vmem:[%s4 + $0xd8] sm:$0xff]
      %v3259 = vld [vmem:[%s4 + $0xe0] sm:$0xff]
      %v3260 = vld [vmem:[%s4 + $0xe8] sm:$0xff]
      %v3261 = vld [vmem:[%s4 + $0xf0] sm:$0xff]
      %v3262 = vld [vmem:[%s4 + $0xf8] sm:$0xff]
      %v3263 = vld [vmem:[%s4 + $0x100] sm:$0xff]
      %v3264 = vld [vmem:[%s4 + $0x108] sm:$0xff]
      %v3265 = vld [vmem:[%s4 + $0x110] sm:$0xff]
      %v3266 = vld [vmem:[%s4 + $0x118] sm:$0xff]
      %v3267 = vld [vmem:[%s5] sm:$0x3]
      %v3269 = vlaneseq
      %v3270 = vshrl.u32 %v3269, 7
      %v3271 = vsub.s32 0, %v3270
      %v3272 = vrot.slane %v3267, %v3271
      %v3273 = vlaneseq
      %v3274 = vshrl.u32 %v3273, 7
      %v3275 = vsub.s32 1, %v3274
      %v3276 = vrot.slane %v3267, %v3275
      %v3315 = vunpack.c.l.b16 %v3231
      %v3316 = vunpack.c.h.b16 %v3231
      %v3317 = vunpack.c.l.b16 %v3232
      %v3318 = vunpack.c.h.b16 %v3232
      %v3319 = vunpack.c.l.b16 %v3233
      %v3320 = vunpack.c.h.b16 %v3233
      %v3321 = vunpack.c.l.b16 %v3234
      %v3322 = vunpack.c.h.b16 %v3234
      %v3323 = vunpack.c.l.b16 %v3235
      %v3324 = vunpack.c.h.b16 %v3235
      %v3325 = vunpack.c.l.b16 %v3236
      %v3326 = vunpack.c.h.b16 %v3236
      %v3327 = vunpack.c.l.b16 %v3237
      %v3328 = vunpack.c.h.b16 %v3237
      %v3329 = vunpack.c.l.b16 %v3238
      %v3330 = vunpack.c.h.b16 %v3238
      %v3331 = vunpack.c.l.b16 %v3239
      %v3332 = vunpack.c.h.b16 %v3239
      %v3333 = vunpack.c.l.b16 %v3240
      %v3334 = vunpack.c.h.b16 %v3240
      %v3335 = vunpack.c.l.b16 %v3241
      %v3336 = vunpack.c.h.b16 %v3241
      %v3337 = vunpack.c.l.b16 %v3242
      %v3338 = vunpack.c.h.b16 %v3242
      %v3339 = vunpack.c.l.b16 %v3243
      %v3340 = vunpack.c.h.b16 %v3243
      %v3341 = vunpack.c.l.b16 %v3244
      %v3342 = vunpack.c.h.b16 %v3244
      %v3343 = vunpack.c.l.b16 %v3245
      %v3344 = vunpack.c.h.b16 %v3245
      %v3345 = vunpack.c.l.b16 %v3246
      %v3346 = vunpack.c.h.b16 %v3246
      %v3347 = vunpack.c.l.b16 %v3247
      %v3348 = vunpack.c.h.b16 %v3247
      %v3349 = vunpack.c.l.b16 %v3248
      %v3350 = vunpack.c.h.b16 %v3248
      %v3351 = vunpack.c.l.b16 %v3249
      %v3352 = vunpack.c.h.b16 %v3249
      %v3353 = vunpack.c.l.b16 %v3250
      %v3354 = vunpack.c.h.b16 %v3250
      %v3355 = vunpack.c.l.b16 %v3251
      %v3356 = vunpack.c.h.b16 %v3251
      %v3357 = vunpack.c.l.b16 %v3252
      %v3358 = vunpack.c.h.b16 %v3252
      %v3359 = vunpack.c.l.b16 %v3253
      %v3360 = vunpack.c.h.b16 %v3253
      %v3361 = vunpack.c.l.b16 %v3254
      %v3362 = vunpack.c.h.b16 %v3254
      %v3363 = vunpack.c.l.b16 %v3255
      %v3364 = vunpack.c.h.b16 %v3255
      %v3365 = vunpack.c.l.b16 %v3256
      %v3366 = vunpack.c.h.b16 %v3256
      %v3367 = vunpack.c.l.b16 %v3257
      %v3368 = vunpack.c.h.b16 %v3257
      %v3369 = vunpack.c.l.b16 %v3258
      %v3370 = vunpack.c.h.b16 %v3258
      %v3371 = vunpack.c.l.b16 %v3259
      %v3372 = vunpack.c.h.b16 %v3259
      %v3373 = vunpack.c.l.b16 %v3260
      %v3374 = vunpack.c.h.b16 %v3260
      %v3375 = vunpack.c.l.b16 %v3261
      %v3376 = vunpack.c.h.b16 %v3261
      %v3377 = vunpack.c.l.b16 %v3262
      %v3378 = vunpack.c.h.b16 %v3262
      %v3379 = vunpack.c.l.b16 %v3263
      %v3380 = vunpack.c.h.b16 %v3263
      %v3381 = vunpack.c.l.b16 %v3264
      %v3382 = vunpack.c.h.b16 %v3264
      %v3383 = vunpack.c.l.b16 %v3265
      %v3384 = vunpack.c.h.b16 %v3265
      %v3385 = vunpack.c.l.b16 %v3266
      %v3386 = vunpack.c.h.b16 %v3266
      %v3387 = vpack.c.b16 %v3317, %v3315
      %v3388 = vpack.c.b16 %v3318, %v3316
      %v3389 = vpack.c.b16 %v3321, %v3319
      %v3390 = vpack.c.b16 %v3322, %v3320
      %v3391 = vpack.c.b16 %v3325, %v3323
      %v3392 = vpack.c.b16 %v3326, %v3324
      %v3393 = vpack.c.b16 %v3329, %v3327
      %v3394 = vpack.c.b16 %v3330, %v3328
      %v3395 = vpack.c.b16 %v3333, %v3331
      %v3396 = vpack.c.b16 %v3334, %v3332
      %v3397 = vpack.c.b16 %v3337, %v3335
      %v3398 = vpack.c.b16 %v3338, %v3336
      %v3399 = vpack.c.b16 %v3341, %v3339
      %v3400 = vpack.c.b16 %v3342, %v3340
      %v3401 = vpack.c.b16 %v3345, %v3343
      %v3402 = vpack.c.b16 %v3346, %v3344
      %v3403 = vpack.c.b16 %v3349, %v3347
      %v3404 = vpack.c.b16 %v3350, %v3348
      %v3405 = vpack.c.b16 %v3353, %v3351
      %v3406 = vpack.c.b16 %v3354, %v3352
      %v3407 = vpack.c.b16 %v3357, %v3355
      %v3408 = vpack.c.b16 %v3358, %v3356
      %v3409 = vpack.c.b16 %v3361, %v3359
      %v3410 = vpack.c.b16 %v3362, %v3360
      %v3411 = vpack.c.b16 %v3365, %v3363
      %v3412 = vpack.c.b16 %v3366, %v3364
      %v3413 = vpack.c.b16 %v3369, %v3367
      %v3414 = vpack.c.b16 %v3370, %v3368
      %v3415 = vpack.c.b16 %v3373, %v3371
      %v3416 = vpack.c.b16 %v3374, %v3372
      %v3417 = vpack.c.b16 %v3377, %v3375
      %v3418 = vpack.c.b16 %v3378, %v3376
      %v3419 = vpack.c.b16 %v3381, %v3379
      %v3420 = vpack.c.b16 %v3382, %v3380
      %v3421 = vpack.c.b16 %v3385, %v3383
      %v3422 = vpack.c.b16 %v3386, %v3384
      %vm3459 = vcmask 261120
      %v3461 = vsel %vm3459, %v3137, 0
      %v3464 = vsel %vm3459, %v3140, 0
      %v3467 = vsel %vm3459, %v3143, 0
      %v3470 = vsel %vm3459, %v3146, 0
      %v3473 = vsel %vm3459, %v3149, 0
      %v3476 = vsel %vm3459, %v3152, 0
      %v3479 = vsel %vm3459, %v3155, 0
      %v3482 = vsel %vm3459, %v3158, 0
      %v3485 = vsel %vm3459, %v3161, 0
      %v3488 = vsel %vm3459, %v3164, 0
      %v3491 = vsel %vm3459, %v3167, 0
      %v3494 = vsel %vm3459, %v3170, 0
      %v3497 = vsel %vm3459, %v3173, 0
      %v3500 = vsel %vm3459, %v3176, 0
      %v3503 = vsel %vm3459, %v3179, 0
      %v3506 = vsel %vm3459, %v3182, 0
      %v3509 = vsel %vm3459, %v3185, 0
      %v3512 = vsel %vm3459, %v3188, 0
      %v3515 = vsel %vm3459, %v3191, 0
      %v3518 = vsel %vm3459, %v3194, 0
      %v3521 = vsel %vm3459, %v3197, 0
      %v3524 = vsel %vm3459, %v3200, 0
      %v3527 = vsel %vm3459, %v3203, 0
      %v3530 = vsel %vm3459, %v3206, 0
      %v3533 = vsel %vm3459, %v3209, 0
      %v3536 = vsel %vm3459, %v3212, 0
      %v3539 = vsel %vm3459, %v3215, 0
      %v3542 = vsel %vm3459, %v3218, 0
      %v3545 = vsel %vm3459, %v3221, 0
      %v3548 = vsel %vm3459, %v3224, 0
      %v3551 = vsel %vm3459, %v3227, 0
      %v3554 = vsel %vm3459, %v3230, 0
      %3556 = vmatprep.subr.bf16.mxu0 %v3388
      %3557 = vmatpush1.bf16.msra.mxu0 %v3387
      %3558 = vmatprep.subr.bf16.mxu0 %v3390
      %3559 = vmatpush1.bf16.msra.mxu0 %v3389
      %3560 = vmatprep.subr.bf16.mxu0 %v3392
      %3561 = vmatpush1.bf16.msra.mxu0 %v3391
      %3562 = vmatprep.subr.bf16.mxu0 %v3394
      %3563 = vmatpush1.bf16.msra.mxu0 %v3393
      %3564 = vmatprep.subr.bf16.mxu0 %v3396
      %3565 = vmatpush1.bf16.msra.mxu0 %v3395
      %3566 = vmatprep.subr.bf16.mxu0 %v3398
      %3567 = vmatpush1.bf16.msra.mxu0 %v3397
      %3568 = vmatprep.subr.bf16.mxu0 %v3400
      %3569 = vmatpush1.bf16.msra.mxu0 %v3399
      %3570 = vmatprep.subr.bf16.mxu0 %v3402
      %3571 = vmatpush1.bf16.msra.mxu0 %v3401
      %3572 = vmatprep.subr.bf16.mxu0 %v3404
      %3573 = vmatpush1.bf16.msra.mxu0 %v3403
      %3574 = vmatprep.subr.bf16.mxu0 %v3406
      %3575 = vmatpush1.bf16.msra.mxu0 %v3405
      %3576 = vmatprep.subr.bf16.mxu0 %v3408
      %3577 = vmatpush1.bf16.msra.mxu0 %v3407
      %3578 = vmatprep.subr.bf16.mxu0 %v3410
      %3579 = vmatpush1.bf16.msra.mxu0 %v3409
      %3580 = vmatprep.subr.bf16.mxu0 %v3412
      %3581 = vmatpush1.bf16.msra.mxu0 %v3411
      %3582 = vmatprep.subr.bf16.mxu0 %v3414
      %3583 = vmatpush1.bf16.msra.mxu0 %v3413
      %3584 = vmatprep.subr.bf16.mxu0 %v3416
      %3585 = vmatpush1.bf16.msra.mxu0 %v3415
      %3586 = vmatprep.subr.bf16.mxu0 %v3418
      %3587 = vmatpush1.bf16.msra.mxu0 %v3417
      %3588 = vmatprep.mubr.bf16.mxu0 %v3136
      %3589 = vmatmul.mubr.bf16.gmra.mrb[0].mxu0 %v3135
      %v3590 = vpop.f32.mrb[0].mxu0
      %v3591 = vadd.f32 %v3272, %v3590
      %v3592 = vpop.f32.mrb[0].mxu0
      %v3593 = vadd.f32 %v3276, %v3592
      %v3594 = vpop.f32.mrb[0].mxu0
      %v3595 = vadd.f32 %v3272, %v3594
      %v3596 = vpop.f32.mrb[0].mxu0
      %v3597 = vadd.f32 %v3276, %v3596
      %3598 = vmatprep.mubr.bf16.mxu0 %v3139
      %3599 = vmatmul.mubr.bf16.gmra.mrb[0].mxu0 %v3138
      %v3600 = vpop.f32.mrb[0].mxu0
      %v3601 = vadd.f32 %v3272, %v3600
      %v3602 = vpop.f32.mrb[0].mxu0
      %v3603 = vadd.f32 %v3276, %v3602
      %v3604 = vpop.f32.mrb[0].mxu0
      %v3605 = vadd.f32 %v3272, %v3604
      %v3606 = vpop.f32.mrb[0].mxu0
      %v3607 = vadd.f32 %v3276, %v3606
      %3608 = vmatprep.mubr.bf16.mxu0 %v3142
      %3609 = vmatmul.mubr.bf16.gmra.mrb[0].mxu0 %v3141
      %v3610 = vpop.f32.mrb[0].mxu0
      %v3611 = vadd.f32 %v3272, %v3610
      %v3612 = vpop.f32.mrb[0].mxu0
      %v3613 = vadd.f32 %v3276, %v3612
      %v3614 = vpop.f32.mrb[0].mxu0
      %v3615 = vadd.f32 %v3272, %v3614
      %v3616 = vpop.f32.mrb[0].mxu0
      %v3617 = vadd.f32 %v3276, %v3616
      %3618 = vmatprep.mubr.bf16.mxu0 %v3145
      %3619 = vmatmul.mubr.bf16.gmra.mrb[0].mxu0 %v3144
      %v3620 = vpop.f32.mrb[0].mxu0
      %v3621 = vadd.f32 %v3272, %v3620
      %v3622 = vpop.f32.mrb[0].mxu0
      %v3623 = vadd.f32 %v3276, %v3622
      %v3624 = vpop.f32.mrb[0].mxu0
      %v3625 = vadd.f32 %v3272, %v3624
      %v3626 = vpop.f32.mrb[0].mxu0
      %v3627 = vadd.f32 %v3276, %v3626
      %3628 = vmatprep.mubr.bf16.mxu0 %v3148
      %3629 = vmatmul.mubr.bf16.gmra.mrb[0].mxu0 %v3147
      %v3630 = vpop.f32.mrb[0].mxu0
      %v3631 = vadd.f32 %v3272, %v3630
      %v3632 = vpop.f32.mrb[0].mxu0
      %v3633 = vadd.f32 %v3276, %v3632
      %v3634 = vpop.f32.mrb[0].mxu0
      %v3635 = vadd.f32 %v3272, %v3634
      %v3636 = vpop.f32.mrb[0].mxu0
      %v3637 = vadd.f32 %v3276, %v3636
      %3638 = vmatprep.mubr.bf16.mxu0 %v3151
      %3639 = vmatmul.mubr.bf16.gmra.mrb[0].mxu0 %v3150
      %v3640 = vpop.f32.mrb[0].mxu0
      %v3641 = vadd.f32 %v3272, %v3640
      %v3642 = vpop.f32.mrb[0].mxu0
      %v3643 = vadd.f32 %v3276, %v3642
      %v3644 = vpop.f32.mrb[0].mxu0
      %v3645 = vadd.f32 %v3272, %v3644
      %v3646 = vpop.f32.mrb[0].mxu0
      %v3647 = vadd.f32 %v3276, %v3646
      %3648 = vmatprep.mubr.bf16.mxu0 %v3154
      %3649 = vmatmul.mubr.bf16.gmra.mrb[0].mxu0 %v3153
      %v3650 = vpop.f32.mrb[0].mxu0
      %v3651 = vadd.f32 %v3272, %v3650
      %v3652 = vpop.f32.mrb[0].mxu0
      %v3653 = vadd.f32 %v3276, %v3652
      %v3654 = vpop.f32.mrb[0].mxu0
      %v3655 = vadd.f32 %v3272, %v3654
      %v3656 = vpop.f32.mrb[0].mxu0
      %v3657 = vadd.f32 %v3276, %v3656
      %3658 = vmatprep.mubr.bf16.mxu0 %v3157
      %3659 = vmatmul.mubr.bf16.gmra.mrb[0].mxu0 %v3156
      %v3660 = vpop.f32.mrb[0].mxu0
      %v3661 = vadd.f32 %v3272, %v3660
      %v3662 = vpop.f32.mrb[0].mxu0
      %v3663 = vadd.f32 %v3276, %v3662
      %v3664 = vpop.f32.mrb[0].mxu0
      %v3665 = vadd.f32 %v3272, %v3664
      %v3666 = vpop.f32.mrb[0].mxu0
      %v3667 = vadd.f32 %v3276, %v3666
      %3668 = vmatprep.mubr.bf16.mxu0 %v3160
      %3669 = vmatmul.mubr.bf16.gmra.mrb[0].mxu0 %v3159
      %v3670 = vpop.f32.mrb[0].mxu0
      %v3671 = vadd.f32 %v3272, %v3670
      %v3672 = vpop.f32.mrb[0].mxu0
      %v3673 = vadd.f32 %v3276, %v3672
      %v3674 = vpop.f32.mrb[0].mxu0
      %v3675 = vadd.f32 %v3272, %v3674
      %v3676 = vpop.f32.mrb[0].mxu0
      %v3677 = vadd.f32 %v3276, %v3676
      %3678 = vmatprep.mubr.bf16.mxu0 %v3163
      %3679 = vmatmul.mubr.bf16.gmra.mrb[0].mxu0 %v3162
      %v3680 = vpop.f32.mrb[0].mxu0
      %v3681 = vadd.f32 %v3272, %v3680
      %v3682 = vpop.f32.mrb[0].mxu0
      %v3683 = vadd.f32 %v3276, %v3682
      %v3684 = vpop.f32.mrb[0].mxu0
      %v3685 = vadd.f32 %v3272, %v3684
      %v3686 = vpop.f32.mrb[0].mxu0
      %v3687 = vadd.f32 %v3276, %v3686
      %3688 = vmatprep.mubr.bf16.mxu0 %v3166
      %3689 = vmatmul.mubr.bf16.gmra.mrb[0].mxu0 %v3165
      %v3690 = vpop.f32.mrb[0].mxu0
      %v3691 = vadd.f32 %v3272, %v3690
      %v3692 = vpop.f32.mrb[0].mxu0
      %v3693 = vadd.f32 %v3276, %v3692
      %v3694 = vpop.f32.mrb[0].mxu0
      %v3695 = vadd.f32 %v3272, %v3694
      %v3696 = vpop.f32.mrb[0].mxu0
      %v3697 = vadd.f32 %v3276, %v3696
      %3698 = vmatprep.mubr.bf16.mxu0 %v3169
      %3699 = vmatmul.mubr.bf16.gmra.mrb[0].mxu0 %v3168
      %v3700 = vpop.f32.mrb[0].mxu0
      %v3701 = vadd.f32 %v3272, %v3700
      %v3702 = vpop.f32.mrb[0].mxu0
      %v3703 = vadd.f32 %v3276, %v3702
      %v3704 = vpop.f32.mrb[0].mxu0
      %v3705 = vadd.f32 %v3272, %v3704
      %v3706 = vpop.f32.mrb[0].mxu0
      %v3707 = vadd.f32 %v3276, %v3706
      %3708 = vmatprep.mubr.bf16.mxu0 %v3172
      %3709 = vmatmul.mubr.bf16.gmra.mrb[0].mxu0 %v3171
      %v3710 = vpop.f32.mrb[0].mxu0
      %v3711 = vadd.f32 %v3272, %v3710
      %v3712 = vpop.f32.mrb[0].mxu0
      %v3713 = vadd.f32 %v3276, %v3712
      %v3714 = vpop.f32.mrb[0].mxu0
      %v3715 = vadd.f32 %v3272, %v3714
      %v3716 = vpop.f32.mrb[0].mxu0
      %v3717 = vadd.f32 %v3276, %v3716
      %3718 = vmatprep.mubr.bf16.mxu0 %v3175
      %3719 = vmatmul.mubr.bf16.gmra.mrb[0].mxu0 %v3174
      %v3720 = vpop.f32.mrb[0].mxu0
      %v3721 = vadd.f32 %v3272, %v3720
      %v3722 = vpop.f32.mrb[0].mxu0
      %v3723 = vadd.f32 %v3276, %v3722
      %v3724 = vpop.f32.mrb[0].mxu0
      %v3725 = vadd.f32 %v3272, %v3724
      %v3726 = vpop.f32.mrb[0].mxu0
      %v3727 = vadd.f32 %v3276, %v3726
      %3728 = vmatprep.mubr.bf16.mxu0 %v3178
      %3729 = vmatmul.mubr.bf16.gmra.mrb[0].mxu0 %v3177
      %v3730 = vpop.f32.mrb[0].mxu0
      %v3731 = vadd.f32 %v3272, %v3730
      %v3732 = vpop.f32.mrb[0].mxu0
      %v3733 = vadd.f32 %v3276, %v3732
      %v3734 = vpop.f32.mrb[0].mxu0
      %v3735 = vadd.f32 %v3272, %v3734
      %v3736 = vpop.f32.mrb[0].mxu0
      %v3737 = vadd.f32 %v3276, %v3736
      %3738 = vmatprep.mubr.bf16.mxu0 %v3181
      %3739 = vmatmul.mubr.bf16.gmra.mrb[0].mxu0 %v3180
      %v3740 = vpop.f32.mrb[0].mxu0
      %v3741 = vadd.f32 %v3272, %v3740
      %v3742 = vpop.f32.mrb[0].mxu0
      %v3743 = vadd.f32 %v3276, %v3742
      %v3744 = vpop.f32.mrb[0].mxu0
      %v3745 = vadd.f32 %v3272, %v3744
      %v3746 = vpop.f32.mrb[0].mxu0
      %v3747 = vadd.f32 %v3276, %v3746
      %3748 = vmatprep.mubr.bf16.mxu0 %v3184
      %3749 = vmatmul.mubr.bf16.gmra.mrb[0].mxu0 %v3183
      %v3750 = vpop.f32.mrb[0].mxu0
      %v3751 = vadd.f32 %v3272, %v3750
      %v3752 = vpop.f32.mrb[0].mxu0
      %v3753 = vadd.f32 %v3276, %v3752
      %v3754 = vpop.f32.mrb[0].mxu0
      %v3755 = vadd.f32 %v3272, %v3754
      %v3756 = vpop.f32.mrb[0].mxu0
      %v3757 = vadd.f32 %v3276, %v3756
      %3758 = vmatprep.mubr.bf16.mxu0 %v3187
      %3759 = vmatmul.mubr.bf16.gmra.mrb[0].mxu0 %v3186
      %v3760 = vpop.f32.mrb[0].mxu0
      %v3761 = vadd.f32 %v3272, %v3760
      %v3762 = vpop.f32.mrb[0].mxu0
      %v3763 = vadd.f32 %v3276, %v3762
      %v3764 = vpop.f32.mrb[0].mxu0
      %v3765 = vadd.f32 %v3272, %v3764
      %v3766 = vpop.f32.mrb[0].mxu0
      %v3767 = vadd.f32 %v3276, %v3766
      %3768 = vmatprep.mubr.bf16.mxu0 %v3190
      %3769 = vmatmul.mubr.bf16.gmra.mrb[0].mxu0 %v3189
      %v3770 = vpop.f32.mrb[0].mxu0
      %v3771 = vadd.f32 %v3272, %v3770
      %v3772 = vpop.f32.mrb[0].mxu0
      %v3773 = vadd.f32 %v3276, %v3772
      %v3774 = vpop.f32.mrb[0].mxu0
      %v3775 = vadd.f32 %v3272, %v3774
      %v3776 = vpop.f32.mrb[0].mxu0
      %v3777 = vadd.f32 %v3276, %v3776
      %3778 = vmatprep.mubr.bf16.mxu0 %v3193
      %3779 = vmatmul.mubr.bf16.gmra.mrb[0].mxu0 %v3192
      %v3780 = vpop.f32.mrb[0].mxu0
      %v3781 = vadd.f32 %v3272, %v3780
      %v3782 = vpop.f32.mrb[0].mxu0
      %v3783 = vadd.f32 %v3276, %v3782
      %v3784 = vpop.f32.mrb[0].mxu0
      %v3785 = vadd.f32 %v3272, %v3784
      %v3786 = vpop.f32.mrb[0].mxu0
      %v3787 = vadd.f32 %v3276, %v3786
      %3788 = vmatprep.mubr.bf16.mxu0 %v3196
      %3789 = vmatmul.mubr.bf16.gmra.mrb[0].mxu0 %v3195
      %v3790 = vpop.f32.mrb[0].mxu0
      %v3791 = vadd.f32 %v3272, %v3790
      %v3792 = vpop.f32.mrb[0].mxu0
      %v3793 = vadd.f32 %v3276, %v3792
      %v3794 = vpop.f32.mrb[0].mxu0
      %v3795 = vadd.f32 %v3272, %v3794
      %v3796 = vpop.f32.mrb[0].mxu0
      %v3797 = vadd.f32 %v3276, %v3796
      %3798 = vmatprep.mubr.bf16.mxu0 %v3199
      %3799 = vmatmul.mubr.bf16.gmra.mrb[0].mxu0 %v3198
      %v3800 = vpop.f32.mrb[0].mxu0
      %v3801 = vadd.f32 %v3272, %v3800
      %v3802 = vpop.f32.mrb[0].mxu0
      %v3803 = vadd.f32 %v3276, %v3802
      %v3804 = vpop.f32.mrb[0].mxu0
      %v3805 = vadd.f32 %v3272, %v3804
      %v3806 = vpop.f32.mrb[0].mxu0
      %v3807 = vadd.f32 %v3276, %v3806
      %3808 = vmatprep.mubr.bf16.mxu0 %v3202
      %3809 = vmatmul.mubr.bf16.gmra.mrb[0].mxu0 %v3201
      %v3810 = vpop.f32.mrb[0].mxu0
      %v3811 = vadd.f32 %v3272, %v3810
      %v3812 = vpop.f32.mrb[0].mxu0
      %v3813 = vadd.f32 %v3276, %v3812
      %v3814 = vpop.f32.mrb[0].mxu0
      %v3815 = vadd.f32 %v3272, %v3814
      %v3816 = vpop.f32.mrb[0].mxu0
      %v3817 = vadd.f32 %v3276, %v3816
      %3818 = vmatprep.mubr.bf16.mxu0 %v3205
      %3819 = vmatmul.mubr.bf16.gmra.mrb[0].mxu0 %v3204
      %v3820 = vpop.f32.mrb[0].mxu0
      %v3821 = vadd.f32 %v3272, %v3820
      %v3822 = vpop.f32.mrb[0].mxu0
      %v3823 = vadd.f32 %v3276, %v3822
      %v3824 = vpop.f32.mrb[0].mxu0
      %v3825 = vadd.f32 %v3272, %v3824
      %v3826 = vpop.f32.mrb[0].mxu0
      %v3827 = vadd.f32 %v3276, %v3826
      %3828 = vmatprep.mubr.bf16.mxu0 %v3208
      %3829 = vmatmul.mubr.bf16.gmra.mrb[0].mxu0 %v3207
      %v3830 = vpop.f32.mrb[0].mxu0
      %v3831 = vadd.f32 %v3272, %v3830
      %v3832 = vpop.f32.mrb[0].mxu0
      %v3833 = vadd.f32 %v3276, %v3832
      %v3834 = vpop.f32.mrb[0].mxu0
      %v3835 = vadd.f32 %v3272, %v3834
      %v3836 = vpop.f32.mrb[0].mxu0
      %v3837 = vadd.f32 %v3276, %v3836
      %3838 = vmatprep.mubr.bf16.mxu0 %v3211
      %3839 = vmatmul.mubr.bf16.gmra.mrb[0].mxu0 %v3210
      %v3840 = vpop.f32.mrb[0].mxu0
      %v3841 = vadd.f32 %v3272, %v3840
      %v3842 = vpop.f32.mrb[0].mxu0
      %v3843 = vadd.f32 %v3276, %v3842
      %v3844 = vpop.f32.mrb[0].mxu0
      %v3845 = vadd.f32 %v3272, %v3844
      %v3846 = vpop.f32.mrb[0].mxu0
      %v3847 = vadd.f32 %v3276, %v3846
      %3848 = vmatprep.mubr.bf16.mxu0 %v3214
      %3849 = vmatmul.mubr.bf16.gmra.mrb[0].mxu0 %v3213
      %v3850 = vpop.f32.mrb[0].mxu0
      %v3851 = vadd.f32 %v3272, %v3850
      %v3852 = vpop.f32.mrb[0].mxu0
      %v3853 = vadd.f32 %v3276, %v3852
      %v3854 = vpop.f32.mrb[0].mxu0
      %v3855 = vadd.f32 %v3272, %v3854
      %v3856 = vpop.f32.mrb[0].mxu0
      %v3857 = vadd.f32 %v3276, %v3856
      %3858 = vmatprep.mubr.bf16.mxu0 %v3217
      %3859 = vmatmul.mubr.bf16.gmra.mrb[0].mxu0 %v3216
      %v3860 = vpop.f32.mrb[0].mxu0
      %v3861 = vadd.f32 %v3272, %v3860
      %v3862 = vpop.f32.mrb[0].mxu0
      %v3863 = vadd.f32 %v3276, %v3862
      %v3864 = vpop.f32.mrb[0].mxu0
      %v3865 = vadd.f32 %v3272, %v3864
      %v3866 = vpop.f32.mrb[0].mxu0
      %v3867 = vadd.f32 %v3276, %v3866
      %3868 = vmatprep.mubr.bf16.mxu0 %v3220
      %3869 = vmatmul.mubr.bf16.gmra.mrb[0].mxu0 %v3219
      %v3870 = vpop.f32.mrb[0].mxu0
      %v3871 = vadd.f32 %v3272, %v3870
      %v3872 = vpop.f32.mrb[0].mxu0
      %v3873 = vadd.f32 %v3276, %v3872
      %v3874 = vpop.f32.mrb[0].mxu0
      %v3875 = vadd.f32 %v3272, %v3874
      %v3876 = vpop.f32.mrb[0].mxu0
      %v3877 = vadd.f32 %v3276, %v3876
      %3878 = vmatprep.mubr.bf16.mxu0 %v3223
      %3879 = vmatmul.mubr.bf16.gmra.mrb[0].mxu0 %v3222
      %v3880 = vpop.f32.mrb[0].mxu0
      %v3881 = vadd.f32 %v3272, %v3880
      %v3882 = vpop.f32.mrb[0].mxu0
      %v3883 = vadd.f32 %v3276, %v3882
      %v3884 = vpop.f32.mrb[0].mxu0
      %v3885 = vadd.f32 %v3272, %v3884
      %v3886 = vpop.f32.mrb[0].mxu0
      %v3887 = vadd.f32 %v3276, %v3886
      %3888 = vmatprep.mubr.bf16.mxu0 %v3226
      %3889 = vmatmul.mubr.bf16.gmra.mrb[0].mxu0 %v3225
      %v3890 = vpop.f32.mrb[0].mxu0
      %v3891 = vadd.f32 %v3272, %v3890
      %v3892 = vpop.f32.mrb[0].mxu0
      %v3893 = vadd.f32 %v3276, %v3892
      %v3894 = vpop.f32.mrb[0].mxu0
      %v3895 = vadd.f32 %v3272, %v3894
      %v3896 = vpop.f32.mrb[0].mxu0
      %v3897 = vadd.f32 %v3276, %v3896
      %3898 = vmatprep.mubr.bf16.mxu0 %v3229
      %3899 = vmatmul.mubr.bf16.gmra.mrb[0].mxu0 %v3228
      %v3900 = vpop.f32.mrb[0].mxu0
      %v3901 = vadd.f32 %v3272, %v3900
      %v3902 = vpop.f32.mrb[0].mxu0
      %v3903 = vadd.f32 %v3276, %v3902
      %v3904 = vpop.f32.mrb[0].mxu0
      %v3905 = vadd.f32 %v3272, %v3904
      %v3906 = vpop.f32.mrb[0].mxu0
      %v3907 = vadd.f32 %v3276, %v3906
      %3908 = vdwg.mxu0
      %3909 = vmatprep.subr.bf16.mxu0 %v3420
      %3910 = vmatpush1.bf16.msra.mxu0 %v3419
      %3911 = vmatprep.subr.bf16.mxu0 %v3422
      %3912 = vmatpush1.bf16.msra.mxu0 %v3421
      %3913 = vmatprep.subr.bf16.mxu0 0
      %3914 = vmatpush1.bf16.msra.mxu0 0
      %3915 = vmatprep.subr.bf16.mxu0 0
      %3916 = vmatpush1.bf16.msra.mxu0 0
      %3917 = vmatprep.subr.bf16.mxu0 0
      %3918 = vmatpush1.bf16.msra.mxu0 0
      %3919 = vmatprep.subr.bf16.mxu0 0
      %3920 = vmatpush1.bf16.msra.mxu0 0
      %3921 = vmatprep.subr.bf16.mxu0 0
      %3922 = vmatpush1.bf16.msra.mxu0 0
      %3923 = vmatprep.subr.bf16.mxu0 0
      %3924 = vmatpush1.bf16.msra.mxu0 0
      %3925 = vmatprep.subr.bf16.mxu0 0
      %3926 = vmatpush1.bf16.msra.mxu0 0
      %3927 = vmatprep.subr.bf16.mxu0 0
      %3928 = vmatpush1.bf16.msra.mxu0 0
      %3929 = vmatprep.subr.bf16.mxu0 0
      %3930 = vmatpush1.bf16.msra.mxu0 0
      %3931 = vmatprep.subr.bf16.mxu0 0
      %3932 = vmatpush1.bf16.msra.mxu0 0
      %3933 = vmatprep.subr.bf16.mxu0 0
      %3934 = vmatpush1.bf16.msra.mxu0 0
      %3935 = vmatprep.subr.bf16.mxu0 0
      %3936 = vmatpush1.bf16.msra.mxu0 0
      %3937 = vmatprep.subr.bf16.mxu0 0
      %3938 = vmatpush1.bf16.msra.mxu0 0
      %3939 = vmatprep.subr.bf16.mxu0 0
      %3940 = vmatpush1.bf16.msra.mxu0 0
      %3941 = vmatprep.mubr.bf16.mxu0 0
      %3942 = vmatmul.mubr.bf16.gmra.mrb[0].mxu0 %v3461
      %v3943 = vpop.f32.mrb[0].mxu0
      %v3944 = vadd.f32 %v3591, %v3943
      %v3945 = vpop.f32.mrb[0].mxu0
      %v3946 = vadd.f32 %v3593, %v3945
      %v3947 = vpop.f32.mrb[0].mxu0
      %v3948 = vadd.f32 %v3595, %v3947
      %v3949 = vpop.f32.mrb[0].mxu0
      %v3950 = vadd.f32 %v3597, %v3949
      %3951 = vmatprep.mubr.bf16.mxu0 0
      %3952 = vmatmul.mubr.bf16.gmra.mrb[0].mxu0 %v3464
      %v3953 = vpop.f32.mrb[0].mxu0
      %v3954 = vadd.f32 %v3601, %v3953
      %v3955 = vpop.f32.mrb[0].mxu0
      %v3956 = vadd.f32 %v3603, %v3955
      %v3957 = vpop.f32.mrb[0].mxu0
      %v3958 = vadd.f32 %v3605, %v3957
      %v3959 = vpop.f32.mrb[0].mxu0
      %v3960 = vadd.f32 %v3607, %v3959
      %3961 = vmatprep.mubr.bf16.mxu0 0
      %3962 = vmatmul.mubr.bf16.gmra.mrb[0].mxu0 %v3467
      %v3963 = vpop.f32.mrb[0].mxu0
      %v3964 = vadd.f32 %v3611, %v3963
      %v3965 = vpop.f32.mrb[0].mxu0
      %v3966 = vadd.f32 %v3613, %v3965
      %v3967 = vpop.f32.mrb[0].mxu0
      %v3968 = vadd.f32 %v3615, %v3967
      %v3969 = vpop.f32.mrb[0].mxu0
      %v3970 = vadd.f32 %v3617, %v3969
      %3971 = vmatprep.mubr.bf16.mxu0 0
      %3972 = vmatmul.mubr.bf16.gmra.mrb[0].mxu0 %v3470
      %v3973 = vpop.f32.mrb[0].mxu0
      %v3974 = vadd.f32 %v3621, %v3973
      %v3975 = vpop.f32.mrb[0].mxu0
      %v3976 = vadd.f32 %v3623, %v3975
      %v3977 = vpop.f32.mrb[0].mxu0
      %v3978 = vadd.f32 %v3625, %v3977
      %v3979 = vpop.f32.mrb[0].mxu0
      %v3980 = vadd.f32 %v3627, %v3979
      %3981 = vmatprep.mubr.bf16.mxu0 0
      %3982 = vmatmul.mubr.bf16.gmra.mrb[0].mxu0 %v3473
      %v3983 = vpop.f32.mrb[0].mxu0
      %v3984 = vadd.f32 %v3631, %v3983
      %v3985 = vpop.f32.mrb[0].mxu0
      %v3986 = vadd.f32 %v3633, %v3985
      %v3987 = vpop.f32.mrb[0].mxu0
      %v3988 = vadd.f32 %v3635, %v3987
      %v3989 = vpop.f32.mrb[0].mxu0
      %v3990 = vadd.f32 %v3637, %v3989
      %3991 = vmatprep.mubr.bf16.mxu0 0
      %3992 = vmatmul.mubr.bf16.gmra.mrb[0].mxu0 %v3476
      %v3993 = vpop.f32.mrb[0].mxu0
      %v3994 = vadd.f32 %v3641, %v3993
      %v3995 = vpop.f32.mrb[0].mxu0
      %v3996 = vadd.f32 %v3643, %v3995
      %v3997 = vpop.f32.mrb[0].mxu0
      %v3998 = vadd.f32 %v3645, %v3997
      %v3999 = vpop.f32.mrb[0].mxu0
      %v4000 = vadd.f32 %v3647, %v3999
      %4001 = vmatprep.mubr.bf16.mxu0 0
      %4002 = vmatmul.mubr.bf16.gmra.mrb[0].mxu0 %v3479
      %v4003 = vpop.f32.mrb[0].mxu0
      %v4004 = vadd.f32 %v3651, %v4003
      %v4005 = vpop.f32.mrb[0].mxu0
      %v4006 = vadd.f32 %v3653, %v4005
      %v4007 = vpop.f32.mrb[0].mxu0
      %v4008 = vadd.f32 %v3655, %v4007
      %v4009 = vpop.f32.mrb[0].mxu0
      %v4010 = vadd.f32 %v3657, %v4009
      %4011 = vmatprep.mubr.bf16.mxu0 0
      %4012 = vmatmul.mubr.bf16.gmra.mrb[0].mxu0 %v3482
      %v4013 = vpop.f32.mrb[0].mxu0
      %v4014 = vadd.f32 %v3661, %v4013
      %v4015 = vpop.f32.mrb[0].mxu0
      %v4016 = vadd.f32 %v3663, %v4015
      %v4017 = vpop.f32.mrb[0].mxu0
      %v4018 = vadd.f32 %v3665, %v4017
      %v4019 = vpop.f32.mrb[0].mxu0
      %v4020 = vadd.f32 %v3667, %v4019
      %4021 = vmatprep.mubr.bf16.mxu0 0
      %4022 = vmatmul.mubr.bf16.gmra.mrb[0].mxu0 %v3485
      %v4023 = vpop.f32.mrb[0].mxu0
      %v4024 = vadd.f32 %v3671, %v4023
      %v4025 = vpop.f32.mrb[0].mxu0
      %v4026 = vadd.f32 %v3673, %v4025
      %v4027 = vpop.f32.mrb[0].mxu0
      %v4028 = vadd.f32 %v3675, %v4027
      %v4029 = vpop.f32.mrb[0].mxu0
      %v4030 = vadd.f32 %v3677, %v4029
      %4031 = vmatprep.mubr.bf16.mxu0 0
      %4032 = vmatmul.mubr.bf16.gmra.mrb[0].mxu0 %v3488
      %v4033 = vpop.f32.mrb[0].mxu0
      %v4034 = vadd.f32 %v3681, %v4033
      %v4035 = vpop.f32.mrb[0].mxu0
      %v4036 = vadd.f32 %v3683, %v4035
      %v4037 = vpop.f32.mrb[0].mxu0
      %v4038 = vadd.f32 %v3685, %v4037
      %v4039 = vpop.f32.mrb[0].mxu0
      %v4040 = vadd.f32 %v3687, %v4039
      %4041 = vmatprep.mubr.bf16.mxu0 0
      %4042 = vmatmul.mubr.bf16.gmra.mrb[0].mxu0 %v3491
      %v4043 = vpop.f32.mrb[0].mxu0
      %v4044 = vadd.f32 %v3691, %v4043
      %v4045 = vpop.f32.mrb[0].mxu0
      %v4046 = vadd.f32 %v3693, %v4045
      %v4047 = vpop.f32.mrb[0].mxu0
      %v4048 = vadd.f32 %v3695, %v4047
      %v4049 = vpop.f32.mrb[0].mxu0
      %v4050 = vadd.f32 %v3697, %v4049
      %4051 = vmatprep.mubr.bf16.mxu0 0
      %4052 = vmatmul.mubr.bf16.gmra.mrb[0].mxu0 %v3494
      %v4053 = vpop.f32.mrb[0].mxu0
      %v4054 = vadd.f32 %v3701, %v4053
      %v4055 = vpop.f32.mrb[0].mxu0
      %v4056 = vadd.f32 %v3703, %v4055
      %v4057 = vpop.f32.mrb[0].mxu0
      %v4058 = vadd.f32 %v3705, %v4057
      %v4059 = vpop.f32.mrb[0].mxu0
      %v4060 = vadd.f32 %v3707, %v4059
      %4061 = vmatprep.mubr.bf16.mxu0 0
      %4062 = vmatmul.mubr.bf16.gmra.mrb[0].mxu0 %v3497
      %v4063 = vpop.f32.mrb[0].mxu0
      %v4064 = vadd.f32 %v3711, %v4063
      %v4065 = vpop.f32.mrb[0].mxu0
      %v4066 = vadd.f32 %v3713, %v4065
      %v4067 = vpop.f32.mrb[0].mxu0
      %v4068 = vadd.f32 %v3715, %v4067
      %v4069 = vpop.f32.mrb[0].mxu0
      %v4070 = vadd.f32 %v3717, %v4069
      %4071 = vmatprep.mubr.bf16.mxu0 0
      %4072 = vmatmul.mubr.bf16.gmra.mrb[0].mxu0 %v3500
      %v4073 = vpop.f32.mrb[0].mxu0
      %v4074 = vadd.f32 %v3721, %v4073
      %v4075 = vpop.f32.mrb[0].mxu0
      %v4076 = vadd.f32 %v3723, %v4075
      %v4077 = vpop.f32.mrb[0].mxu0
      %v4078 = vadd.f32 %v3725, %v4077
      %v4079 = vpop.f32.mrb[0].mxu0
      %v4080 = vadd.f32 %v3727, %v4079
      %4081 = vmatprep.mubr.bf16.mxu0 0
      %4082 = vmatmul.mubr.bf16.gmra.mrb[0].mxu0 %v3503
      %v4083 = vpop.f32.mrb[0].mxu0
      %v4084 = vadd.f32 %v3731, %v4083
      %v4085 = vpop.f32.mrb[0].mxu0
      %v4086 = vadd.f32 %v3733, %v4085
      %v4087 = vpop.f32.mrb[0].mxu0
      %v4088 = vadd.f32 %v3735, %v4087
      %v4089 = vpop.f32.mrb[0].mxu0
      %v4090 = vadd.f32 %v3737, %v4089
      %4091 = vmatprep.mubr.bf16.mxu0 0
      %4092 = vmatmul.mubr.bf16.gmra.mrb[0].mxu0 %v3506
      %v4093 = vpop.f32.mrb[0].mxu0
      %v4094 = vadd.f32 %v3741, %v4093
      %v4095 = vpop.f32.mrb[0].mxu0
      %v4096 = vadd.f32 %v3743, %v4095
      %v4097 = vpop.f32.mrb[0].mxu0
      %v4098 = vadd.f32 %v3745, %v4097
      %v4099 = vpop.f32.mrb[0].mxu0
      %v4100 = vadd.f32 %v3747, %v4099
      %4101 = vmatprep.mubr.bf16.mxu0 0
      %4102 = vmatmul.mubr.bf16.gmra.mrb[0].mxu0 %v3509
      %v4103 = vpop.f32.mrb[0].mxu0
      %v4104 = vadd.f32 %v3751, %v4103
      %v4105 = vpop.f32.mrb[0].mxu0
      %v4106 = vadd.f32 %v3753, %v4105
      %v4107 = vpop.f32.mrb[0].mxu0
      %v4108 = vadd.f32 %v3755, %v4107
      %v4109 = vpop.f32.mrb[0].mxu0
      %v4110 = vadd.f32 %v3757, %v4109
      %4111 = vmatprep.mubr.bf16.mxu0 0
      %4112 = vmatmul.mubr.bf16.gmra.mrb[0].mxu0 %v3512
      %v4113 = vpop.f32.mrb[0].mxu0
      %v4114 = vadd.f32 %v3761, %v4113
      %v4115 = vpop.f32.mrb[0].mxu0
      %v4116 = vadd.f32 %v3763, %v4115
      %v4117 = vpop.f32.mrb[0].mxu0
      %v4118 = vadd.f32 %v3765, %v4117
      %v4119 = vpop.f32.mrb[0].mxu0
      %v4120 = vadd.f32 %v3767, %v4119
      %4121 = vmatprep.mubr.bf16.mxu0 0
      %4122 = vmatmul.mubr.bf16.gmra.mrb[0].mxu0 %v3515
      %v4123 = vpop.f32.mrb[0].mxu0
      %v4124 = vadd.f32 %v3771, %v4123
      %v4125 = vpop.f32.mrb[0].mxu0
      %v4126 = vadd.f32 %v3773, %v4125
      %v4127 = vpop.f32.mrb[0].mxu0
      %v4128 = vadd.f32 %v3775, %v4127
      %v4129 = vpop.f32.mrb[0].mxu0
      %v4130 = vadd.f32 %v3777, %v4129
      %4131 = vmatprep.mubr.bf16.mxu0 0
      %4132 = vmatmul.mubr.bf16.gmra.mrb[0].mxu0 %v3518
      %v4133 = vpop.f32.mrb[0].mxu0
      %v4134 = vadd.f32 %v3781, %v4133
      %v4135 = vpop.f32.mrb[0].mxu0
      %v4136 = vadd.f32 %v3783, %v4135
      %v4137 = vpop.f32.mrb[0].mxu0
      %v4138 = vadd.f32 %v3785, %v4137
      %v4139 = vpop.f32.mrb[0].mxu0
      %v4140 = vadd.f32 %v3787, %v4139
      %4141 = vmatprep.mubr.bf16.mxu0 0
      %4142 = vmatmul.mubr.bf16.gmra.mrb[0].mxu0 %v3521
      %v4143 = vpop.f32.mrb[0].mxu0
      %v4144 = vadd.f32 %v3791, %v4143
      %v4145 = vpop.f32.mrb[0].mxu0
      %v4146 = vadd.f32 %v3793, %v4145
      %v4147 = vpop.f32.mrb[0].mxu0
      %v4148 = vadd.f32 %v3795, %v4147
      %v4149 = vpop.f32.mrb[0].mxu0
      %v4150 = vadd.f32 %v3797, %v4149
      %4151 = vmatprep.mubr.bf16.mxu0 0
      %4152 = vmatmul.mubr.bf16.gmra.mrb[0].mxu0 %v3524
      %v4153 = vpop.f32.mrb[0].mxu0
      %v4154 = vadd.f32 %v3801, %v4153
      %v4155 = vpop.f32.mrb[0].mxu0
      %v4156 = vadd.f32 %v3803, %v4155
      %v4157 = vpop.f32.mrb[0].mxu0
      %v4158 = vadd.f32 %v3805, %v4157
      %v4159 = vpop.f32.mrb[0].mxu0
      %v4160 = vadd.f32 %v3807, %v4159
      %4161 = vmatprep.mubr.bf16.mxu0 0
      %4162 = vmatmul.mubr.bf16.gmra.mrb[0].mxu0 %v3527
      %v4163 = vpop.f32.mrb[0].mxu0
      %v4164 = vadd.f32 %v3811, %v4163
      %v4165 = vpop.f32.mrb[0].mxu0
      %v4166 = vadd.f32 %v3813, %v4165
      %v4167 = vpop.f32.mrb[0].mxu0
      %v4168 = vadd.f32 %v3815, %v4167
      %v4169 = vpop.f32.mrb[0].mxu0
      %v4170 = vadd.f32 %v3817, %v4169
      %4171 = vmatprep.mubr.bf16.mxu0 0
      %4172 = vmatmul.mubr.bf16.gmra.mrb[0].mxu0 %v3530
      %v4173 = vpop.f32.mrb[0].mxu0
      %v4174 = vadd.f32 %v3821, %v4173
      %v4175 = vpop.f32.mrb[0].mxu0
      %v4176 = vadd.f32 %v3823, %v4175
      %v4177 = vpop.f32.mrb[0].mxu0
      %v4178 = vadd.f32 %v3825, %v4177
      %v4179 = vpop.f32.mrb[0].mxu0
      %v4180 = vadd.f32 %v3827, %v4179
      %4181 = vmatprep.mubr.bf16.mxu0 0
      %4182 = vmatmul.mubr.bf16.gmra.mrb[0].mxu0 %v3533
      %v4183 = vpop.f32.mrb[0].mxu0
      %v4184 = vadd.f32 %v3831, %v4183
      %v4185 = vpop.f32.mrb[0].mxu0
      %v4186 = vadd.f32 %v3833, %v4185
      %v4187 = vpop.f32.mrb[0].mxu0
      %v4188 = vadd.f32 %v3835, %v4187
      %v4189 = vpop.f32.mrb[0].mxu0
      %v4190 = vadd.f32 %v3837, %v4189
      %4191 = vmatprep.mubr.bf16.mxu0 0
      %4192 = vmatmul.mubr.bf16.gmra.mrb[0].mxu0 %v3536
      %v4193 = vpop.f32.mrb[0].mxu0
      %v4194 = vadd.f32 %v3841, %v4193
      %v4195 = vpop.f32.mrb[0].mxu0
      %v4196 = vadd.f32 %v3843, %v4195
      %v4197 = vpop.f32.mrb[0].mxu0
      %v4198 = vadd.f32 %v3845, %v4197
      %v4199 = vpop.f32.mrb[0].mxu0
      %v4200 = vadd.f32 %v3847, %v4199
      %4201 = vmatprep.mubr.bf16.mxu0 0
      %4202 = vmatmul.mubr.bf16.gmra.mrb[0].mxu0 %v3539
      %v4203 = vpop.f32.mrb[0].mxu0
      %v4204 = vadd.f32 %v3851, %v4203
      %v4205 = vpop.f32.mrb[0].mxu0
      %v4206 = vadd.f32 %v3853, %v4205
      %v4207 = vpop.f32.mrb[0].mxu0
      %v4208 = vadd.f32 %v3855, %v4207
      %v4209 = vpop.f32.mrb[0].mxu0
      %v4210 = vadd.f32 %v3857, %v4209
      %4211 = vmatprep.mubr.bf16.mxu0 0
      %4212 = vmatmul.mubr.bf16.gmra.mrb[0].mxu0 %v3542
      %v4213 = vpop.f32.mrb[0].mxu0
      %v4214 = vadd.f32 %v3861, %v4213
      %v4215 = vpop.f32.mrb[0].mxu0
      %v4216 = vadd.f32 %v3863, %v4215
      %v4217 = vpop.f32.mrb[0].mxu0
      %v4218 = vadd.f32 %v3865, %v4217
      %v4219 = vpop.f32.mrb[0].mxu0
      %v4220 = vadd.f32 %v3867, %v4219
      %4221 = vmatprep.mubr.bf16.mxu0 0
      %4222 = vmatmul.mubr.bf16.gmra.mrb[0].mxu0 %v3545
      %v4223 = vpop.f32.mrb[0].mxu0
      %v4224 = vadd.f32 %v3871, %v4223
      %v4225 = vpop.f32.mrb[0].mxu0
      %v4226 = vadd.f32 %v3873, %v4225
      %v4227 = vpop.f32.mrb[0].mxu0
      %v4228 = vadd.f32 %v3875, %v4227
      %v4229 = vpop.f32.mrb[0].mxu0
      %v4230 = vadd.f32 %v3877, %v4229
      %4231 = vmatprep.mubr.bf16.mxu0 0
      %4232 = vmatmul.mubr.bf16.gmra.mrb[0].mxu0 %v3548
      %v4233 = vpop.f32.mrb[0].mxu0
      %v4234 = vadd.f32 %v3881, %v4233
      %v4235 = vpop.f32.mrb[0].mxu0
      %v4236 = vadd.f32 %v3883, %v4235
      %v4237 = vpop.f32.mrb[0].mxu0
      %v4238 = vadd.f32 %v3885, %v4237
      %v4239 = vpop.f32.mrb[0].mxu0
      %v4240 = vadd.f32 %v3887, %v4239
      %4241 = vmatprep.mubr.bf16.mxu0 0
      %4242 = vmatmul.mubr.bf16.gmra.mrb[0].mxu0 %v3551
      %v4243 = vpop.f32.mrb[0].mxu0
      %v4244 = vadd.f32 %v3891, %v4243
      %v4245 = vpop.f32.mrb[0].mxu0
      %v4246 = vadd.f32 %v3893, %v4245
      %v4247 = vpop.f32.mrb[0].mxu0
      %v4248 = vadd.f32 %v3895, %v4247
      %v4249 = vpop.f32.mrb[0].mxu0
      %v4250 = vadd.f32 %v3897, %v4249
      %4251 = vmatprep.mubr.bf16.mxu0 0
      %4252 = vmatmul.mubr.bf16.gmra.mrb[0].mxu0 %v3554
      %v4253 = vpop.f32.mrb[0].mxu0
      %v4254 = vadd.f32 %v3901, %v4253
      %v4255 = vpop.f32.mrb[0].mxu0
      %v4256 = vadd.f32 %v3903, %v4255
      %v4257 = vpop.f32.mrb[0].mxu0
      %v4258 = vadd.f32 %v3905, %v4257
      %v4259 = vpop.f32.mrb[0].mxu0
      %v4260 = vadd.f32 %v3907, %v4259
      %4261 = vdwg.mxu0
      %v4262 = vpack.c.bf16 %v3948, %v3944
      %v4263 = vpack.c.bf16 %v3950, %v3946
      %v4264 = vpack.c.bf16 %v3958, %v3954
      %v4265 = vpack.c.bf16 %v3960, %v3956
      %v4266 = vpack.c.bf16 %v3968, %v3964
      %v4267 = vpack.c.bf16 %v3970, %v3966
      %v4268 = vpack.c.bf16 %v3978, %v3974
      %v4269 = vpack.c.bf16 %v3980, %v3976
      %v4270 = vpack.c.bf16 %v3988, %v3984
      %v4271 = vpack.c.bf16 %v3990, %v3986
      %v4272 = vpack.c.bf16 %v3998, %v3994
      %v4273 = vpack.c.bf16 %v4000, %v3996
      %v4274 = vpack.c.bf16 %v4008, %v4004
      %v4275 = vpack.c.bf16 %v4010, %v4006
      %v4276 = vpack.c.bf16 %v4018, %v4014
      %v4277 = vpack.c.bf16 %v4020, %v4016
      %v4278 = vpack.c.bf16 %v4028, %v4024
      %v4279 = vpack.c.bf16 %v4030, %v4026
      %v4280 = vpack.c.bf16 %v4038, %v4034
      %v4281 = vpack.c.bf16 %v4040, %v4036
      %v4282 = vpack.c.bf16 %v4048, %v4044
      %v4283 = vpack.c.bf16 %v4050, %v4046
      %v4284 = vpack.c.bf16 %v4058, %v4054
      %v4285 = vpack.c.bf16 %v4060, %v4056
      %v4286 = vpack.c.bf16 %v4068, %v4064
      %v4287 = vpack.c.bf16 %v4070, %v4066
      %v4288 = vpack.c.bf16 %v4078, %v4074
      %v4289 = vpack.c.bf16 %v4080, %v4076
      %v4290 = vpack.c.bf16 %v4088, %v4084
      %v4291 = vpack.c.bf16 %v4090, %v4086
      %v4292 = vpack.c.bf16 %v4098, %v4094
      %v4293 = vpack.c.bf16 %v4100, %v4096
      %v4294 = vpack.c.bf16 %v4108, %v4104
      %v4295 = vpack.c.bf16 %v4110, %v4106
      %v4296 = vpack.c.bf16 %v4118, %v4114
      %v4297 = vpack.c.bf16 %v4120, %v4116
      %v4298 = vpack.c.bf16 %v4128, %v4124
      %v4299 = vpack.c.bf16 %v4130, %v4126
      %v4300 = vpack.c.bf16 %v4138, %v4134
      %v4301 = vpack.c.bf16 %v4140, %v4136
      %v4302 = vpack.c.bf16 %v4148, %v4144
      %v4303 = vpack.c.bf16 %v4150, %v4146
      %v4304 = vpack.c.bf16 %v4158, %v4154
      %v4305 = vpack.c.bf16 %v4160, %v4156
      %v4306 = vpack.c.bf16 %v4168, %v4164
      %v4307 = vpack.c.bf16 %v4170, %v4166
      %v4308 = vpack.c.bf16 %v4178, %v4174
      %v4309 = vpack.c.bf16 %v4180, %v4176
      %v4310 = vpack.c.bf16 %v4188, %v4184
      %v4311 = vpack.c.bf16 %v4190, %v4186
      %v4312 = vpack.c.bf16 %v4198, %v4194
      %v4313 = vpack.c.bf16 %v4200, %v4196
      %v4314 = vpack.c.bf16 %v4208, %v4204
      %v4315 = vpack.c.bf16 %v4210, %v4206
      %v4316 = vpack.c.bf16 %v4218, %v4214
      %v4317 = vpack.c.bf16 %v4220, %v4216
      %v4318 = vpack.c.bf16 %v4228, %v4224
      %v4319 = vpack.c.bf16 %v4230, %v4226
      %v4320 = vpack.c.bf16 %v4238, %v4234
      %v4321 = vpack.c.bf16 %v4240, %v4236
      %v4322 = vpack.c.bf16 %v4248, %v4244
      %v4323 = vpack.c.bf16 %v4250, %v4246
      %v4324 = vpack.c.bf16 %v4258, %v4254
      %v4325 = vpack.c.bf16 %v4260, %v4256
      %v4390 = vunpack.c.l.b16 %v4262
      %v4391 = vunpack.c.l.b16 %v4263
      %v4392 = vunpack.c.h.b16 %v4262
      %v4393 = vunpack.c.h.b16 %v4263
      %v4394 = vunpack.c.l.b16 %v4264
      %v4395 = vunpack.c.l.b16 %v4265
      %v4396 = vunpack.c.h.b16 %v4264
      %v4397 = vunpack.c.h.b16 %v4265
      %v4398 = vunpack.c.l.b16 %v4266
      %v4399 = vunpack.c.l.b16 %v4267
      %v4400 = vunpack.c.h.b16 %v4266
      %v4401 = vunpack.c.h.b16 %v4267
      %v4402 = vunpack.c.l.b16 %v4268
      %v4403 = vunpack.c.l.b16 %v4269
      %v4404 = vunpack.c.h.b16 %v4268
      %v4405 = vunpack.c.h.b16 %v4269
      %v4406 = vunpack.c.l.b16 %v4270
      %v4407 = vunpack.c.l.b16 %v4271
      %v4408 = vunpack.c.h.b16 %v4270
      %v4409 = vunpack.c.h.b16 %v4271
      %v4410 = vunpack.c.l.b16 %v4272
      %v4411 = vunpack.c.l.b16 %v4273
      %v4412 = vunpack.c.h.b16 %v4272
      %v4413 = vunpack.c.h.b16 %v4273
      %v4414 = vunpack.c.l.b16 %v4274
      %v4415 = vunpack.c.l.b16 %v4275
      %v4416 = vunpack.c.h.b16 %v4274
      %v4417 = vunpack.c.h.b16 %v4275
      %v4418 = vunpack.c.l.b16 %v4276
      %v4419 = vunpack.c.l.b16 %v4277
      %v4420 = vunpack.c.h.b16 %v4276
      %v4421 = vunpack.c.h.b16 %v4277
      %v4422 = vunpack.c.l.b16 %v4278
      %v4423 = vunpack.c.l.b16 %v4279
      %v4424 = vunpack.c.h.b16 %v4278
      %v4425 = vunpack.c.h.b16 %v4279
      %v4426 = vunpack.c.l.b16 %v4280
      %v4427 = vunpack.c.l.b16 %v4281
      %v4428 = vunpack.c.h.b16 %v4280
      %v4429 = vunpack.c.h.b16 %v4281
      %v4430 = vunpack.c.l.b16 %v4282
      %v4431 = vunpack.c.l.b16 %v4283
      %v4432 = vunpack.c.h.b16 %v4282
      %v4433 = vunpack.c.h.b16 %v4283
      %v4434 = vunpack.c.l.b16 %v4284
      %v4435 = vunpack.c.l.b16 %v4285
      %v4436 = vunpack.c.h.b16 %v4284
      %v4437 = vunpack.c.h.b16 %v4285
      %v4438 = vunpack.c.l.b16 %v4286
      %v4439 = vunpack.c.l.b16 %v4287
      %v4440 = vunpack.c.h.b16 %v4286
      %v4441 = vunpack.c.h.b16 %v4287
      %v4442 = vunpack.c.l.b16 %v4288
      %v4443 = vunpack.c.l.b16 %v4289
      %v4444 = vunpack.c.h.b16 %v4288
      %v4445 = vunpack.c.h.b16 %v4289
      %v4446 = vunpack.c.l.b16 %v4290
      %v4447 = vunpack.c.l.b16 %v4291
      %v4448 = vunpack.c.h.b16 %v4290
      %v4449 = vunpack.c.h.b16 %v4291
      %v4450 = vunpack.c.l.b16 %v4292
      %v4451 = vunpack.c.l.b16 %v4293
      %v4452 = vunpack.c.h.b16 %v4292
      %v4453 = vunpack.c.h.b16 %v4293
      %v4454 = vunpack.c.l.b16 %v4294
      %v4455 = vunpack.c.l.b16 %v4295
      %v4456 = vunpack.c.h.b16 %v4294
      %v4457 = vunpack.c.h.b16 %v4295
      %v4458 = vunpack.c.l.b16 %v4296
      %v4459 = vunpack.c.l.b16 %v4297
      %v4460 = vunpack.c.h.b16 %v4296
      %v4461 = vunpack.c.h.b16 %v4297
      %v4462 = vunpack.c.l.b16 %v4298
      %v4463 = vunpack.c.l.b16 %v4299
      %v4464 = vunpack.c.h.b16 %v4298
      %v4465 = vunpack.c.h.b16 %v4299
      %v4466 = vunpack.c.l.b16 %v4300
      %v4467 = vunpack.c.l.b16 %v4301
      %v4468 = vunpack.c.h.b16 %v4300
      %v4469 = vunpack.c.h.b16 %v4301
      %v4470 = vunpack.c.l.b16 %v4302
      %v4471 = vunpack.c.l.b16 %v4303
      %v4472 = vunpack.c.h.b16 %v4302
      %v4473 = vunpack.c.h.b16 %v4303
      %v4474 = vunpack.c.l.b16 %v4304
      %v4475 = vunpack.c.l.b16 %v4305
      %v4476 = vunpack.c.h.b16 %v4304
      %v4477 = vunpack.c.h.b16 %v4305
      %v4478 = vunpack.c.l.b16 %v4306
      %v4479 = vunpack.c.l.b16 %v4307
      %v4480 = vunpack.c.h.b16 %v4306
      %v4481 = vunpack.c.h.b16 %v4307
      %v4482 = vunpack.c.l.b16 %v4308
      %v4483 = vunpack.c.l.b16 %v4309
      %v4484 = vunpack.c.h.b16 %v4308
      %v4485 = vunpack.c.h.b16 %v4309
      %v4486 = vunpack.c.l.b16 %v4310
      %v4487 = vunpack.c.l.b16 %v4311
      %v4488 = vunpack.c.h.b16 %v4310
      %v4489 = vunpack.c.h.b16 %v4311
      %v4490 = vunpack.c.l.b16 %v4312
      %v4491 = vunpack.c.l.b16 %v4313
      %v4492 = vunpack.c.h.b16 %v4312
      %v4493 = vunpack.c.h.b16 %v4313
      %v4494 = vunpack.c.l.b16 %v4314
      %v4495 = vunpack.c.l.b16 %v4315
      %v4496 = vunpack.c.h.b16 %v4314
      %v4497 = vunpack.c.h.b16 %v4315
      %v4498 = vunpack.c.l.b16 %v4316
      %v4499 = vunpack.c.l.b16 %v4317
      %v4500 = vunpack.c.h.b16 %v4316
      %v4501 = vunpack.c.h.b16 %v4317
      %v4502 = vunpack.c.l.b16 %v4318
      %v4503 = vunpack.c.l.b16 %v4319
      %v4504 = vunpack.c.h.b16 %v4318
      %v4505 = vunpack.c.h.b16 %v4319
      %v4506 = vunpack.c.l.b16 %v4320
      %v4507 = vunpack.c.l.b16 %v4321
      %v4508 = vunpack.c.h.b16 %v4320
      %v4509 = vunpack.c.h.b16 %v4321
      %v4510 = vunpack.c.l.b16 %v4322
      %v4511 = vunpack.c.l.b16 %v4323
      %v4512 = vunpack.c.h.b16 %v4322
      %v4513 = vunpack.c.h.b16 %v4323
      %v4514 = vunpack.c.l.b16 %v4324
      %v4515 = vunpack.c.l.b16 %v4325
      %v4516 = vunpack.c.h.b16 %v4324
      %v4517 = vunpack.c.h.b16 %v4325
      %v4518 = vpack.c.b16 %v4391, %v4390
      %v4519 = vpack.c.b16 %v4393, %v4392
      %v4520 = vpack.c.b16 %v4395, %v4394
      %v4521 = vpack.c.b16 %v4397, %v4396
      %v4522 = vpack.c.b16 %v4399, %v4398
      %v4523 = vpack.c.b16 %v4401, %v4400
      %v4524 = vpack.c.b16 %v4403, %v4402
      %v4525 = vpack.c.b16 %v4405, %v4404
      %v4526 = vpack.c.b16 %v4407, %v4406
      %v4527 = vpack.c.b16 %v4409, %v4408
      %v4528 = vpack.c.b16 %v4411, %v4410
      %v4529 = vpack.c.b16 %v4413, %v4412
      %v4530 = vpack.c.b16 %v4415, %v4414
      %v4531 = vpack.c.b16 %v4417, %v4416
      %v4532 = vpack.c.b16 %v4419, %v4418
      %v4533 = vpack.c.b16 %v4421, %v4420
      %v4534 = vpack.c.b16 %v4423, %v4422
      %v4535 = vpack.c.b16 %v4425, %v4424
      %v4536 = vpack.c.b16 %v4427, %v4426
      %v4537 = vpack.c.b16 %v4429, %v4428
      %v4538 = vpack.c.b16 %v4431, %v4430
      %v4539 = vpack.c.b16 %v4433, %v4432
      %v4540 = vpack.c.b16 %v4435, %v4434
      %v4541 = vpack.c.b16 %v4437, %v4436
      %v4542 = vpack.c.b16 %v4439, %v4438
      %v4543 = vpack.c.b16 %v4441, %v4440
      %v4544 = vpack.c.b16 %v4443, %v4442
      %v4545 = vpack.c.b16 %v4445, %v4444
      %v4546 = vpack.c.b16 %v4447, %v4446
      %v4547 = vpack.c.b16 %v4449, %v4448
      %v4548 = vpack.c.b16 %v4451, %v4450
      %v4549 = vpack.c.b16 %v4453, %v4452
      %v4550 = vpack.c.b16 %v4455, %v4454
      %v4551 = vpack.c.b16 %v4457, %v4456
      %v4552 = vpack.c.b16 %v4459, %v4458
      %v4553 = vpack.c.b16 %v4461, %v4460
      %v4554 = vpack.c.b16 %v4463, %v4462
      %v4555 = vpack.c.b16 %v4465, %v4464
      %v4556 = vpack.c.b16 %v4467, %v4466
      %v4557 = vpack.c.b16 %v4469, %v4468
      %v4558 = vpack.c.b16 %v4471, %v4470
      %v4559 = vpack.c.b16 %v4473, %v4472
      %v4560 = vpack.c.b16 %v4475, %v4474
      %v4561 = vpack.c.b16 %v4477, %v4476
      %v4562 = vpack.c.b16 %v4479, %v4478
      %v4563 = vpack.c.b16 %v4481, %v4480
      %v4564 = vpack.c.b16 %v4483, %v4482
      %v4565 = vpack.c.b16 %v4485, %v4484
      %v4566 = vpack.c.b16 %v4487, %v4486
      %v4567 = vpack.c.b16 %v4489, %v4488
      %v4568 = vpack.c.b16 %v4491, %v4490
      %v4569 = vpack.c.b16 %v4493, %v4492
      %v4570 = vpack.c.b16 %v4495, %v4494
      %v4571 = vpack.c.b16 %v4497, %v4496
      %v4572 = vpack.c.b16 %v4499, %v4498
      %v4573 = vpack.c.b16 %v4501, %v4500
      %v4574 = vpack.c.b16 %v4503, %v4502
      %v4575 = vpack.c.b16 %v4505, %v4504
      %v4576 = vpack.c.b16 %v4507, %v4506
      %v4577 = vpack.c.b16 %v4509, %v4508
      %v4578 = vpack.c.b16 %v4511, %v4510
      %v4579 = vpack.c.b16 %v4513, %v4512
      %v4580 = vpack.c.b16 %v4515, %v4514
      %v4581 = vpack.c.b16 %v4517, %v4516
      %vm4646 = vcmask 1043456
      %vm4647 = vcmask 130052
      %vm4648 = vmor %vm4647, %vm4646
      %4649 = vst.msk [vmem:[%s258] sm:$0xff] %vm4648, %v4518
      %4650 = vst.msk [vmem:[%s258 + $0x8] sm:$0xff] %vm4648, %v4519
      %4651 = vst.msk [vmem:[%s258 + $0x10] sm:$0xff] %vm4648, %v4520
      %4652 = vst.msk [vmem:[%s258 + $0x18] sm:$0xff] %vm4648, %v4521
      %4653 = vst.msk [vmem:[%s258 + $0x20] sm:$0xff] %vm4648, %v4522
      %4654 = vst.msk [vmem:[%s258 + $0x28] sm:$0xff] %vm4648, %v4523
      %4655 = vst.msk [vmem:[%s258 + $0x30] sm:$0xff] %vm4648, %v4524
      %4656 = vst.msk [vmem:[%s258 + $0x38] sm:$0xff] %vm4648, %v4525
      %4657 = vst.msk [vmem:[%s258 + $0x40] sm:$0xff] %vm4648, %v4526
      %4658 = vst.msk [vmem:[%s258 + $0x48] sm:$0xff] %vm4648, %v4527
      %4659 = vst.msk [vmem:[%s258 + $0x50] sm:$0xff] %vm4648, %v4528
      %4660 = vst.msk [vmem:[%s258 + $0x58] sm:$0xff] %vm4648, %v4529
      %4661 = vst.msk [vmem:[%s258 + $0x60] sm:$0xff] %vm4648, %v4530
      %4662 = vst.msk [vmem:[%s258 + $0x68] sm:$0xff] %vm4648, %v4531
      %4663 = vst.msk [vmem:[%s258 + $0x70] sm:$0xff] %vm4648, %v4532
      %4664 = vst.msk [vmem:[%s258 + $0x78] sm:$0xff] %vm4648, %v4533
      %4665 = vst.msk [vmem:[%s258 + $0x80] sm:$0xff] %vm4648, %v4534
      %4666 = vst.msk [vmem:[%s258 + $0x88] sm:$0xff] %vm4648, %v4535
      %4667 = vst.msk [vmem:[%s258 + $0x90] sm:$0xff] %vm4648, %v4536
      %4668 = vst.msk [vmem:[%s258 + $0x98] sm:$0xff] %vm4648, %v4537
      %4669 = vst.msk [vmem:[%s258 + $0xa0] sm:$0xff] %vm4648, %v4538
      %4670 = vst.msk [vmem:[%s258 + $0xa8] sm:$0xff] %vm4648, %v4539
      %4671 = vst.msk [vmem:[%s258 + $0xb0] sm:$0xff] %vm4648, %v4540
      %4672 = vst.msk [vmem:[%s258 + $0xb8] sm:$0xff] %vm4648, %v4541
      %4673 = vst.msk [vmem:[%s258 + $0xc0] sm:$0xff] %vm4648, %v4542
      %4674 = vst.msk [vmem:[%s258 + $0xc8] sm:$0xff] %vm4648, %v4543
      %4675 = vst.msk [vmem:[%s258 + $0xd0] sm:$0xff] %vm4648, %v4544
      %4676 = vst.msk [vmem:[%s258 + $0xd8] sm:$0xff] %vm4648, %v4545
      %4677 = vst.msk [vmem:[%s258 + $0xe0] sm:$0xff] %vm4648, %v4546
      %4678 = vst.msk [vmem:[%s258 + $0xe8] sm:$0xff] %vm4648, %v4547
      %4679 = vst.msk [vmem:[%s258 + $0xf0] sm:$0xff] %vm4648, %v4548
      %4680 = vst.msk [vmem:[%s258 + $0xf8] sm:$0xff] %vm4648, %v4549
      %4681 = vst.msk [vmem:[%s258 + $0x100] sm:$0xff] %vm4648, %v4550
      %4682 = vst.msk [vmem:[%s258 + $0x108] sm:$0xff] %vm4648, %v4551
      %4683 = vst.msk [vmem:[%s258 + $0x110] sm:$0xff] %vm4648, %v4552
      %4684 = vst.msk [vmem:[%s258 + $0x118] sm:$0xff] %vm4648, %v4553
      %4685 = vst.msk [vmem:[%s258 + $0x120] sm:$0xff] %vm4648, %v4554
      %4686 = vst.msk [vmem:[%s258 + $0x128] sm:$0xff] %vm4648, %v4555
      %4687 = vst.msk [vmem:[%s258 + $0x130] sm:$0xff] %vm4648, %v4556
      %4688 = vst.msk [vmem:[%s258 + $0x138] sm:$0xff] %vm4648, %v4557
      %4689 = vst.msk [vmem:[%s258 + $0x140] sm:$0xff] %vm4648, %v4558
      %4690 = vst.msk [vmem:[%s258 + $0x148] sm:$0xff] %vm4648, %v4559
      %4691 = vst.msk [vmem:[%s258 + $0x150] sm:$0xff] %vm4648, %v4560
      %4692 = vst.msk [vmem:[%s258 + $0x158] sm:$0xff] %vm4648, %v4561
      %4693 = vst.msk [vmem:[%s258 + $0x160] sm:$0xff] %vm4648, %v4562
      %4694 = vst.msk [vmem:[%s258 + $0x168] sm:$0xff] %vm4648, %v4563
      %4695 = vst.msk [vmem:[%s258 + $0x170] sm:$0xff] %vm4648, %v4564
      %4696 = vst.msk [vmem:[%s258 + $0x178] sm:$0xff] %vm4648, %v4565
      %4697 = vst.msk [vmem:[%s258 + $0x180] sm:$0xff] %vm4648, %v4566
      %4698 = vst.msk [vmem:[%s258 + $0x188] sm:$0xff] %vm4648, %v4567
      %4699 = vst.msk [vmem:[%s258 + $0x190] sm:$0xff] %vm4648, %v4568
      %4700 = vst.msk [vmem:[%s258 + $0x198] sm:$0xff] %vm4648, %v4569
      %4701 = vst.msk [vmem:[%s258 + $0x1a0] sm:$0xff] %vm4648, %v4570
      %4702 = vst.msk [vmem:[%s258 + $0x1a8] sm:$0xff] %vm4648, %v4571
      %4703 = vst.msk [vmem:[%s258 + $0x1b0] sm:$0xff] %vm4648, %v4572
      %4704 = vst.msk [vmem:[%s258 + $0x1b8] sm:$0xff] %vm4648, %v4573
      %4705 = vst.msk [vmem:[%s258 + $0x1c0] sm:$0xff] %vm4648, %v4574
      %4706 = vst.msk [vmem:[%s258 + $0x1c8] sm:$0xff] %vm4648, %v4575
      %4707 = vst.msk [vmem:[%s258 + $0x1d0] sm:$0xff] %vm4648, %v4576
      %4708 = vst.msk [vmem:[%s258 + $0x1d8] sm:$0xff] %vm4648, %v4577
      %4709 = vst.msk [vmem:[%s258 + $0x1e0] sm:$0xff] %vm4648, %v4578
      %4710 = vst.msk [vmem:[%s258 + $0x1e8] sm:$0xff] %vm4648, %v4579
      %4711 = vst.msk [vmem:[%s258 + $0x1f0] sm:$0xff] %vm4648, %v4580
      %4712 = vst.msk [vmem:[%s258 + $0x1f8] sm:$0xff] %vm4648, %v4581
      %s4713 = smul.u32 64, %s17
      %p4714 = scmp.lt.s32.totalorder %s4713, 127
      %s4715 = scalar_select %p4714, %s4713, 127
      %s4716 = smul.addr %s4715, 2
      %s4717 = smul.addr %s4716, 4
      %s4718 = scalar_lea.vmem %s6, %s4717
      // Predicated region
      $region45: #{tpu_custom_call.1} parent=43 // pred_check
        %p4719 = pneg %p166
      $region46: #{tpu_custom_call.1} parent=43 // pred_check_branch
        %4721 = sbr.rel (%p4719) target = $region48
      $region47: #{tpu_custom_call.1} parent=43 // pred_region
        %s4722 = smul.u32 64, %s17
      $region48: #{tpu_custom_call.1} parent=43 // pred_fallthru
        _
    $region44: #{tpu_custom_call.1} parent=5 // pred_fallthru
      _
    %p4723 = scmp.le.s32.totalorder 2, %s12
    // Predicated region
    $region49: #{tpu_custom_call.1} parent=5 // pred_check
      %p4724 = pneg %p4723
    $region50: #{tpu_custom_call.1} parent=5 // pred_check_branch
      %4726 = sbr.rel (%p4724) target = $region52
    $region51: #{tpu_custom_call.1} parent=5 // pred_region
      %s4727 = ssub.s32 %s12, 2
      // Predicated region
      $region53: #{tpu_custom_call.1} parent=51 // pred_check
        %p4728 = pneg %p172
      $region54: #{tpu_custom_call.1} parent=51 // pred_check_branch
        %4730 = sbr.rel (%p4728) target = $region56
      $region55: #{tpu_custom_call.1} parent=51 // pred_region
        %s4731 = smul.u32 64, %s18
        %p4732 = scmp.lt.s32.totalorder %s4731, 127
        %s4733 = scalar_select %p4732, %s4731, 127
        %s4734 = smul.addr %s4733, 2
        %s4735 = smul.addr %s4734, 4
        %s4736 = scalar_lea.vmem %s6, %s4735
      $region56: #{tpu_custom_call.1} parent=51 // pred_fallthru
        _
    $region52: #{tpu_custom_call.1} parent=5 // pred_fallthru
      _
  $region6: #{tpu_custom_call.1} parent=0 // loop_footer
    %s16 = sadd.s32 1, %s12
  $region7: #{tpu_custom_call.1} parent=0 // loop_footer_branch
    %11 = sbr.rel target = $region3
  $region8: #{tpu_custom_call.1} parent=0 // loop_exit
    _

</llo_original>
